<compile_context>
chip_gen: v7x
topology: tpu7x:2x2x1
jax: 0.10.0
libtpu: 0.0.40
codegen_flags: <defaults>
</compile_context>

<pallas_src>
import functools

import numpy as np
import jax
import jax.numpy as jnp
from jax.experimental import pallas as pl
from jax.experimental.pallas import tpu as pltpu

B, C, H, W = 4, 512, 6, 6           # 512 * (6//3) * (6//3) = 2048 -> dl1 input
S = H * W                           # 36 flattened spatial positions
POOL_S = (H // 3) * (W // 3)        # 4 pooled spatial positions
CA_HID = C // 16                    # CBAM channel-attention hidden width = 32
N_HID = 128                         # dl1 output width
NCLASSES = 64                       # dl2 output width (nclasses)
OUT_PAD = 128                       # lane-dense padded output width
EPS = 1e-5


# ----------------------------------------------------------------------------
# Pallas kernel: whole forward pass, single invocation, everything in VMEM.
# ----------------------------------------------------------------------------
def classifier_kernel(x_ref, ca_w1_ref, ca_w2_ref, sa_wa_ref, sa_wm_ref,
                      dl1_w_hbm, dl1_b_ref, bn_g_ref, bn_b_ref,
                      dl2_w_ref, dl2_b_ref, out_ref,
                      dl1_w_vmem, dl1_sem, *, valid_batch):
    f32 = jnp.float32

    # Kick off the 1 MiB dl1-weight DMA immediately; it overlaps the attention phase
    # and is waited on right before the big contraction.
    w_copy = pltpu.make_async_copy(dl1_w_hbm, dl1_w_vmem, dl1_sem)
    w_copy.start()

    x = x_ref[...]                                        # (S, B_pad, C) f32
    bp = x.shape[1]

    # ---- CBAM channel attention: avg/max stats stacked -> one shared-MLP pass ----
    avg_c = jnp.mean(x, axis=0)                           # (B_pad, C)
    max_c = jnp.max(x, axis=0)                            # (B_pad, C)
    stat = jnp.concatenate([avg_c, max_c], axis=0)        # (2*B_pad, C)
    hid = jnp.maximum(jnp.dot(stat, ca_w1_ref[...],
                              preferred_element_type=f32), 0.0)
    logit = jnp.dot(hid, ca_w2_ref[...], preferred_element_type=f32)
    ca = jax.nn.sigmoid(logit[:bp] + logit[bp:])          # (B_pad, C)
    x = x * ca[None, :, :]

    # ---- CBAM spatial attention: 7x7 pad-3 conv as two (S,S) matmuls ----
    avg_s = jnp.mean(x, axis=2)                           # (S, B_pad)
    max_s = jnp.max(x, axis=2)                            # (S, B_pad)
    sa_logit = (jnp.dot(sa_wa_ref[...], avg_s, preferred_element_type=f32) +
                jnp.dot(sa_wm_ref[...], max_s, preferred_element_type=f32))
    x = x * jax.nn.sigmoid(sa_logit)[:, :, None]

    # ---- AvgPool(3,3) in-kernel: 9 VPU tile-adds per pooled position (1/9 is folded
    #      into the prepared weight), then ONE f32 (B_pad,2048)@(2048,128) MXU matmul ----
    pooled = []
    for pi in range(H // 3):
        for pj in range(W // 3):
            acc = x[(3 * pi) * W + 3 * pj]
            for di in range(3):
                for dj in range(3):
                    if di == 0 and dj == 0:
                        continue
                    acc = acc + x[(3 * pi + di) * W + (3 * pj + dj)]
            pooled.append(acc)                            # (B_pad, C)
    # Lane-aligned concat (boundaries at multiples of 512): LHS column index = p*C + c,
    # the prepared dl1 weight rows are permuted to match.
    lhs = jnp.concatenate(pooled, axis=-1)                # (B_pad, POOL_S*C) = (8, 2048)

    w_copy.wait()                                         # weight now VMEM-resident
    h1 = (jnp.dot(lhs, dl1_w_vmem[...], preferred_element_type=f32)
          + dl1_b_ref[...])                               # (B_pad, 128)

    # ---- BatchNorm1d(128), training mode (stats over the real batch rows) ----
    hv = h1[:valid_batch]
    mu = jnp.mean(hv, axis=0, keepdims=True)
    var = jnp.mean((hv - mu) ** 2, axis=0, keepdims=True)
    h1 = (h1 - mu) * jax.lax.rsqrt(var + EPS)
    h1 = h1 * bn_g_ref[...] + bn_b_ref[...]

    # ---- dl2: Linear(128, nclasses), zero-padded to a 128-lane output slab ----
    out_ref[...] = (jnp.dot(h1, dl2_w_ref[...], preferred_element_type=f32)
                    + dl2_b_ref[...])


# ----------------------------------------------------------------------------
# One-time (hoisted) parameter preparation — jit-friendly, static indices only.
# ----------------------------------------------------------------------------
def build_spatial_matrices(sa_w):
    """(1,2,7,7) pad-3 conv -> two (S_out, S_in) matrices for the (S,B) layout."""
    io = np.repeat(np.arange(H), W)                       # s -> row i
    jo = np.tile(np.arange(W), H)                         # s -> col j
    di = io[None, :] - io[:, None] + 3                    # [s_out, s_in]
    dj = jo[None, :] - jo[:, None] + 3
    valid = (di >= 0) & (di < 7) & (dj >= 0) & (dj < 7)
    kidx = np.clip(di, 0, 6) * 7 + np.clip(dj, 0, 6)      # static gather indices
    wa = jnp.where(valid, sa_w[0, 0].reshape(-1)[kidx], 0.0)
    wm = jnp.where(valid, sa_w[0, 1].reshape(-1)[kidx], 0.0)
    return wa.astype(jnp.float32), wm.astype(jnp.float32)


def build_dl1_weight(dl1_w):
    """torch Linear weight (out=128, in=2048), in-index = c*POOL_S + p (p = pi*2+pj),
    permuted to the kernel's LHS column order p*C + c, with the 1/9 pool scale folded in.
    Shape (2048, 128), f32 (no bf16 quantization)."""
    w = dl1_w.reshape(N_HID, C, POOL_S)                   # [o, c, p]
    w = jnp.transpose(w, (2, 1, 0))                       # [p, c, o]
    return (w.reshape(POOL_S * C, N_HID) * (1.0 / 9.0)).astype(jnp.float32)


def prepare_params(params):
    sa_wa, sa_wm = build_spatial_matrices(params['sa_w'])
    dl2_w = jnp.zeros((N_HID, OUT_PAD), jnp.float32).at[:, :NCLASSES].set(
        params['dl2_w'].T)
    dl2_b = jnp.zeros((1, OUT_PAD), jnp.float32).at[:, :NCLASSES].set(
        params['dl2_b'])
    return dict(
        ca_w1=params['ca_w1'], ca_w2=params['ca_w2'],
        sa_wa=sa_wa, sa_wm=sa_wm,
        dl1_w=build_dl1_weight(params['dl1_w']),
        dl1_b=params['dl1_b'].reshape(1, N_HID),
        bn_g=params['bn_g'].reshape(1, N_HID),
        bn_b=params['bn_b'].reshape(1, N_HID),
        dl2_w=dl2_w, dl2_b=dl2_b)


def init_params(key):
    ks = jax.random.split(key, 8)
    u = lambda k, shape, fan: jax.random.uniform(
        k, shape, jnp.float32, -1.0 / np.sqrt(fan), 1.0 / np.sqrt(fan))
    return dict(
        ca_w1=u(ks[0], (C, CA_HID), C),          # CBAM fc1 (no bias), pre-transposed
        ca_w2=u(ks[1], (CA_HID, C), CA_HID),     # CBAM fc2 (no bias), pre-transposed
        sa_w=u(ks[2], (1, 2, 7, 7), 2 * 49),     # spatial-attention conv weight (OIHW)
        dl1_w=u(ks[3], (N_HID, 2048), 2048),     # torch Linear layout (out, in)
        dl1_b=u(ks[4], (N_HID,), 2048),
        bn_g=jnp.ones((N_HID,), jnp.float32),
        bn_b=jnp.zeros((N_HID,), jnp.float32),
        dl2_w=u(ks[5], (NCLASSES, N_HID), N_HID),
        dl2_b=u(ks[6], (NCLASSES,), N_HID),
    )


# ----------------------------------------------------------------------------
# Forward wrapper (jit-compatible; only input-dependent work lives here).
# ----------------------------------------------------------------------------
def classifier_forward(x_nchw, kp):
    b = x_nchw.shape[0]
    b_pad = max(8, ((b + 7) // 8) * 8)
    # NCHW -> (S, B_pad, C): spatial row-major on the major axis, channels on lanes.
    x_sbc = jnp.transpose(x_nchw, (2, 3, 0, 1)).reshape(S, b, C)
    x_sbc = jnp.pad(x_sbc, ((0, 0), (0, b_pad - b), (0, 0)))

    vmem = pl.BlockSpec(memory_space=pltpu.MemorySpace.VMEM)
    hbm = pl.BlockSpec(memory_space=pl.ANY)      # dl1 weight: manual async DMA in-kernel
    cost = pl.CostEstimate(
        flops=(2 * b_pad * (POOL_S * C) * N_HID                 # dl1
               + 2 * (2 * b_pad) * C * CA_HID * 2               # channel-attention MLP
               + 2 * S * S * b_pad * 2                          # spatial-attention conv
               + 2 * b_pad * N_HID * OUT_PAD),                  # dl2
        transcendentals=b_pad * C + S * b_pad,                  # sigmoids
        bytes_accessed=4 * (S * b_pad * C + POOL_S * C * N_HID + N_HID * OUT_PAD
                            + 2 * C * CA_HID + 2 * S * S + 4 * N_HID + OUT_PAD
                            + b_pad * OUT_PAD))

    out = pl.pallas_call(
        functools.partial(classifier_kernel, valid_batch=b),
        out_shape=jax.ShapeDtypeStruct((b_pad, OUT_PAD), jnp.float32),
        in_specs=[vmem, vmem, vmem, vmem, vmem, hbm, vmem, vmem, vmem, vmem, vmem],
        out_specs=vmem,
        scratch_shapes=[pltpu.VMEM((POOL_S * C, N_HID), jnp.float32),  # dl1 weight buffer
                        pltpu.SemaphoreType.DMA],
        cost_estimate=cost,
    )(x_sbc, kp['ca_w1'], kp['ca_w2'], kp['sa_wa'], kp['sa_wm'],
      kp['dl1_w'], kp['dl1_b'], kp['bn_g'], kp['bn_b'],
      kp['dl2_w'], kp['dl2_b'])
    return out[:b, :NCLASSES]


# ----------------------------------------------------------------------------
# Pure-JAX fp32 reference (mirrors the PyTorch NCHW semantics, HIGHEST precision).
# ----------------------------------------------------------------------------
def reference_forward(x, p):
    hi = jax.lax.Precision.HIGHEST
    b = x.shape[0]
    avg = x.mean(axis=(2, 3))
    mx = x.max(axis=(2, 3))
    mlp = lambda v: jnp.dot(jnp.maximum(jnp.dot(v, p['ca_w1'], precision=hi), 0.0),
                            p['ca_w2'], precision=hi)
    ca = jax.nn.sigmoid(mlp(avg) + mlp(mx))
    x = x * ca[:, :, None, None]
    cat = jnp.concatenate([x.mean(axis=1, keepdims=True),
                           x.max(axis=1, keepdims=True)], axis=1)
    sa = jax.lax.conv_general_dilated(cat, p['sa_w'], (1, 1), [(3, 3), (3, 3)],
                                      dimension_numbers=('NCHW', 'OIHW', 'NCHW'),
                                      precision=hi)
    x = x * jax.nn.sigmoid(sa)
    pooled = x.reshape(b, C, H // 3, 3, W // 3, 3).mean(axis=(3, 5)).reshape(b, C * POOL_S)
    h1 = jnp.dot(pooled, p['dl1_w'].T, precision=hi) + p['dl1_b']
    mu = h1.mean(axis=0)
    var = ((h1 - mu) ** 2).mean(axis=0)
    h1 = (h1 - mu) / jnp.sqrt(var + EPS) * p['bn_g'] + p['bn_b']
    return jnp.dot(h1, p['dl2_w'].T, precision=hi) + p['dl2_b']


if __name__ == "__main__":
    key = jax.random.PRNGKey(0)
    kx, kw = jax.random.split(key)
    x = jax.random.normal(kx, (B, C, H, W), dtype=jnp.float32)
    params = init_params(kw)
    kparams = prepare_params(params)        # one-time prep, hoisted out of forward

    hi = jax.lax.Precision.HIGHEST

    # Check 1 (f32): the in-kernel pool ordering + reordered dl1 weight reproduce
    # AvgPool(3,3) + Flatten + Linear exactly.
    pooled = x.reshape(B, C, H // 3, 3, W // 3, 3).mean(axis=(3, 5)).reshape(B, C * POOL_S)
    h_direct = jnp.dot(pooled, params['dl1_w'].T, precision=hi)
    x_sbc = jnp.transpose(x, (2, 3, 0, 1)).reshape(S, B, C)
    parts = []
    for pi in range(H // 3):
        for pj in range(W // 3):
            idx = [(3 * pi + di) * W + (3 * pj + dj) for di in range(3) for dj in range(3)]
            parts.append(x_sbc[jnp.array(idx)].sum(axis=0))
    h_fused = jnp.dot(jnp.concatenate(parts, axis=-1), kparams['dl1_w'], precision=hi)
    np.testing.assert_allclose(np.asarray(h_fused), np.asarray(h_direct),
                               rtol=1e-4, atol=1e-4)

    # Check 2: Pallas kernel vs the fp32 (HIGHEST) reference.  Tolerance bounds the MXU
    # default-precision path (bf16 multiply / f32 accumulate) on the K=2048 contraction,
    # amplified by the small-batch BatchNorm normalization.
    fwd = jax.jit(classifier_forward)
    out = jax.block_until_ready(fwd(x, kparams))
    ref = jax.block_until_ready(reference_forward(x, params))
    np.testing.assert_allclose(np.asarray(out), np.asarray(ref),
                               rtol=2e-2, atol=2e-2)

    print("KERNEL_OK")
</pallas_src>

<mosaic_0001>
module attributes {stable_mosaic.version = 11 : i64} {
  func.func @classifier_kernel(%arg0: memref<36x8x512xf32, #tpu.memory_space<vmem>>, %arg1: memref<512x32xf32, #tpu.memory_space<vmem>>, %arg2: memref<32x512xf32, #tpu.memory_space<vmem>>, %arg3: memref<36x36xf32, #tpu.memory_space<vmem>>, %arg4: memref<36x36xf32, #tpu.memory_space<vmem>>, %arg5: memref<2048x128xf32, #tpu.memory_space<any>>, %arg6: memref<1x128xf32, #tpu.memory_space<vmem>>, %arg7: memref<1x128xf32, #tpu.memory_space<vmem>>, %arg8: memref<1x128xf32, #tpu.memory_space<vmem>>, %arg9: memref<128x128xf32, #tpu.memory_space<vmem>>, %arg10: memref<1x128xf32, #tpu.memory_space<vmem>>, %arg11: memref<8x128xf32, #tpu.memory_space<vmem>>, %arg12: memref<2048x128xf32, #tpu.memory_space<vmem>>, %arg13: memref<!tpu.dma_semaphore, #tpu.memory_space<semaphore_mem>>) attributes {dimension_semantics = [], scalar_prefetch = 0 : i64, scratch_operands = 2 : i64, tpu.core_type = #tpu.core_type<tc>} {
    tpu.enqueue_dma source(%arg5 : memref<2048x128xf32, #tpu.memory_space<any>>) target(%arg12 : memref<2048x128xf32, #tpu.memory_space<vmem>>) target_semaphore(%arg13 : memref<!tpu.dma_semaphore, #tpu.memory_space<semaphore_mem>>)
    %c0 = arith.constant 0 : index
    %c0_0 = arith.constant 0 : index
    %c0_1 = arith.constant 0 : index
    %0 = vector.load %arg0[%c0, %c0_0, %c0_1] : memref<36x8x512xf32, #tpu.memory_space<vmem>>, vector<36x8x512xf32>
    %cst = arith.constant dense<0.000000e+00> : vector<8x512xf32>
    %1 = vector.multi_reduction <add>, %0, %cst [0] : vector<36x8x512xf32> to vector<8x512xf32>
    %cst_2 = arith.constant 3.600000e+01 : f32
    %2 = vector.broadcast %cst_2 : f32 to vector<8x512xf32>
    %3 = arith.divf %1, %2 : vector<8x512xf32>
    %cst_3 = arith.constant dense<0xFF800000> : vector<8x512xf32>
    %4 = vector.multi_reduction <maximumf>, %0, %cst_3 [0] : vector<36x8x512xf32> to vector<8x512xf32>
    %5 = tpu.concatenate %3, %4 in 0 : vector<8x512xf32>, vector<8x512xf32> -> vector<16x512xf32>
    %c0_4 = arith.constant 0 : index
    %c0_5 = arith.constant 0 : index
    %6 = vector.load %arg1[%c0_4, %c0_5] : memref<512x32xf32, #tpu.memory_space<vmem>>, vector<512x32xf32>
    %cst_6 = arith.constant dense<0.000000e+00> : vector<16x32xf32>
    %7 = tpu.matmul %5, %6, %cst_6 {dimension_numbers = #tpu.dot_dimension_numbers<[1], [0], [0], [1], [0, 0, 1, 1], [], []>} : vector<16x512xf32>, vector<512x32xf32>, vector<16x32xf32> -> vector<16x32xf32>
    %cst_7 = arith.constant 0.000000e+00 : f32
    %8 = vector.broadcast %cst_7 : f32 to vector<16x32xf32>
    %9 = arith.maximumf %7, %8 : vector<16x32xf32>
    %c0_8 = arith.constant 0 : index
    %c0_9 = arith.constant 0 : index
    %10 = vector.load %arg2[%c0_8, %c0_9] : memref<32x512xf32, #tpu.memory_space<vmem>>, vector<32x512xf32>
    %cst_10 = arith.constant dense<0.000000e+00> : vector<16x512xf32>
    %11 = tpu.matmul %9, %10, %cst_10 {dimension_numbers = #tpu.dot_dimension_numbers<[1], [0], [0], [1], [0, 0, 1, 1], [], []>} : vector<16x32xf32>, vector<32x512xf32>, vector<16x512xf32> -> vector<16x512xf32>
    %12 = vector.extract_strided_slice %11 {offsets = [0, 0], sizes = [8, 512], strides = [1, 1]} : vector<16x512xf32> to vector<8x512xf32>
    %13 = vector.extract_strided_slice %11 {offsets = [8, 0], sizes = [8, 512], strides = [1, 1]} : vector<16x512xf32> to vector<8x512xf32>
    %14 = arith.addf %12, %13 : vector<8x512xf32>
    %15 = arith.negf %14 : vector<8x512xf32>
    %16 = math.exp %15 : vector<8x512xf32>
    %cst_11 = arith.constant 1.000000e+00 : f32
    %17 = vector.broadcast %cst_11 : f32 to vector<8x512xf32>
    %18 = arith.addf %17, %16 : vector<8x512xf32>
    %19 = arith.divf %17, %18 : vector<8x512xf32>
    %20 = vector.shape_cast %19 : vector<8x512xf32> to vector<1x8x512xf32>
    %21 = vector.broadcast %20 : vector<1x8x512xf32> to vector<36x8x512xf32>
    %22 = arith.mulf %0, %21 : vector<36x8x512xf32>
    %cst_12 = arith.constant dense<0.000000e+00> : vector<36x8xf32>
    %23 = vector.multi_reduction <add>, %22, %cst_12 [2] : vector<36x8x512xf32> to vector<36x8xf32>
    %cst_13 = arith.constant 5.120000e+02 : f32
    %24 = vector.broadcast %cst_13 : f32 to vector<36x8xf32>
    %25 = arith.divf %23, %24 : vector<36x8xf32>
    %cst_14 = arith.constant dense<0xFF800000> : vector<36x8xf32>
    %26 = vector.multi_reduction <maximumf>, %22, %cst_14 [2] : vector<36x8x512xf32> to vector<36x8xf32>
    %c0_15 = arith.constant 0 : index
    %c0_16 = arith.constant 0 : index
    %27 = vector.load %arg3[%c0_15, %c0_16] : memref<36x36xf32, #tpu.memory_space<vmem>>, vector<36x36xf32>
    %cst_17 = arith.constant dense<0.000000e+00> : vector<36x8xf32>
    %28 = tpu.matmul %27, %25, %cst_17 {dimension_numbers = #tpu.dot_dimension_numbers<[1], [0], [0], [1], [0, 0, 1, 1], [], []>} : vector<36x36xf32>, vector<36x8xf32>, vector<36x8xf32> -> vector<36x8xf32>
    %c0_18 = arith.constant 0 : index
    %c0_19 = arith.constant 0 : index
    %29 = vector.load %arg4[%c0_18, %c0_19] : memref<36x36xf32, #tpu.memory_space<vmem>>, vector<36x36xf32>
    %cst_20 = arith.constant dense<0.000000e+00> : vector<36x8xf32>
    %30 = tpu.matmul %29, %26, %cst_20 {dimension_numbers = #tpu.dot_dimension_numbers<[1], [0], [0], [1], [0, 0, 1, 1], [], []>} : vector<36x36xf32>, vector<36x8xf32>, vector<36x8xf32> -> vector<36x8xf32>
    %31 = arith.addf %28, %30 : vector<36x8xf32>
    %32 = arith.negf %31 : vector<36x8xf32>
    %33 = math.exp %32 : vector<36x8xf32>
    %cst_21 = arith.constant 1.000000e+00 : f32
    %34 = vector.broadcast %cst_21 : f32 to vector<36x8xf32>
    %35 = arith.addf %34, %33 : vector<36x8xf32>
    %36 = arith.divf %34, %35 : vector<36x8xf32>
    %37 = vector.shape_cast %36 : vector<36x8xf32> to vector<36x8x1xf32>
    %38 = vector.broadcast %37 : vector<36x8x1xf32> to vector<36x8x512xf32>
    %39 = arith.mulf %22, %38 : vector<36x8x512xf32>
    %40 = vector.extract_strided_slice %39 {offsets = [0, 0, 0], sizes = [1, 8, 512], strides = [1, 1, 1]} : vector<36x8x512xf32> to vector<1x8x512xf32>
    %41 = vector.shape_cast %40 : vector<1x8x512xf32> to vector<8x512xf32>
    %42 = vector.extract_strided_slice %39 {offsets = [1, 0, 0], sizes = [1, 8, 512], strides = [1, 1, 1]} : vector<36x8x512xf32> to vector<1x8x512xf32>
    %43 = vector.shape_cast %42 : vector<1x8x512xf32> to vector<8x512xf32>
    %44 = arith.addf %41, %43 : vector<8x512xf32>
    %45 = vector.extract_strided_slice %39 {offsets = [2, 0, 0], sizes = [1, 8, 512], strides = [1, 1, 1]} : vector<36x8x512xf32> to vector<1x8x512xf32>
    %46 = vector.shape_cast %45 : vector<1x8x512xf32> to vector<8x512xf32>
    %47 = arith.addf %44, %46 : vector<8x512xf32>
    %48 = vector.extract_strided_slice %39 {offsets = [6, 0, 0], sizes = [1, 8, 512], strides = [1, 1, 1]} : vector<36x8x512xf32> to vector<1x8x512xf32>
    %49 = vector.shape_cast %48 : vector<1x8x512xf32> to vector<8x512xf32>
    %50 = arith.addf %47, %49 : vector<8x512xf32>
    %51 = vector.extract_strided_slice %39 {offsets = [7, 0, 0], sizes = [1, 8, 512], strides = [1, 1, 1]} : vector<36x8x512xf32> to vector<1x8x512xf32>
    %52 = vector.shape_cast %51 : vector<1x8x512xf32> to vector<8x512xf32>
    %53 = arith.addf %50, %52 : vector<8x512xf32>
    %54 = vector.extract_strided_slice %39 {offsets = [8, 0, 0], sizes = [1, 8, 512], strides = [1, 1, 1]} : vector<36x8x512xf32> to vector<1x8x512xf32>
    %55 = vector.shape_cast %54 : vector<1x8x512xf32> to vector<8x512xf32>
    %56 = arith.addf %53, %55 : vector<8x512xf32>
    %57 = vector.extract_strided_slice %39 {offsets = [12, 0, 0], sizes = [1, 8, 512], strides = [1, 1, 1]} : vector<36x8x512xf32> to vector<1x8x512xf32>
    %58 = vector.shape_cast %57 : vector<1x8x512xf32> to vector<8x512xf32>
    %59 = arith.addf %56, %58 : vector<8x512xf32>
    %60 = vector.extract_strided_slice %39 {offsets = [13, 0, 0], sizes = [1, 8, 512], strides = [1, 1, 1]} : vector<36x8x512xf32> to vector<1x8x512xf32>
    %61 = vector.shape_cast %60 : vector<1x8x512xf32> to vector<8x512xf32>
    %62 = arith.addf %59, %61 : vector<8x512xf32>
    %63 = vector.extract_strided_slice %39 {offsets = [14, 0, 0], sizes = [1, 8, 512], strides = [1, 1, 1]} : vector<36x8x512xf32> to vector<1x8x512xf32>
    %64 = vector.shape_cast %63 : vector<1x8x512xf32> to vector<8x512xf32>
    %65 = arith.addf %62, %64 : vector<8x512xf32>
    %66 = vector.extract_strided_slice %39 {offsets = [3, 0, 0], sizes = [1, 8, 512], strides = [1, 1, 1]} : vector<36x8x512xf32> to vector<1x8x512xf32>
    %67 = vector.shape_cast %66 : vector<1x8x512xf32> to vector<8x512xf32>
    %68 = vector.extract_strided_slice %39 {offsets = [4, 0, 0], sizes = [1, 8, 512], strides = [1, 1, 1]} : vector<36x8x512xf32> to vector<1x8x512xf32>
    %69 = vector.shape_cast %68 : vector<1x8x512xf32> to vector<8x512xf32>
    %70 = arith.addf %67, %69 : vector<8x512xf32>
    %71 = vector.extract_strided_slice %39 {offsets = [5, 0, 0], sizes = [1, 8, 512], strides = [1, 1, 1]} : vector<36x8x512xf32> to vector<1x8x512xf32>
    %72 = vector.shape_cast %71 : vector<1x8x512xf32> to vector<8x512xf32>
    %73 = arith.addf %70, %72 : vector<8x512xf32>
    %74 = vector.extract_strided_slice %39 {offsets = [9, 0, 0], sizes = [1, 8, 512], strides = [1, 1, 1]} : vector<36x8x512xf32> to vector<1x8x512xf32>
    %75 = vector.shape_cast %74 : vector<1x8x512xf32> to vector<8x512xf32>
    %76 = arith.addf %73, %75 : vector<8x512xf32>
    %77 = vector.extract_strided_slice %39 {offsets = [10, 0, 0], sizes = [1, 8, 512], strides = [1, 1, 1]} : vector<36x8x512xf32> to vector<1x8x512xf32>
    %78 = vector.shape_cast %77 : vector<1x8x512xf32> to vector<8x512xf32>
    %79 = arith.addf %76, %78 : vector<8x512xf32>
    %80 = vector.extract_strided_slice %39 {offsets = [11, 0, 0], sizes = [1, 8, 512], strides = [1, 1, 1]} : vector<36x8x512xf32> to vector<1x8x512xf32>
    %81 = vector.shape_cast %80 : vector<1x8x512xf32> to vector<8x512xf32>
    %82 = arith.addf %79, %81 : vector<8x512xf32>
    %83 = vector.extract_strided_slice %39 {offsets = [15, 0, 0], sizes = [1, 8, 512], strides = [1, 1, 1]} : vector<36x8x512xf32> to vector<1x8x512xf32>
    %84 = vector.shape_cast %83 : vector<1x8x512xf32> to vector<8x512xf32>
    %85 = arith.addf %82, %84 : vector<8x512xf32>
    %86 = vector.extract_strided_slice %39 {offsets = [16, 0, 0], sizes = [1, 8, 512], strides = [1, 1, 1]} : vector<36x8x512xf32> to vector<1x8x512xf32>
    %87 = vector.shape_cast %86 : vector<1x8x512xf32> to vector<8x512xf32>
    %88 = arith.addf %85, %87 : vector<8x512xf32>
    %89 = vector.extract_strided_slice %39 {offsets = [17, 0, 0], sizes = [1, 8, 512], strides = [1, 1, 1]} : vector<36x8x512xf32> to vector<1x8x512xf32>
    %90 = vector.shape_cast %89 : vector<1x8x512xf32> to vector<8x512xf32>
    %91 = arith.addf %88, %90 : vector<8x512xf32>
    %92 = vector.extract_strided_slice %39 {offsets = [18, 0, 0], sizes = [1, 8, 512], strides = [1, 1, 1]} : vector<36x8x512xf32> to vector<1x8x512xf32>
    %93 = vector.shape_cast %92 : vector<1x8x512xf32> to vector<8x512xf32>
    %94 = vector.extract_strided_slice %39 {offsets = [19, 0, 0], sizes = [1, 8, 512], strides = [1, 1, 1]} : vector<36x8x512xf32> to vector<1x8x512xf32>
    %95 = vector.shape_cast %94 : vector<1x8x512xf32> to vector<8x512xf32>
    %96 = arith.addf %93, %95 : vector<8x512xf32>
    %97 = vector.extract_strided_slice %39 {offsets = [20, 0, 0], sizes = [1, 8, 512], strides = [1, 1, 1]} : vector<36x8x512xf32> to vector<1x8x512xf32>
    %98 = vector.shape_cast %97 : vector<1x8x512xf32> to vector<8x512xf32>
    %99 = arith.addf %96, %98 : vector<8x512xf32>
    %100 = vector.extract_strided_slice %39 {offsets = [24, 0, 0], sizes = [1, 8, 512], strides = [1, 1, 1]} : vector<36x8x512xf32> to vector<1x8x512xf32>
    %101 = vector.shape_cast %100 : vector<1x8x512xf32> to vector<8x512xf32>
    %102 = arith.addf %99, %101 : vector<8x512xf32>
    %103 = vector.extract_strided_slice %39 {offsets = [25, 0, 0], sizes = [1, 8, 512], strides = [1, 1, 1]} : vector<36x8x512xf32> to vector<1x8x512xf32>
    %104 = vector.shape_cast %103 : vector<1x8x512xf32> to vector<8x512xf32>
    %105 = arith.addf %102, %104 : vector<8x512xf32>
    %106 = vector.extract_strided_slice %39 {offsets = [26, 0, 0], sizes = [1, 8, 512], strides = [1, 1, 1]} : vector<36x8x512xf32> to vector<1x8x512xf32>
    %107 = vector.shape_cast %106 : vector<1x8x512xf32> to vector<8x512xf32>
    %108 = arith.addf %105, %107 : vector<8x512xf32>
    %109 = vector.extract_strided_slice %39 {offsets = [30, 0, 0], sizes = [1, 8, 512], strides = [1, 1, 1]} : vector<36x8x512xf32> to vector<1x8x512xf32>
    %110 = vector.shape_cast %109 : vector<1x8x512xf32> to vector<8x512xf32>
    %111 = arith.addf %108, %110 : vector<8x512xf32>
    %112 = vector.extract_strided_slice %39 {offsets = [31, 0, 0], sizes = [1, 8, 512], strides = [1, 1, 1]} : vector<36x8x512xf32> to vector<1x8x512xf32>
    %113 = vector.shape_cast %112 : vector<1x8x512xf32> to vector<8x512xf32>
    %114 = arith.addf %111, %113 : vector<8x512xf32>
    %115 = vector.extract_strided_slice %39 {offsets = [32, 0, 0], sizes = [1, 8, 512], strides = [1, 1, 1]} : vector<36x8x512xf32> to vector<1x8x512xf32>
    %116 = vector.shape_cast %115 : vector<1x8x512xf32> to vector<8x512xf32>
    %117 = arith.addf %114, %116 : vector<8x512xf32>
    %118 = vector.extract_strided_slice %39 {offsets = [21, 0, 0], sizes = [1, 8, 512], strides = [1, 1, 1]} : vector<36x8x512xf32> to vector<1x8x512xf32>
    %119 = vector.shape_cast %118 : vector<1x8x512xf32> to vector<8x512xf32>
    %120 = vector.extract_strided_slice %39 {offsets = [22, 0, 0], sizes = [1, 8, 512], strides = [1, 1, 1]} : vector<36x8x512xf32> to vector<1x8x512xf32>
    %121 = vector.shape_cast %120 : vector<1x8x512xf32> to vector<8x512xf32>
    %122 = arith.addf %119, %121 : vector<8x512xf32>
    %123 = vector.extract_strided_slice %39 {offsets = [23, 0, 0], sizes = [1, 8, 512], strides = [1, 1, 1]} : vector<36x8x512xf32> to vector<1x8x512xf32>
    %124 = vector.shape_cast %123 : vector<1x8x512xf32> to vector<8x512xf32>
    %125 = arith.addf %122, %124 : vector<8x512xf32>
    %126 = vector.extract_strided_slice %39 {offsets = [27, 0, 0], sizes = [1, 8, 512], strides = [1, 1, 1]} : vector<36x8x512xf32> to vector<1x8x512xf32>
    %127 = vector.shape_cast %126 : vector<1x8x512xf32> to vector<8x512xf32>
    %128 = arith.addf %125, %127 : vector<8x512xf32>
    %129 = vector.extract_strided_slice %39 {offsets = [28, 0, 0], sizes = [1, 8, 512], strides = [1, 1, 1]} : vector<36x8x512xf32> to vector<1x8x512xf32>
    %130 = vector.shape_cast %129 : vector<1x8x512xf32> to vector<8x512xf32>
    %131 = arith.addf %128, %130 : vector<8x512xf32>
    %132 = vector.extract_strided_slice %39 {offsets = [29, 0, 0], sizes = [1, 8, 512], strides = [1, 1, 1]} : vector<36x8x512xf32> to vector<1x8x512xf32>
    %133 = vector.shape_cast %132 : vector<1x8x512xf32> to vector<8x512xf32>
    %134 = arith.addf %131, %133 : vector<8x512xf32>
    %135 = vector.extract_strided_slice %39 {offsets = [33, 0, 0], sizes = [1, 8, 512], strides = [1, 1, 1]} : vector<36x8x512xf32> to vector<1x8x512xf32>
    %136 = vector.shape_cast %135 : vector<1x8x512xf32> to vector<8x512xf32>
    %137 = arith.addf %134, %136 : vector<8x512xf32>
    %138 = vector.extract_strided_slice %39 {offsets = [34, 0, 0], sizes = [1, 8, 512], strides = [1, 1, 1]} : vector<36x8x512xf32> to vector<1x8x512xf32>
    %139 = vector.shape_cast %138 : vector<1x8x512xf32> to vector<8x512xf32>
    %140 = arith.addf %137, %139 : vector<8x512xf32>
    %141 = vector.extract_strided_slice %39 {offsets = [35, 0, 0], sizes = [1, 8, 512], strides = [1, 1, 1]} : vector<36x8x512xf32> to vector<1x8x512xf32>
    %142 = vector.shape_cast %141 : vector<1x8x512xf32> to vector<8x512xf32>
    %143 = arith.addf %140, %142 : vector<8x512xf32>
    %144 = tpu.concatenate %65, %91, %117, %143 in 1 : vector<8x512xf32>, vector<8x512xf32>, vector<8x512xf32>, vector<8x512xf32> -> vector<8x2048xf32>
    tpu.wait_dma2 semaphore(%arg13 : memref<!tpu.dma_semaphore, #tpu.memory_space<semaphore_mem>>) src(%arg5 : memref<2048x128xf32, #tpu.memory_space<any>>) dst(%arg12 : memref<2048x128xf32, #tpu.memory_space<vmem>>)
    %c0_22 = arith.constant 0 : index
    %c0_23 = arith.constant 0 : index
    %145 = vector.load %arg12[%c0_22, %c0_23] : memref<2048x128xf32, #tpu.memory_space<vmem>>, vector<2048x128xf32>
    %cst_24 = arith.constant dense<0.000000e+00> : vector<8x128xf32>
    %146 = tpu.matmul %144, %145, %cst_24 {dimension_numbers = #tpu.dot_dimension_numbers<[1], [0], [0], [1], [0, 0, 1, 1], [], []>} : vector<8x2048xf32>, vector<2048x128xf32>, vector<8x128xf32> -> vector<8x128xf32>
    %c0_25 = arith.constant 0 : index
    %c0_26 = arith.constant 0 : index
    %147 = vector.load %arg6[%c0_25, %c0_26] : memref<1x128xf32, #tpu.memory_space<vmem>>, vector<1x128xf32>
    %148 = vector.broadcast %147 : vector<1x128xf32> to vector<8x128xf32>
    %149 = arith.addf %146, %148 : vector<8x128xf32>
    %150 = vector.extract_strided_slice %149 {offsets = [0, 0], sizes = [4, 128], strides = [1, 1]} : vector<8x128xf32> to vector<4x128xf32>
    %cst_27 = arith.constant dense<0.000000e+00> : vector<128xf32>
    %151 = vector.multi_reduction <add>, %150, %cst_27 [0] : vector<4x128xf32> to vector<128xf32>
    %152 = vector.shape_cast %151 : vector<128xf32> to vector<1x128xf32>
    %cst_28 = arith.constant 4.000000e+00 : f32
    %153 = vector.broadcast %cst_28 : f32 to vector<1x128xf32>
    %154 = arith.divf %152, %153 : vector<1x128xf32>
    %155 = vector.broadcast %154 : vector<1x128xf32> to vector<4x128xf32>
    %156 = arith.subf %150, %155 : vector<4x128xf32>
    %157 = arith.mulf %156, %156 : vector<4x128xf32>
    %cst_29 = arith.constant dense<0.000000e+00> : vector<128xf32>
    %158 = vector.multi_reduction <add>, %157, %cst_29 [0] : vector<4x128xf32> to vector<128xf32>
    %159 = vector.shape_cast %158 : vector<128xf32> to vector<1x128xf32>
    %cst_30 = arith.constant 4.000000e+00 : f32
    %160 = vector.broadcast %cst_30 : f32 to vector<1x128xf32>
    %161 = arith.divf %159, %160 : vector<1x128xf32>
    %162 = vector.broadcast %154 : vector<1x128xf32> to vector<8x128xf32>
    %163 = arith.subf %149, %162 : vector<8x128xf32>
    %cst_31 = arith.constant 9.99999974E-6 : f32
    %164 = vector.broadcast %cst_31 : f32 to vector<1x128xf32>
    %165 = arith.addf %161, %164 : vector<1x128xf32>
    %166 = math.rsqrt %165 : vector<1x128xf32>
    %167 = vector.broadcast %166 : vector<1x128xf32> to vector<8x128xf32>
    %168 = arith.mulf %163, %167 : vector<8x128xf32>
    %c0_32 = arith.constant 0 : index
    %c0_33 = arith.constant 0 : index
    %169 = vector.load %arg7[%c0_32, %c0_33] : memref<1x128xf32, #tpu.memory_space<vmem>>, vector<1x128xf32>
    %170 = vector.broadcast %169 : vector<1x128xf32> to vector<8x128xf32>
    %171 = arith.mulf %168, %170 : vector<8x128xf32>
    %c0_34 = arith.constant 0 : index
    %c0_35 = arith.constant 0 : index
    %172 = vector.load %arg8[%c0_34, %c0_35] : memref<1x128xf32, #tpu.memory_space<vmem>>, vector<1x128xf32>
    %173 = vector.broadcast %172 : vector<1x128xf32> to vector<8x128xf32>
    %174 = arith.addf %171, %173 : vector<8x128xf32>
    %c0_36 = arith.constant 0 : index
    %c0_37 = arith.constant 0 : index
    %175 = vector.load %arg9[%c0_36, %c0_37] : memref<128x128xf32, #tpu.memory_space<vmem>>, vector<128x128xf32>
    %cst_38 = arith.constant dense<0.000000e+00> : vector<8x128xf32>
    %176 = tpu.matmul %174, %175, %cst_38 {dimension_numbers = #tpu.dot_dimension_numbers<[1], [0], [0], [1], [0, 0, 1, 1], [], []>} : vector<8x128xf32>, vector<128x128xf32>, vector<8x128xf32> -> vector<8x128xf32>
    %c0_39 = arith.constant 0 : index
    %c0_40 = arith.constant 0 : index
    %177 = vector.load %arg10[%c0_39, %c0_40] : memref<1x128xf32, #tpu.memory_space<vmem>>, vector<1x128xf32>
    %178 = vector.broadcast %177 : vector<1x128xf32> to vector<8x128xf32>
    %179 = arith.addf %176, %178 : vector<8x128xf32>
    %c0_41 = arith.constant 0 : index
    %c0_42 = arith.constant 0 : index
    %180 = vector.load %arg11[%c0_41, %c0_42] : memref<8x128xf32, #tpu.memory_space<vmem>>, vector<8x128xf32>
    tpu.vector_store %arg11[%c0_41, %c0_42], %179 {strides = array<i32>} : memref<8x128xf32, #tpu.memory_space<vmem>>, vector<8x128xf32>,
    return
  }
}

</mosaic_0001>

<llo_original>
// kernel: classifier_forward.1
$region0: #{classifier_forward.1}
  #allocation0 [shape = 'u32[]', space=smem, size = 0x4, offset = 0x4, fixed_abs, tag = 'smem constant byte address 0x4 - core index']
  #allocation1 [shape = 'u32[144,128]{1,0:T(1,128)}', space=vmem, size = 0x12000, scoped, tag = 'internal scratch']
  #allocation2 [shape = 'f32[2048,128]{1,0:T(8,128)}', space=vmem, size = 0x100000, scoped, tag = 'scratch operand']
  #allocation3 [shape = 's32[1]{0}', space=sflag, size = 0x4, scoped, tag = 'scratch operand']
  #allocation4 [shape = 's32[]', space=sflag, size = 0x4, offset = 0, fixed_abs, tag = 'sflag constant byte address 0x0 - dummy sync flag']
  %s0 = inlined_call_operand.vmem [shape: f32[36,8,512], index: 0, kind: input, shape index: {}]
  %s1 = inlined_call_operand.vmem [shape: f32[512,32], index: 1, kind: input, shape index: {}]
  %s2 = inlined_call_operand.vmem [shape: f32[32,512], index: 2, kind: input, shape index: {}]
  %s3 = inlined_call_operand.vmem [shape: f32[36,36], index: 3, kind: input, shape index: {}]
  %s4 = inlined_call_operand.vmem [shape: f32[36,36], index: 4, kind: input, shape index: {}]
  %s5 = inlined_call_operand.vmem [shape: f32[2048,128], index: 5, kind: input, shape index: {}]
  %s6 = inlined_call_operand.vmem [shape: f32[1,128], index: 6, kind: input, shape index: {}]
  %s7 = inlined_call_operand.vmem [shape: f32[1,128], index: 7, kind: input, shape index: {}]
  %s8 = inlined_call_operand.vmem [shape: f32[1,128], index: 8, kind: input, shape index: {}]
  %s9 = inlined_call_operand.vmem [shape: f32[128,128], index: 9, kind: input, shape index: {}]
  %s10 = inlined_call_operand.vmem [shape: f32[1,128], index: 10, kind: input, shape index: {}]
  %s11 = inlined_call_operand.vmem [shape: f32[8,128], index: 11, kind: output, shape index: {}]
  %s12 = sld [smem:[#allocation0]]
  $region84: #{classifier_forward.1} parent=0
    _
  %s14 = ssub.s32 1, %s12
  %s15 = scalar_select 0, %s14, %s12
  // Predicated region
  $region2: #{classifier_forward.1} parent=0 // pred_check
    _
  $region3: #{classifier_forward.1} parent=0 // pred_check_branch
    %17 = sbr.rel (0) target = $region5
  $region4: #{classifier_forward.1} parent=0 // pred_region
    _
  $region5: #{classifier_forward.1} parent=0 // pred_fallthru
    _
  // Predicated region
  $region6: #{classifier_forward.1} parent=0 // pred_check
    _
  $region7: #{classifier_forward.1} parent=0 // pred_check_branch
    %19 = sbr.rel (0) target = $region9
  $region8: #{classifier_forward.1} parent=0 // pred_region
    _
  $region9: #{classifier_forward.1} parent=0 // pred_fallthru
    _
  // Predicated region
  $region10: #{classifier_forward.1} parent=0 // pred_check
    _
  $region11: #{classifier_forward.1} parent=0 // pred_check_branch
    %21 = sbr.rel (0) target = $region13
  $region12: #{classifier_forward.1} parent=0 // pred_region
    _
  $region13: #{classifier_forward.1} parent=0 // pred_fallthru
    _
  // Predicated region
  $region14: #{classifier_forward.1} parent=0 // pred_check
    _
  $region15: #{classifier_forward.1} parent=0 // pred_check_branch
    %23 = sbr.rel (0) target = $region17
  $region16: #{classifier_forward.1} parent=0 // pred_region
    _
  $region17: #{classifier_forward.1} parent=0 // pred_fallthru
    _
  // Predicated region
  $region18: #{classifier_forward.1} parent=0 // pred_check
    _
  $region19: #{classifier_forward.1} parent=0 // pred_check_branch
    %25 = sbr.rel (0) target = $region21
  $region20: #{classifier_forward.1} parent=0 // pred_region
    _
  $region21: #{classifier_forward.1} parent=0 // pred_fallthru
    _
  // Predicated region
  $region22: #{classifier_forward.1} parent=0 // pred_check
    _
  $region23: #{classifier_forward.1} parent=0 // pred_check_branch
    %27 = sbr.rel (0) target = $region25
  $region24: #{classifier_forward.1} parent=0 // pred_region
    _
  $region25: #{classifier_forward.1} parent=0 // pred_fallthru
    _
  // Predicated region
  $region26: #{classifier_forward.1} parent=0 // pred_check
    _
  $region27: #{classifier_forward.1} parent=0 // pred_check_branch
    %29 = sbr.rel (0) target = $region29
  $region28: #{classifier_forward.1} parent=0 // pred_region
    _
  $region29: #{classifier_forward.1} parent=0 // pred_fallthru
    _
  // Predicated region
  $region30: #{classifier_forward.1} parent=0 // pred_check
    _
  $region31: #{classifier_forward.1} parent=0 // pred_check_branch
    %31 = sbr.rel (0) target = $region33
  $region32: #{classifier_forward.1} parent=0 // pred_region
    _
  $region33: #{classifier_forward.1} parent=0 // pred_fallthru
    _
  // Predicated region
  $region34: #{classifier_forward.1} parent=0 // pred_check
    _
  $region35: #{classifier_forward.1} parent=0 // pred_check_branch
    %33 = sbr.rel (0) target = $region37
  $region36: #{classifier_forward.1} parent=0 // pred_region
    _
  $region37: #{classifier_forward.1} parent=0 // pred_fallthru
    _
  // Predicated region
  $region38: #{classifier_forward.1} parent=0 // pred_check
    _
  $region39: #{classifier_forward.1} parent=0 // pred_check_branch
    %35 = sbr.rel (0) target = $region41
  $region40: #{classifier_forward.1} parent=0 // pred_region
    _
  $region41: #{classifier_forward.1} parent=0 // pred_fallthru
    _
  %p37 = scmp.lt.u32.totalorder 2048, 8
  %p38 = pneg %p37
  // Predicated region
  $region42: #{classifier_forward.1} parent=0 // pred_check
    _
  $region43: #{classifier_forward.1} parent=0 // pred_check_branch
    %40 = sbr.rel (%p37) target = $region45
  $region44: #{classifier_forward.1} parent=0 // pred_region
    %s55 = sand.u32 2048, 7
    %p56 = scmp.eq.s32.totalorder %s55, 0
    // Predicated region
    $region57: #{classifier_forward.1} parent=44 // pred_check
      %p57 = pneg %p56
    $region58: #{classifier_forward.1} parent=44 // pred_check_branch
      %59 = sbr.rel (%p57) target = $region60
    $region59: #{classifier_forward.1} parent=44 // pred_region
      loop: start=0, step=1, limit=1
      $region61: #{classifier_forward.1} parent=59 // loop_pre_header
        _
      $region62: #{classifier_forward.1} parent=59 // loop_header
        %s61 = sphi 0, %s65
        %p62 = scmp.ge.s32.totalorder %s61, 1
        %s66 = sphi %s5, %s5
        %s67 = sphi [#allocation2], [#allocation2]
      $region63: #{classifier_forward.1} parent=59 // loop_header_branch
        %64 = sbr.rel (%p62) target = $region67
      $region64: #{classifier_forward.1} parent=59 // loop_body
        %v68 = vld [vmem:[%s66] sm:$0xff]
        %69 = vst [vmem:[%s67] sm:$0xff] %v68
        %v70 = vld [vmem:[%s66 + $0x8] sm:$0xff]
        %71 = vst [vmem:[%s67 + $0x8] sm:$0xff] %v70
        %v72 = vld [vmem:[%s66 + $0x10] sm:$0xff]
        %73 = vst [vmem:[%s67 + $0x10] sm:$0xff] %v72
        %v74 = vld [vmem:[%s66 + $0x18] sm:$0xff]
        %75 = vst [vmem:[%s67 + $0x18] sm:$0xff] %v74
        %v76 = vld [vmem:[%s66 + $0x20] sm:$0xff]
        %77 = vst [vmem:[%s67 + $0x20] sm:$0xff] %v76
        %v78 = vld [vmem:[%s66 + $0x28] sm:$0xff]
        %79 = vst [vmem:[%s67 + $0x28] sm:$0xff] %v78
        %v80 = vld [vmem:[%s66 + $0x30] sm:$0xff]
        %81 = vst [vmem:[%s67 + $0x30] sm:$0xff] %v80
        %v82 = vld [vmem:[%s66 + $0x38] sm:$0xff]
        %83 = vst [vmem:[%s67 + $0x38] sm:$0xff] %v82
        %v84 = vld [vmem:[%s66 + $0x40] sm:$0xff]
        %85 = vst [vmem:[%s67 + $0x40] sm:$0xff] %v84
        %v86 = vld [vmem:[%s66 + $0x48] sm:$0xff]
        %87 = vst [vmem:[%s67 + $0x48] sm:$0xff] %v86
        %v88 = vld [vmem:[%s66 + $0x50] sm:$0xff]
        %89 = vst [vmem:[%s67 + $0x50] sm:$0xff] %v88
        %v90 = vld [vmem:[%s66 + $0x58] sm:$0xff]
        %91 = vst [vmem:[%s67 + $0x58] sm:$0xff] %v90
        %v92 = vld [vmem:[%s66 + $0x60] sm:$0xff]
        %93 = vst [vmem:[%s67 + $0x60] sm:$0xff] %v92
        %v94 = vld [vmem:[%s66 + $0x68] sm:$0xff]
        %95 = vst [vmem:[%s67 + $0x68] sm:$0xff] %v94
        %v96 = vld [vmem:[%s66 + $0x70] sm:$0xff]
        %97 = vst [vmem:[%s67 + $0x70] sm:$0xff] %v96
        %v98 = vld [vmem:[%s66 + $0x78] sm:$0xff]
        %99 = vst [vmem:[%s67 + $0x78] sm:$0xff] %v98
        %v100 = vld [vmem:[%s66 + $0x80] sm:$0xff]
        %101 = vst [vmem:[%s67 + $0x80] sm:$0xff] %v100
        %v102 = vld [vmem:[%s66 + $0x88] sm:$0xff]
        %103 = vst [vmem:[%s67 + $0x88] sm:$0xff] %v102
        %v104 = vld [vmem:[%s66 + $0x90] sm:$0xff]
        %105 = vst [vmem:[%s67 + $0x90] sm:$0xff] %v104
        %v106 = vld [vmem:[%s66 + $0x98] sm:$0xff]
        %107 = vst [vmem:[%s67 + $0x98] sm:$0xff] %v106
        %v108 = vld [vmem:[%s66 + $0xa0] sm:$0xff]
        %109 = vst [vmem:[%s67 + $0xa0] sm:$0xff] %v108
        %v110 = vld [vmem:[%s66 + $0xa8] sm:$0xff]
        %111 = vst [vmem:[%s67 + $0xa8] sm:$0xff] %v110
        %v112 = vld [vmem:[%s66 + $0xb0] sm:$0xff]
        %113 = vst [vmem:[%s67 + $0xb0] sm:$0xff] %v112
        %v114 = vld [vmem:[%s66 + $0xb8] sm:$0xff]
        %115 = vst [vmem:[%s67 + $0xb8] sm:$0xff] %v114
        %v116 = vld [vmem:[%s66 + $0xc0] sm:$0xff]
        %117 = vst [vmem:[%s67 + $0xc0] sm:$0xff] %v116
        %v118 = vld [vmem:[%s66 + $0xc8] sm:$0xff]
        %119 = vst [vmem:[%s67 + $0xc8] sm:$0xff] %v118
        %v120 = vld [vmem:[%s66 + $0xd0] sm:$0xff]
        %121 = vst [vmem:[%s67 + $0xd0] sm:$0xff] %v120
        %v122 = vld [vmem:[%s66 + $0xd8] sm:$0xff]
        %123 = vst [vmem:[%s67 + $0xd8] sm:$0xff] %v122
        %v124 = vld [vmem:[%s66 + $0xe0] sm:$0xff]
        %125 = vst [vmem:[%s67 + $0xe0] sm:$0xff] %v124
        %v126 = vld [vmem:[%s66 + $0xe8] sm:$0xff]
        %127 = vst [vmem:[%s67 + $0xe8] sm:$0xff] %v126
        %v128 = vld [vmem:[%s66 + $0xf0] sm:$0xff]
        %129 = vst [vmem:[%s67 + $0xf0] sm:$0xff] %v128
        %v130 = vld [vmem:[%s66 + $0xf8] sm:$0xff]
        %131 = vst [vmem:[%s67 + $0xf8] sm:$0xff] %v130
        %v132 = vld [vmem:[%s66 + $0x100] sm:$0xff]
        %133 = vst [vmem:[%s67 + $0x100] sm:$0xff] %v132
        %v134 = vld [vmem:[%s66 + $0x108] sm:$0xff]
        %135 = vst [vmem:[%s67 + $0x108] sm:$0xff] %v134
        %v136 = vld [vmem:[%s66 + $0x110] sm:$0xff]
        %137 = vst [vmem:[%s67 + $0x110] sm:$0xff] %v136
        %v138 = vld [vmem:[%s66 + $0x118] sm:$0xff]
        %139 = vst [vmem:[%s67 + $0x118] sm:$0xff] %v138
        %v140 = vld [vmem:[%s66 + $0x120] sm:$0xff]
        %141 = vst [vmem:[%s67 + $0x120] sm:$0xff] %v140
        %v142 = vld [vmem:[%s66 + $0x128] sm:$0xff]
        %143 = vst [vmem:[%s67 + $0x128] sm:$0xff] %v142
        %v144 = vld [vmem:[%s66 + $0x130] sm:$0xff]
        %145 = vst [vmem:[%s67 + $0x130] sm:$0xff] %v144
        %v146 = vld [vmem:[%s66 + $0x138] sm:$0xff]
        %147 = vst [vmem:[%s67 + $0x138] sm:$0xff] %v146
        %v148 = vld [vmem:[%s66 + $0x140] sm:$0xff]
        %149 = vst [vmem:[%s67 + $0x140] sm:$0xff] %v148
        %v150 = vld [vmem:[%s66 + $0x148] sm:$0xff]
        %151 = vst [vmem:[%s67 + $0x148] sm:$0xff] %v150
        %v152 = vld [vmem:[%s66 + $0x150] sm:$0xff]
        %153 = vst [vmem:[%s67 + $0x150] sm:$0xff] %v152
        %v154 = vld [vmem:[%s66 + $0x158] sm:$0xff]
        %155 = vst [vmem:[%s67 + $0x158] sm:$0xff] %v154
        %v156 = vld [vmem:[%s66 + $0x160] sm:$0xff]
        %157 = vst [vmem:[%s67 + $0x160] sm:$0xff] %v156
        %v158 = vld [vmem:[%s66 + $0x168] sm:$0xff]
        %159 = vst [vmem:[%s67 + $0x168] sm:$0xff] %v158
        %v160 = vld [vmem:[%s66 + $0x170] sm:$0xff]
        %161 = vst [vmem:[%s67 + $0x170] sm:$0xff] %v160
        %v162 = vld [vmem:[%s66 + $0x178] sm:$0xff]
        %163 = vst [vmem:[%s67 + $0x178] sm:$0xff] %v162
        %v164 = vld [vmem:[%s66 + $0x180] sm:$0xff]
        %165 = vst [vmem:[%s67 + $0x180] sm:$0xff] %v164
        %v166 = vld [vmem:[%s66 + $0x188] sm:$0xff]
        %167 = vst [vmem:[%s67 + $0x188] sm:$0xff] %v166
        %v168 = vld [vmem:[%s66 + $0x190] sm:$0xff]
        %169 = vst [vmem:[%s67 + $0x190] sm:$0xff] %v168
        %v170 = vld [vmem:[%s66 + $0x198] sm:$0xff]
        %171 = vst [vmem:[%s67 + $0x198] sm:$0xff] %v170
        %v172 = vld [vmem:[%s66 + $0x1a0] sm:$0xff]
        %173 = vst [vmem:[%s67 + $0x1a0] sm:$0xff] %v172
        %v174 = vld [vmem:[%s66 + $0x1a8] sm:$0xff]
        %175 = vst [vmem:[%s67 + $0x1a8] sm:$0xff] %v174
        %v176 = vld [vmem:[%s66 + $0x1b0] sm:$0xff]
        %177 = vst [vmem:[%s67 + $0x1b0] sm:$0xff] %v176
        %v178 = vld [vmem:[%s66 + $0x1b8] sm:$0xff]
        %179 = vst [vmem:[%s67 + $0x1b8] sm:$0xff] %v178
        %v180 = vld [vmem:[%s66 + $0x1c0] sm:$0xff]
        %181 = vst [vmem:[%s67 + $0x1c0] sm:$0xff] %v180
        %v182 = vld [vmem:[%s66 + $0x1c8] sm:$0xff]
        %183 = vst [vmem:[%s67 + $0x1c8] sm:$0xff] %v182
        %v184 = vld [vmem:[%s66 + $0x1d0] sm:$0xff]
        %185 = vst [vmem:[%s67 + $0x1d0] sm:$0xff] %v184
        %v186 = vld [vmem:[%s66 + $0x1d8] sm:$0xff]
        %187 = vst [vmem:[%s67 + $0x1d8] sm:$0xff] %v186
        %v188 = vld [vmem:[%s66 + $0x1e0] sm:$0xff]
        %189 = vst [vmem:[%s67 + $0x1e0] sm:$0xff] %v188
        %v190 = vld [vmem:[%s66 + $0x1e8] sm:$0xff]
        %191 = vst [vmem:[%s67 + $0x1e8] sm:$0xff] %v190
        %v192 = vld [vmem:[%s66 + $0x1f0] sm:$0xff]
        %193 = vst [vmem:[%s67 + $0x1f0] sm:$0xff] %v192
        %v194 = vld [vmem:[%s66 + $0x1f8] sm:$0xff]
        %195 = vst [vmem:[%s67 + $0x1f8] sm:$0xff] %v194
        %v196 = vld [vmem:[%s66 + $0x200] sm:$0xff]
        %197 = vst [vmem:[%s67 + $0x200] sm:$0xff] %v196
        %v198 = vld [vmem:[%s66 + $0x208] sm:$0xff]
        %199 = vst [vmem:[%s67 + $0x208] sm:$0xff] %v198
        %v200 = vld [vmem:[%s66 + $0x210] sm:$0xff]
        %201 = vst [vmem:[%s67 + $0x210] sm:$0xff] %v200
        %v202 = vld [vmem:[%s66 + $0x218] sm:$0xff]
        %203 = vst [vmem:[%s67 + $0x218] sm:$0xff] %v202
        %v204 = vld [vmem:[%s66 + $0x220] sm:$0xff]
        %205 = vst [vmem:[%s67 + $0x220] sm:$0xff] %v204
        %v206 = vld [vmem:[%s66 + $0x228] sm:$0xff]
        %207 = vst [vmem:[%s67 + $0x228] sm:$0xff] %v206
        %v208 = vld [vmem:[%s66 + $0x230] sm:$0xff]
        %209 = vst [vmem:[%s67 + $0x230] sm:$0xff] %v208
        %v210 = vld [vmem:[%s66 + $0x238] sm:$0xff]
        %211 = vst [vmem:[%s67 + $0x238] sm:$0xff] %v210
        %v212 = vld [vmem:[%s66 + $0x240] sm:$0xff]
        %213 = vst [vmem:[%s67 + $0x240] sm:$0xff] %v212
        %v214 = vld [vmem:[%s66 + $0x248] sm:$0xff]
        %215 = vst [vmem:[%s67 + $0x248] sm:$0xff] %v214
        %v216 = vld [vmem:[%s66 + $0x250] sm:$0xff]
        %217 = vst [vmem:[%s67 + $0x250] sm:$0xff] %v216
        %v218 = vld [vmem:[%s66 + $0x258] sm:$0xff]
        %219 = vst [vmem:[%s67 + $0x258] sm:$0xff] %v218
        %v220 = vld [vmem:[%s66 + $0x260] sm:$0xff]
        %221 = vst [vmem:[%s67 + $0x260] sm:$0xff] %v220
        %v222 = vld [vmem:[%s66 + $0x268] sm:$0xff]
        %223 = vst [vmem:[%s67 + $0x268] sm:$0xff] %v222
        %v224 = vld [vmem:[%s66 + $0x270] sm:$0xff]
        %225 = vst [vmem:[%s67 + $0x270] sm:$0xff] %v224
        %v226 = vld [vmem:[%s66 + $0x278] sm:$0xff]
        %227 = vst [vmem:[%s67 + $0x278] sm:$0xff] %v226
        %v228 = vld [vmem:[%s66 + $0x280] sm:$0xff]
        %229 = vst [vmem:[%s67 + $0x280] sm:$0xff] %v228
        %v230 = vld [vmem:[%s66 + $0x288] sm:$0xff]
        %231 = vst [vmem:[%s67 + $0x288] sm:$0xff] %v230
        %v232 = vld [vmem:[%s66 + $0x290] sm:$0xff]
        %233 = vst [vmem:[%s67 + $0x290] sm:$0xff] %v232
        %v234 = vld [vmem:[%s66 + $0x298] sm:$0xff]
        %235 = vst [vmem:[%s67 + $0x298] sm:$0xff] %v234
        %v236 = vld [vmem:[%s66 + $0x2a0] sm:$0xff]
        %237 = vst [vmem:[%s67 + $0x2a0] sm:$0xff] %v236
        %v238 = vld [vmem:[%s66 + $0x2a8] sm:$0xff]
        %239 = vst [vmem:[%s67 + $0x2a8] sm:$0xff] %v238
        %v240 = vld [vmem:[%s66 + $0x2b0] sm:$0xff]
        %241 = vst [vmem:[%s67 + $0x2b0] sm:$0xff] %v240
        %v242 = vld [vmem:[%s66 + $0x2b8] sm:$0xff]
        %243 = vst [vmem:[%s67 + $0x2b8] sm:$0xff] %v242
        %v244 = vld [vmem:[%s66 + $0x2c0] sm:$0xff]
        %245 = vst [vmem:[%s67 + $0x2c0] sm:$0xff] %v244
        %v246 = vld [vmem:[%s66 + $0x2c8] sm:$0xff]
        %247 = vst [vmem:[%s67 + $0x2c8] sm:$0xff] %v246
        %v248 = vld [vmem:[%s66 + $0x2d0] sm:$0xff]
        %249 = vst [vmem:[%s67 + $0x2d0] sm:$0xff] %v248
        %v250 = vld [vmem:[%s66 + $0x2d8] sm:$0xff]
        %251 = vst [vmem:[%s67 + $0x2d8] sm:$0xff] %v250
        %v252 = vld [vmem:[%s66 + $0x2e0] sm:$0xff]
        %253 = vst [vmem:[%s67 + $0x2e0] sm:$0xff] %v252
        %v254 = vld [vmem:[%s66 + $0x2e8] sm:$0xff]
        %255 = vst [vmem:[%s67 + $0x2e8] sm:$0xff] %v254
        %v256 = vld [vmem:[%s66 + $0x2f0] sm:$0xff]
        %257 = vst [vmem:[%s67 + $0x2f0] sm:$0xff] %v256
        %v258 = vld [vmem:[%s66 + $0x2f8] sm:$0xff]
        %259 = vst [vmem:[%s67 + $0x2f8] sm:$0xff] %v258
        %v260 = vld [vmem:[%s66 + $0x300] sm:$0xff]
        %261 = vst [vmem:[%s67 + $0x300] sm:$0xff] %v260
        %v262 = vld [vmem:[%s66 + $0x308] sm:$0xff]
        %263 = vst [vmem:[%s67 + $0x308] sm:$0xff] %v262
        %v264 = vld [vmem:[%s66 + $0x310] sm:$0xff]
        %265 = vst [vmem:[%s67 + $0x310] sm:$0xff] %v264
        %v266 = vld [vmem:[%s66 + $0x318] sm:$0xff]
        %267 = vst [vmem:[%s67 + $0x318] sm:$0xff] %v266
        %v268 = vld [vmem:[%s66 + $0x320] sm:$0xff]
        %269 = vst [vmem:[%s67 + $0x320] sm:$0xff] %v268
        %v270 = vld [vmem:[%s66 + $0x328] sm:$0xff]
        %271 = vst [vmem:[%s67 + $0x328] sm:$0xff] %v270
        %v272 = vld [vmem:[%s66 + $0x330] sm:$0xff]
        %273 = vst [vmem:[%s67 + $0x330] sm:$0xff] %v272
        %v274 = vld [vmem:[%s66 + $0x338] sm:$0xff]
        %275 = vst [vmem:[%s67 + $0x338] sm:$0xff] %v274
        %v276 = vld [vmem:[%s66 + $0x340] sm:$0xff]
        %277 = vst [vmem:[%s67 + $0x340] sm:$0xff] %v276
        %v278 = vld [vmem:[%s66 + $0x348] sm:$0xff]
        %279 = vst [vmem:[%s67 + $0x348] sm:$0xff] %v278
        %v280 = vld [vmem:[%s66 + $0x350] sm:$0xff]
        %281 = vst [vmem:[%s67 + $0x350] sm:$0xff] %v280
        %v282 = vld [vmem:[%s66 + $0x358] sm:$0xff]
        %283 = vst [vmem:[%s67 + $0x358] sm:$0xff] %v282
        %v284 = vld [vmem:[%s66 + $0x360] sm:$0xff]
        %285 = vst [vmem:[%s67 + $0x360] sm:$0xff] %v284
        %v286 = vld [vmem:[%s66 + $0x368] sm:$0xff]
        %287 = vst [vmem:[%s67 + $0x368] sm:$0xff] %v286
        %v288 = vld [vmem:[%s66 + $0x370] sm:$0xff]
        %289 = vst [vmem:[%s67 + $0x370] sm:$0xff] %v288
        %v290 = vld [vmem:[%s66 + $0x378] sm:$0xff]
        %291 = vst [vmem:[%s67 + $0x378] sm:$0xff] %v290
        %v292 = vld [vmem:[%s66 + $0x380] sm:$0xff]
        %293 = vst [vmem:[%s67 + $0x380] sm:$0xff] %v292
        %v294 = vld [vmem:[%s66 + $0x388] sm:$0xff]
        %295 = vst [vmem:[%s67 + $0x388] sm:$0xff] %v294
        %v296 = vld [vmem:[%s66 + $0x390] sm:$0xff]
        %297 = vst [vmem:[%s67 + $0x390] sm:$0xff] %v296
        %v298 = vld [vmem:[%s66 + $0x398] sm:$0xff]
        %299 = vst [vmem:[%s67 + $0x398] sm:$0xff] %v298
        %v300 = vld [vmem:[%s66 + $0x3a0] sm:$0xff]
        %301 = vst [vmem:[%s67 + $0x3a0] sm:$0xff] %v300
        %v302 = vld [vmem:[%s66 + $0x3a8] sm:$0xff]
        %303 = vst [vmem:[%s67 + $0x3a8] sm:$0xff] %v302
        %v304 = vld [vmem:[%s66 + $0x3b0] sm:$0xff]
        %305 = vst [vmem:[%s67 + $0x3b0] sm:$0xff] %v304
        %v306 = vld [vmem:[%s66 + $0x3b8] sm:$0xff]
        %307 = vst [vmem:[%s67 + $0x3b8] sm:$0xff] %v306
        %v308 = vld [vmem:[%s66 + $0x3c0] sm:$0xff]
        %309 = vst [vmem:[%s67 + $0x3c0] sm:$0xff] %v308
        %v310 = vld [vmem:[%s66 + $0x3c8] sm:$0xff]
        %311 = vst [vmem:[%s67 + $0x3c8] sm:$0xff] %v310
        %v312 = vld [vmem:[%s66 + $0x3d0] sm:$0xff]
        %313 = vst [vmem:[%s67 + $0x3d0] sm:$0xff] %v312
        %v314 = vld [vmem:[%s66 + $0x3d8] sm:$0xff]
        %315 = vst [vmem:[%s67 + $0x3d8] sm:$0xff] %v314
        %v316 = vld [vmem:[%s66 + $0x3e0] sm:$0xff]
        %317 = vst [vmem:[%s67 + $0x3e0] sm:$0xff] %v316
        %v318 = vld [vmem:[%s66 + $0x3e8] sm:$0xff]
        %319 = vst [vmem:[%s67 + $0x3e8] sm:$0xff] %v318
        %v320 = vld [vmem:[%s66 + $0x3f0] sm:$0xff]
        %321 = vst [vmem:[%s67 + $0x3f0] sm:$0xff] %v320
        %v322 = vld [vmem:[%s66 + $0x3f8] sm:$0xff]
        %323 = vst [vmem:[%s67 + $0x3f8] sm:$0xff] %v322
        %v324 = vld [vmem:[%s66 + $0x400] sm:$0xff]
        %325 = vst [vmem:[%s67 + $0x400] sm:$0xff] %v324
        %v326 = vld [vmem:[%s66 + $0x408] sm:$0xff]
        %327 = vst [vmem:[%s67 + $0x408] sm:$0xff] %v326
        %v328 = vld [vmem:[%s66 + $0x410] sm:$0xff]
        %329 = vst [vmem:[%s67 + $0x410] sm:$0xff] %v328
        %v330 = vld [vmem:[%s66 + $0x418] sm:$0xff]
        %331 = vst [vmem:[%s67 + $0x418] sm:$0xff] %v330
        %v332 = vld [vmem:[%s66 + $0x420] sm:$0xff]
        %333 = vst [vmem:[%s67 + $0x420] sm:$0xff] %v332
        %v334 = vld [vmem:[%s66 + $0x428] sm:$0xff]
        %335 = vst [vmem:[%s67 + $0x428] sm:$0xff] %v334
        %v336 = vld [vmem:[%s66 + $0x430] sm:$0xff]
        %337 = vst [vmem:[%s67 + $0x430] sm:$0xff] %v336
        %v338 = vld [vmem:[%s66 + $0x438] sm:$0xff]
        %339 = vst [vmem:[%s67 + $0x438] sm:$0xff] %v338
        %v340 = vld [vmem:[%s66 + $0x440] sm:$0xff]
        %341 = vst [vmem:[%s67 + $0x440] sm:$0xff] %v340
        %v342 = vld [vmem:[%s66 + $0x448] sm:$0xff]
        %343 = vst [vmem:[%s67 + $0x448] sm:$0xff] %v342
        %v344 = vld [vmem:[%s66 + $0x450] sm:$0xff]
        %345 = vst [vmem:[%s67 + $0x450] sm:$0xff] %v344
        %v346 = vld [vmem:[%s66 + $0x458] sm:$0xff]
        %347 = vst [vmem:[%s67 + $0x458] sm:$0xff] %v346
        %v348 = vld [vmem:[%s66 + $0x460] sm:$0xff]
        %349 = vst [vmem:[%s67 + $0x460] sm:$0xff] %v348
        %v350 = vld [vmem:[%s66 + $0x468] sm:$0xff]
        %351 = vst [vmem:[%s67 + $0x468] sm:$0xff] %v350
        %v352 = vld [vmem:[%s66 + $0x470] sm:$0xff]
        %353 = vst [vmem:[%s67 + $0x470] sm:$0xff] %v352
        %v354 = vld [vmem:[%s66 + $0x478] sm:$0xff]
        %355 = vst [vmem:[%s67 + $0x478] sm:$0xff] %v354
        %v356 = vld [vmem:[%s66 + $0x480] sm:$0xff]
        %357 = vst [vmem:[%s67 + $0x480] sm:$0xff] %v356
        %v358 = vld [vmem:[%s66 + $0x488] sm:$0xff]
        %359 = vst [vmem:[%s67 + $0x488] sm:$0xff] %v358
        %v360 = vld [vmem:[%s66 + $0x490] sm:$0xff]
        %361 = vst [vmem:[%s67 + $0x490] sm:$0xff] %v360
        %v362 = vld [vmem:[%s66 + $0x498] sm:$0xff]
        %363 = vst [vmem:[%s67 + $0x498] sm:$0xff] %v362
        %v364 = vld [vmem:[%s66 + $0x4a0] sm:$0xff]
        %365 = vst [vmem:[%s67 + $0x4a0] sm:$0xff] %v364
        %v366 = vld [vmem:[%s66 + $0x4a8] sm:$0xff]
        %367 = vst [vmem:[%s67 + $0x4a8] sm:$0xff] %v366
        %v368 = vld [vmem:[%s66 + $0x4b0] sm:$0xff]
        %369 = vst [vmem:[%s67 + $0x4b0] sm:$0xff] %v368
        %v370 = vld [vmem:[%s66 + $0x4b8] sm:$0xff]
        %371 = vst [vmem:[%s67 + $0x4b8] sm:$0xff] %v370
        %v372 = vld [vmem:[%s66 + $0x4c0] sm:$0xff]
        %373 = vst [vmem:[%s67 + $0x4c0] sm:$0xff] %v372
        %v374 = vld [vmem:[%s66 + $0x4c8] sm:$0xff]
        %375 = vst [vmem:[%s67 + $0x4c8] sm:$0xff] %v374
        %v376 = vld [vmem:[%s66 + $0x4d0] sm:$0xff]
        %377 = vst [vmem:[%s67 + $0x4d0] sm:$0xff] %v376
        %v378 = vld [vmem:[%s66 + $0x4d8] sm:$0xff]
        %379 = vst [vmem:[%s67 + $0x4d8] sm:$0xff] %v378
        %v380 = vld [vmem:[%s66 + $0x4e0] sm:$0xff]
        %381 = vst [vmem:[%s67 + $0x4e0] sm:$0xff] %v380
        %v382 = vld [vmem:[%s66 + $0x4e8] sm:$0xff]
        %383 = vst [vmem:[%s67 + $0x4e8] sm:$0xff] %v382
        %v384 = vld [vmem:[%s66 + $0x4f0] sm:$0xff]
        %385 = vst [vmem:[%s67 + $0x4f0] sm:$0xff] %v384
        %v386 = vld [vmem:[%s66 + $0x4f8] sm:$0xff]
        %387 = vst [vmem:[%s67 + $0x4f8] sm:$0xff] %v386
        %v388 = vld [vmem:[%s66 + $0x500] sm:$0xff]
        %389 = vst [vmem:[%s67 + $0x500] sm:$0xff] %v388
        %v390 = vld [vmem:[%s66 + $0x508] sm:$0xff]
        %391 = vst [vmem:[%s67 + $0x508] sm:$0xff] %v390
        %v392 = vld [vmem:[%s66 + $0x510] sm:$0xff]
        %393 = vst [vmem:[%s67 + $0x510] sm:$0xff] %v392
        %v394 = vld [vmem:[%s66 + $0x518] sm:$0xff]
        %395 = vst [vmem:[%s67 + $0x518] sm:$0xff] %v394
        %v396 = vld [vmem:[%s66 + $0x520] sm:$0xff]
        %397 = vst [vmem:[%s67 + $0x520] sm:$0xff] %v396
        %v398 = vld [vmem:[%s66 + $0x528] sm:$0xff]
        %399 = vst [vmem:[%s67 + $0x528] sm:$0xff] %v398
        %v400 = vld [vmem:[%s66 + $0x530] sm:$0xff]
        %401 = vst [vmem:[%s67 + $0x530] sm:$0xff] %v400
        %v402 = vld [vmem:[%s66 + $0x538] sm:$0xff]
        %403 = vst [vmem:[%s67 + $0x538] sm:$0xff] %v402
        %v404 = vld [vmem:[%s66 + $0x540] sm:$0xff]
        %405 = vst [vmem:[%s67 + $0x540] sm:$0xff] %v404
        %v406 = vld [vmem:[%s66 + $0x548] sm:$0xff]
        %407 = vst [vmem:[%s67 + $0x548] sm:$0xff] %v406
        %v408 = vld [vmem:[%s66 + $0x550] sm:$0xff]
        %409 = vst [vmem:[%s67 + $0x550] sm:$0xff] %v408
        %v410 = vld [vmem:[%s66 + $0x558] sm:$0xff]
        %411 = vst [vmem:[%s67 + $0x558] sm:$0xff] %v410
        %v412 = vld [vmem:[%s66 + $0x560] sm:$0xff]
        %413 = vst [vmem:[%s67 + $0x560] sm:$0xff] %v412
        %v414 = vld [vmem:[%s66 + $0x568] sm:$0xff]
        %415 = vst [vmem:[%s67 + $0x568] sm:$0xff] %v414
        %v416 = vld [vmem:[%s66 + $0x570] sm:$0xff]
        %417 = vst [vmem:[%s67 + $0x570] sm:$0xff] %v416
        %v418 = vld [vmem:[%s66 + $0x578] sm:$0xff]
        %419 = vst [vmem:[%s67 + $0x578] sm:$0xff] %v418
        %v420 = vld [vmem:[%s66 + $0x580] sm:$0xff]
        %421 = vst [vmem:[%s67 + $0x580] sm:$0xff] %v420
        %v422 = vld [vmem:[%s66 + $0x588] sm:$0xff]
        %423 = vst [vmem:[%s67 + $0x588] sm:$0xff] %v422
        %v424 = vld [vmem:[%s66 + $0x590] sm:$0xff]
        %425 = vst [vmem:[%s67 + $0x590] sm:$0xff] %v424
        %v426 = vld [vmem:[%s66 + $0x598] sm:$0xff]
        %427 = vst [vmem:[%s67 + $0x598] sm:$0xff] %v426
        %v428 = vld [vmem:[%s66 + $0x5a0] sm:$0xff]
        %429 = vst [vmem:[%s67 + $0x5a0] sm:$0xff] %v428
        %v430 = vld [vmem:[%s66 + $0x5a8] sm:$0xff]
        %431 = vst [vmem:[%s67 + $0x5a8] sm:$0xff] %v430
        %v432 = vld [vmem:[%s66 + $0x5b0] sm:$0xff]
        %433 = vst [vmem:[%s67 + $0x5b0] sm:$0xff] %v432
        %v434 = vld [vmem:[%s66 + $0x5b8] sm:$0xff]
        %435 = vst [vmem:[%s67 + $0x5b8] sm:$0xff] %v434
        %v436 = vld [vmem:[%s66 + $0x5c0] sm:$0xff]
        %437 = vst [vmem:[%s67 + $0x5c0] sm:$0xff] %v436
        %v438 = vld [vmem:[%s66 + $0x5c8] sm:$0xff]
        %439 = vst [vmem:[%s67 + $0x5c8] sm:$0xff] %v438
        %v440 = vld [vmem:[%s66 + $0x5d0] sm:$0xff]
        %441 = vst [vmem:[%s67 + $0x5d0] sm:$0xff] %v440
        %v442 = vld [vmem:[%s66 + $0x5d8] sm:$0xff]
        %443 = vst [vmem:[%s67 + $0x5d8] sm:$0xff] %v442
        %v444 = vld [vmem:[%s66 + $0x5e0] sm:$0xff]
        %445 = vst [vmem:[%s67 + $0x5e0] sm:$0xff] %v444
        %v446 = vld [vmem:[%s66 + $0x5e8] sm:$0xff]
        %447 = vst [vmem:[%s67 + $0x5e8] sm:$0xff] %v446
        %v448 = vld [vmem:[%s66 + $0x5f0] sm:$0xff]
        %449 = vst [vmem:[%s67 + $0x5f0] sm:$0xff] %v448
        %v450 = vld [vmem:[%s66 + $0x5f8] sm:$0xff]
        %451 = vst [vmem:[%s67 + $0x5f8] sm:$0xff] %v450
        %v452 = vld [vmem:[%s66 + $0x600] sm:$0xff]
        %453 = vst [vmem:[%s67 + $0x600] sm:$0xff] %v452
        %v454 = vld [vmem:[%s66 + $0x608] sm:$0xff]
        %455 = vst [vmem:[%s67 + $0x608] sm:$0xff] %v454
        %v456 = vld [vmem:[%s66 + $0x610] sm:$0xff]
        %457 = vst [vmem:[%s67 + $0x610] sm:$0xff] %v456
        %v458 = vld [vmem:[%s66 + $0x618] sm:$0xff]
        %459 = vst [vmem:[%s67 + $0x618] sm:$0xff] %v458
        %v460 = vld [vmem:[%s66 + $0x620] sm:$0xff]
        %461 = vst [vmem:[%s67 + $0x620] sm:$0xff] %v460
        %v462 = vld [vmem:[%s66 + $0x628] sm:$0xff]
        %463 = vst [vmem:[%s67 + $0x628] sm:$0xff] %v462
        %v464 = vld [vmem:[%s66 + $0x630] sm:$0xff]
        %465 = vst [vmem:[%s67 + $0x630] sm:$0xff] %v464
        %v466 = vld [vmem:[%s66 + $0x638] sm:$0xff]
        %467 = vst [vmem:[%s67 + $0x638] sm:$0xff] %v466
        %v468 = vld [vmem:[%s66 + $0x640] sm:$0xff]
        %469 = vst [vmem:[%s67 + $0x640] sm:$0xff] %v468
        %v470 = vld [vmem:[%s66 + $0x648] sm:$0xff]
        %471 = vst [vmem:[%s67 + $0x648] sm:$0xff] %v470
        %v472 = vld [vmem:[%s66 + $0x650] sm:$0xff]
        %473 = vst [vmem:[%s67 + $0x650] sm:$0xff] %v472
        %v474 = vld [vmem:[%s66 + $0x658] sm:$0xff]
        %475 = vst [vmem:[%s67 + $0x658] sm:$0xff] %v474
        %v476 = vld [vmem:[%s66 + $0x660] sm:$0xff]
        %477 = vst [vmem:[%s67 + $0x660] sm:$0xff] %v476
        %v478 = vld [vmem:[%s66 + $0x668] sm:$0xff]
        %479 = vst [vmem:[%s67 + $0x668] sm:$0xff] %v478
        %v480 = vld [vmem:[%s66 + $0x670] sm:$0xff]
        %481 = vst [vmem:[%s67 + $0x670] sm:$0xff] %v480
        %v482 = vld [vmem:[%s66 + $0x678] sm:$0xff]
        %483 = vst [vmem:[%s67 + $0x678] sm:$0xff] %v482
        %v484 = vld [vmem:[%s66 + $0x680] sm:$0xff]
        %485 = vst [vmem:[%s67 + $0x680] sm:$0xff] %v484
        %v486 = vld [vmem:[%s66 + $0x688] sm:$0xff]
        %487 = vst [vmem:[%s67 + $0x688] sm:$0xff] %v486
        %v488 = vld [vmem:[%s66 + $0x690] sm:$0xff]
        %489 = vst [vmem:[%s67 + $0x690] sm:$0xff] %v488
        %v490 = vld [vmem:[%s66 + $0x698] sm:$0xff]
        %491 = vst [vmem:[%s67 + $0x698] sm:$0xff] %v490
        %v492 = vld [vmem:[%s66 + $0x6a0] sm:$0xff]
        %493 = vst [vmem:[%s67 + $0x6a0] sm:$0xff] %v492
        %v494 = vld [vmem:[%s66 + $0x6a8] sm:$0xff]
        %495 = vst [vmem:[%s67 + $0x6a8] sm:$0xff] %v494
        %v496 = vld [vmem:[%s66 + $0x6b0] sm:$0xff]
        %497 = vst [vmem:[%s67 + $0x6b0] sm:$0xff] %v496
        %v498 = vld [vmem:[%s66 + $0x6b8] sm:$0xff]
        %499 = vst [vmem:[%s67 + $0x6b8] sm:$0xff] %v498
        %v500 = vld [vmem:[%s66 + $0x6c0] sm:$0xff]
        %501 = vst [vmem:[%s67 + $0x6c0] sm:$0xff] %v500
        %v502 = vld [vmem:[%s66 + $0x6c8] sm:$0xff]
        %503 = vst [vmem:[%s67 + $0x6c8] sm:$0xff] %v502
        %v504 = vld [vmem:[%s66 + $0x6d0] sm:$0xff]
        %505 = vst [vmem:[%s67 + $0x6d0] sm:$0xff] %v504
        %v506 = vld [vmem:[%s66 + $0x6d8] sm:$0xff]
        %507 = vst [vmem:[%s67 + $0x6d8] sm:$0xff] %v506
        %v508 = vld [vmem:[%s66 + $0x6e0] sm:$0xff]
        %509 = vst [vmem:[%s67 + $0x6e0] sm:$0xff] %v508
        %v510 = vld [vmem:[%s66 + $0x6e8] sm:$0xff]
        %511 = vst [vmem:[%s67 + $0x6e8] sm:$0xff] %v510
        %v512 = vld [vmem:[%s66 + $0x6f0] sm:$0xff]
        %513 = vst [vmem:[%s67 + $0x6f0] sm:$0xff] %v512
        %v514 = vld [vmem:[%s66 + $0x6f8] sm:$0xff]
        %515 = vst [vmem:[%s67 + $0x6f8] sm:$0xff] %v514
        %v516 = vld [vmem:[%s66 + $0x700] sm:$0xff]
        %517 = vst [vmem:[%s67 + $0x700] sm:$0xff] %v516
        %v518 = vld [vmem:[%s66 + $0x708] sm:$0xff]
        %519 = vst [vmem:[%s67 + $0x708] sm:$0xff] %v518
        %v520 = vld [vmem:[%s66 + $0x710] sm:$0xff]
        %521 = vst [vmem:[%s67 + $0x710] sm:$0xff] %v520
        %v522 = vld [vmem:[%s66 + $0x718] sm:$0xff]
        %523 = vst [vmem:[%s67 + $0x718] sm:$0xff] %v522
        %v524 = vld [vmem:[%s66 + $0x720] sm:$0xff]
        %525 = vst [vmem:[%s67 + $0x720] sm:$0xff] %v524
        %v526 = vld [vmem:[%s66 + $0x728] sm:$0xff]
        %527 = vst [vmem:[%s67 + $0x728] sm:$0xff] %v526
        %v528 = vld [vmem:[%s66 + $0x730] sm:$0xff]
        %529 = vst [vmem:[%s67 + $0x730] sm:$0xff] %v528
        %v530 = vld [vmem:[%s66 + $0x738] sm:$0xff]
        %531 = vst [vmem:[%s67 + $0x738] sm:$0xff] %v530
        %v532 = vld [vmem:[%s66 + $0x740] sm:$0xff]
        %533 = vst [vmem:[%s67 + $0x740] sm:$0xff] %v532
        %v534 = vld [vmem:[%s66 + $0x748] sm:$0xff]
        %535 = vst [vmem:[%s67 + $0x748] sm:$0xff] %v534
        %v536 = vld [vmem:[%s66 + $0x750] sm:$0xff]
        %537 = vst [vmem:[%s67 + $0x750] sm:$0xff] %v536
        %v538 = vld [vmem:[%s66 + $0x758] sm:$0xff]
        %539 = vst [vmem:[%s67 + $0x758] sm:$0xff] %v538
        %v540 = vld [vmem:[%s66 + $0x760] sm:$0xff]
        %541 = vst [vmem:[%s67 + $0x760] sm:$0xff] %v540
        %v542 = vld [vmem:[%s66 + $0x768] sm:$0xff]
        %543 = vst [vmem:[%s67 + $0x768] sm:$0xff] %v542
        %v544 = vld [vmem:[%s66 + $0x770] sm:$0xff]
        %545 = vst [vmem:[%s67 + $0x770] sm:$0xff] %v544
        %v546 = vld [vmem:[%s66 + $0x778] sm:$0xff]
        %547 = vst [vmem:[%s67 + $0x778] sm:$0xff] %v546
        %v548 = vld [vmem:[%s66 + $0x780] sm:$0xff]
        %549 = vst [vmem:[%s67 + $0x780] sm:$0xff] %v548
        %v550 = vld [vmem:[%s66 + $0x788] sm:$0xff]
        %551 = vst [vmem:[%s67 + $0x788] sm:$0xff] %v550
        %v552 = vld [vmem:[%s66 + $0x790] sm:$0xff]
        %553 = vst [vmem:[%s67 + $0x790] sm:$0xff] %v552
        %v554 = vld [vmem:[%s66 + $0x798] sm:$0xff]
        %555 = vst [vmem:[%s67 + $0x798] sm:$0xff] %v554
        %v556 = vld [vmem:[%s66 + $0x7a0] sm:$0xff]
        %557 = vst [vmem:[%s67 + $0x7a0] sm:$0xff] %v556
        %v558 = vld [vmem:[%s66 + $0x7a8] sm:$0xff]
        %559 = vst [vmem:[%s67 + $0x7a8] sm:$0xff] %v558
        %v560 = vld [vmem:[%s66 + $0x7b0] sm:$0xff]
        %561 = vst [vmem:[%s67 + $0x7b0] sm:$0xff] %v560
        %v562 = vld [vmem:[%s66 + $0x7b8] sm:$0xff]
        %563 = vst [vmem:[%s67 + $0x7b8] sm:$0xff] %v562
        %v564 = vld [vmem:[%s66 + $0x7c0] sm:$0xff]
        %565 = vst [vmem:[%s67 + $0x7c0] sm:$0xff] %v564
        %v566 = vld [vmem:[%s66 + $0x7c8] sm:$0xff]
        %567 = vst [vmem:[%s67 + $0x7c8] sm:$0xff] %v566
        %v568 = vld [vmem:[%s66 + $0x7d0] sm:$0xff]
        %569 = vst [vmem:[%s67 + $0x7d0] sm:$0xff] %v568
        %v570 = vld [vmem:[%s66 + $0x7d8] sm:$0xff]
        %571 = vst [vmem:[%s67 + $0x7d8] sm:$0xff] %v570
        %v572 = vld [vmem:[%s66 + $0x7e0] sm:$0xff]
        %573 = vst [vmem:[%s67 + $0x7e0] sm:$0xff] %v572
        %v574 = vld [vmem:[%s66 + $0x7e8] sm:$0xff]
        %575 = vst [vmem:[%s67 + $0x7e8] sm:$0xff] %v574
        %v576 = vld [vmem:[%s66 + $0x7f0] sm:$0xff]
        %577 = vst [vmem:[%s67 + $0x7f0] sm:$0xff] %v576
        %v578 = vld [vmem:[%s66 + $0x7f8] sm:$0xff]
        %579 = vst [vmem:[%s67 + $0x7f8] sm:$0xff] %v578
      $region65: #{classifier_forward.1} parent=59 // loop_footer
        %s65 = sadd.s32 1, %s61
      $region66: #{classifier_forward.1} parent=59 // loop_footer_branch
        %60 = sbr.rel target = $region62
      $region67: #{classifier_forward.1} parent=59 // loop_exit
        _
    $region60: #{classifier_forward.1} parent=44 // pred_fallthru
      _
    %p580 = pneg %p56
    // Predicated region
    $region68: #{classifier_forward.1} parent=44 // pred_check
      _
    $region69: #{classifier_forward.1} parent=44 // pred_check_branch
      %582 = sbr.rel (%p56) target = $region71
    $region70: #{classifier_forward.1} parent=44 // pred_region
      %s583 = sand.u32 2048, 7
    $region71: #{classifier_forward.1} parent=44 // pred_fallthru
      _
  $region45: #{classifier_forward.1} parent=0 // pred_fallthru
    _
  // Predicated region
  $region46: #{classifier_forward.1} parent=0 // pred_check
    %p41 = pneg %p37
  $region47: #{classifier_forward.1} parent=0 // pred_check_branch
    %43 = sbr.rel (%p41) target = $region49
  $region48: #{classifier_forward.1} parent=0 // pred_region
    %s44 = sshllo.u32 0, 2048
    loop: start=0, step=1, limit=1
    $region50: #{classifier_forward.1} parent=48 // loop_pre_header
      _
    $region51: #{classifier_forward.1} parent=48 // loop_header
      %s46 = sphi 0, %s50
      %p47 = scmp.ge.s32.totalorder %s46, 1
      %s51 = sphi %s5, %s5
      %s52 = sphi [#allocation2], [#allocation2]
    $region52: #{classifier_forward.1} parent=48 // loop_header_branch
      %49 = sbr.rel (%p47) target = $region56
    $region53: #{classifier_forward.1} parent=48 // loop_body
      %v53 = vld [vmem:[%s51] sm:%s44]
      %54 = vst [vmem:[%s52] sm:%s44] %v53
    $region54: #{classifier_forward.1} parent=48 // loop_footer
      %s50 = sadd.s32 1, %s46
    $region55: #{classifier_forward.1} parent=48 // loop_footer_branch
      %45 = sbr.rel target = $region51
    $region56: #{classifier_forward.1} parent=48 // loop_exit
      _
  $region49: #{classifier_forward.1} parent=0 // pred_fallthru
    _
  // Predicated region
  $region72: #{classifier_forward.1} parent=0 // pred_check
    _
  $region73: #{classifier_forward.1} parent=0 // pred_check_branch
    %586 = sbr.rel (0) target = $region75
  $region74: #{classifier_forward.1} parent=0 // pred_region
    %587 = vsyncadd [#allocation3], 32768
  $region75: #{classifier_forward.1} parent=0 // pred_fallthru
    _
  %v588 = vld [vmem:[%s0] sm:$0xff]
  %v589 = vld [vmem:[%s0 + $0x8] sm:$0xff]
  %v590 = vld [vmem:[%s0 + $0x10] sm:$0xff]
  %v591 = vld [vmem:[%s0 + $0x18] sm:$0xff]
  %v592 = vld [vmem:[%s0 + $0x20] sm:$0xff]
  %v593 = vld [vmem:[%s0 + $0x28] sm:$0xff]
  %v594 = vld [vmem:[%s0 + $0x30] sm:$0xff]
  %v595 = vld [vmem:[%s0 + $0x38] sm:$0xff]
  %v596 = vld [vmem:[%s0 + $0x40] sm:$0xff]
  %v597 = vld [vmem:[%s0 + $0x48] sm:$0xff]
  %v598 = vld [vmem:[%s0 + $0x50] sm:$0xff]
  %v599 = vld [vmem:[%s0 + $0x58] sm:$0xff]
  %v600 = vld [vmem:[%s0 + $0x60] sm:$0xff]
  %v601 = vld [vmem:[%s0 + $0x68] sm:$0xff]
  %v602 = vld [vmem:[%s0 + $0x70] sm:$0xff]
  %v603 = vld [vmem:[%s0 + $0x78] sm:$0xff]
  %v604 = vld [vmem:[%s0 + $0x80] sm:$0xff]
  %v605 = vld [vmem:[%s0 + $0x88] sm:$0xff]
  %v606 = vld [vmem:[%s0 + $0x90] sm:$0xff]
  %v607 = vld [vmem:[%s0 + $0x98] sm:$0xff]
  %v608 = vld [vmem:[%s0 + $0xa0] sm:$0xff]
  %v609 = vld [vmem:[%s0 + $0xa8] sm:$0xff]
  %v610 = vld [vmem:[%s0 + $0xb0] sm:$0xff]
  %v611 = vld [vmem:[%s0 + $0xb8] sm:$0xff]
  %v612 = vld [vmem:[%s0 + $0xc0] sm:$0xff]
  %v613 = vld [vmem:[%s0 + $0xc8] sm:$0xff]
  %v614 = vld [vmem:[%s0 + $0xd0] sm:$0xff]
  %v615 = vld [vmem:[%s0 + $0xd8] sm:$0xff]
  %v616 = vld [vmem:[%s0 + $0xe0] sm:$0xff]
  %v617 = vld [vmem:[%s0 + $0xe8] sm:$0xff]
  %v618 = vld [vmem:[%s0 + $0xf0] sm:$0xff]
  %v619 = vld [vmem:[%s0 + $0xf8] sm:$0xff]
  %v620 = vld [vmem:[%s0 + $0x100] sm:$0xff]
  %v621 = vld [vmem:[%s0 + $0x108] sm:$0xff]
  %v622 = vld [vmem:[%s0 + $0x110] sm:$0xff]
  %v623 = vld [vmem:[%s0 + $0x118] sm:$0xff]
  %v624 = vld [vmem:[%s0 + $0x120] sm:$0xff]
  %v625 = vld [vmem:[%s0 + $0x128] sm:$0xff]
  %v626 = vld [vmem:[%s0 + $0x130] sm:$0xff]
  %v627 = vld [vmem:[%s0 + $0x138] sm:$0xff]
  %v628 = vld [vmem:[%s0 + $0x140] sm:$0xff]
  %v629 = vld [vmem:[%s0 + $0x148] sm:$0xff]
  %v630 = vld [vmem:[%s0 + $0x150] sm:$0xff]
  %v631 = vld [vmem:[%s0 + $0x158] sm:$0xff]
  %v632 = vld [vmem:[%s0 + $0x160] sm:$0xff]
  %v633 = vld [vmem:[%s0 + $0x168] sm:$0xff]
  %v634 = vld [vmem:[%s0 + $0x170] sm:$0xff]
  %v635 = vld [vmem:[%s0 + $0x178] sm:$0xff]
  %v636 = vld [vmem:[%s0 + $0x180] sm:$0xff]
  %v637 = vld [vmem:[%s0 + $0x188] sm:$0xff]
  %v638 = vld [vmem:[%s0 + $0x190] sm:$0xff]
  %v639 = vld [vmem:[%s0 + $0x198] sm:$0xff]
  %v640 = vld [vmem:[%s0 + $0x1a0] sm:$0xff]
  %v641 = vld [vmem:[%s0 + $0x1a8] sm:$0xff]
  %v642 = vld [vmem:[%s0 + $0x1b0] sm:$0xff]
  %v643 = vld [vmem:[%s0 + $0x1b8] sm:$0xff]
  %v644 = vld [vmem:[%s0 + $0x1c0] sm:$0xff]
  %v645 = vld [vmem:[%s0 + $0x1c8] sm:$0xff]
  %v646 = vld [vmem:[%s0 + $0x1d0] sm:$0xff]
  %v647 = vld [vmem:[%s0 + $0x1d8] sm:$0xff]
  %v648 = vld [vmem:[%s0 + $0x1e0] sm:$0xff]
  %v649 = vld [vmem:[%s0 + $0x1e8] sm:$0xff]
  %v650 = vld [vmem:[%s0 + $0x1f0] sm:$0xff]
  %v651 = vld [vmem:[%s0 + $0x1f8] sm:$0xff]
  %v652 = vld [vmem:[%s0 + $0x200] sm:$0xff]
  %v653 = vld [vmem:[%s0 + $0x208] sm:$0xff]
  %v654 = vld [vmem:[%s0 + $0x210] sm:$0xff]
  %v655 = vld [vmem:[%s0 + $0x218] sm:$0xff]
  %v656 = vld [vmem:[%s0 + $0x220] sm:$0xff]
  %v657 = vld [vmem:[%s0 + $0x228] sm:$0xff]
  %v658 = vld [vmem:[%s0 + $0x230] sm:$0xff]
  %v659 = vld [vmem:[%s0 + $0x238] sm:$0xff]
  %v660 = vld [vmem:[%s0 + $0x240] sm:$0xff]
  %v661 = vld [vmem:[%s0 + $0x248] sm:$0xff]
  %v662 = vld [vmem:[%s0 + $0x250] sm:$0xff]
  %v663 = vld [vmem:[%s0 + $0x258] sm:$0xff]
  %v664 = vld [vmem:[%s0 + $0x260] sm:$0xff]
  %v665 = vld [vmem:[%s0 + $0x268] sm:$0xff]
  %v666 = vld [vmem:[%s0 + $0x270] sm:$0xff]
  %v667 = vld [vmem:[%s0 + $0x278] sm:$0xff]
  %v668 = vld [vmem:[%s0 + $0x280] sm:$0xff]
  %v669 = vld [vmem:[%s0 + $0x288] sm:$0xff]
  %v670 = vld [vmem:[%s0 + $0x290] sm:$0xff]
  %v671 = vld [vmem:[%s0 + $0x298] sm:$0xff]
  %v672 = vld [vmem:[%s0 + $0x2a0] sm:$0xff]
  %v673 = vld [vmem:[%s0 + $0x2a8] sm:$0xff]
  %v674 = vld [vmem:[%s0 + $0x2b0] sm:$0xff]
  %v675 = vld [vmem:[%s0 + $0x2b8] sm:$0xff]
  %v676 = vld [vmem:[%s0 + $0x2c0] sm:$0xff]
  %v677 = vld [vmem:[%s0 + $0x2c8] sm:$0xff]
  %v678 = vld [vmem:[%s0 + $0x2d0] sm:$0xff]
  %v679 = vld [vmem:[%s0 + $0x2d8] sm:$0xff]
  %v680 = vld [vmem:[%s0 + $0x2e0] sm:$0xff]
  %v681 = vld [vmem:[%s0 + $0x2e8] sm:$0xff]
  %v682 = vld [vmem:[%s0 + $0x2f0] sm:$0xff]
  %v683 = vld [vmem:[%s0 + $0x2f8] sm:$0xff]
  %v684 = vld [vmem:[%s0 + $0x300] sm:$0xff]
  %v685 = vld [vmem:[%s0 + $0x308] sm:$0xff]
  %v686 = vld [vmem:[%s0 + $0x310] sm:$0xff]
  %v687 = vld [vmem:[%s0 + $0x318] sm:$0xff]
  %v688 = vld [vmem:[%s0 + $0x320] sm:$0xff]
  %v689 = vld [vmem:[%s0 + $0x328] sm:$0xff]
  %v690 = vld [vmem:[%s0 + $0x330] sm:$0xff]
  %v691 = vld [vmem:[%s0 + $0x338] sm:$0xff]
  %v692 = vld [vmem:[%s0 + $0x340] sm:$0xff]
  %v693 = vld [vmem:[%s0 + $0x348] sm:$0xff]
  %v694 = vld [vmem:[%s0 + $0x350] sm:$0xff]
  %v695 = vld [vmem:[%s0 + $0x358] sm:$0xff]
  %v696 = vld [vmem:[%s0 + $0x360] sm:$0xff]
  %v697 = vld [vmem:[%s0 + $0x368] sm:$0xff]
  %v698 = vld [vmem:[%s0 + $0x370] sm:$0xff]
  %v699 = vld [vmem:[%s0 + $0x378] sm:$0xff]
  %v700 = vld [vmem:[%s0 + $0x380] sm:$0xff]
  %v701 = vld [vmem:[%s0 + $0x388] sm:$0xff]
  %v702 = vld [vmem:[%s0 + $0x390] sm:$0xff]
  %v703 = vld [vmem:[%s0 + $0x398] sm:$0xff]
  %v704 = vld [vmem:[%s0 + $0x3a0] sm:$0xff]
  %v705 = vld [vmem:[%s0 + $0x3a8] sm:$0xff]
  %v706 = vld [vmem:[%s0 + $0x3b0] sm:$0xff]
  %v707 = vld [vmem:[%s0 + $0x3b8] sm:$0xff]
  %v708 = vld [vmem:[%s0 + $0x3c0] sm:$0xff]
  %v709 = vld [vmem:[%s0 + $0x3c8] sm:$0xff]
  %v710 = vld [vmem:[%s0 + $0x3d0] sm:$0xff]
  %v711 = vld [vmem:[%s0 + $0x3d8] sm:$0xff]
  %v712 = vld [vmem:[%s0 + $0x3e0] sm:$0xff]
  %v713 = vld [vmem:[%s0 + $0x3e8] sm:$0xff]
  %v714 = vld [vmem:[%s0 + $0x3f0] sm:$0xff]
  %v715 = vld [vmem:[%s0 + $0x3f8] sm:$0xff]
  %v716 = vld [vmem:[%s0 + $0x400] sm:$0xff]
  %v717 = vld [vmem:[%s0 + $0x408] sm:$0xff]
  %v718 = vld [vmem:[%s0 + $0x410] sm:$0xff]
  %v719 = vld [vmem:[%s0 + $0x418] sm:$0xff]
  %v720 = vld [vmem:[%s0 + $0x420] sm:$0xff]
  %v721 = vld [vmem:[%s0 + $0x428] sm:$0xff]
  %v722 = vld [vmem:[%s0 + $0x430] sm:$0xff]
  %v723 = vld [vmem:[%s0 + $0x438] sm:$0xff]
  %v724 = vld [vmem:[%s0 + $0x440] sm:$0xff]
  %v725 = vld [vmem:[%s0 + $0x448] sm:$0xff]
  %v726 = vld [vmem:[%s0 + $0x450] sm:$0xff]
  %v727 = vld [vmem:[%s0 + $0x458] sm:$0xff]
  %v728 = vld [vmem:[%s0 + $0x460] sm:$0xff]
  %v729 = vld [vmem:[%s0 + $0x468] sm:$0xff]
  %v730 = vld [vmem:[%s0 + $0x470] sm:$0xff]
  %v731 = vld [vmem:[%s0 + $0x478] sm:$0xff]
  %v732 = vadd.f32 %v588, %v592
  %v733 = vadd.f32 %v732, %v596
  %v734 = vadd.f32 %v733, %v600
  %v735 = vadd.f32 %v734, %v604
  %v736 = vadd.f32 %v735, %v608
  %v737 = vadd.f32 %v736, %v612
  %v738 = vadd.f32 %v737, %v616
  %v739 = vadd.f32 %v738, %v620
  %v740 = vadd.f32 %v739, %v624
  %v741 = vadd.f32 %v740, %v628
  %v742 = vadd.f32 %v741, %v632
  %v743 = vadd.f32 %v742, %v636
  %v744 = vadd.f32 %v743, %v640
  %v745 = vadd.f32 %v744, %v644
  %v746 = vadd.f32 %v745, %v648
  %v747 = vadd.f32 %v746, %v652
  %v748 = vadd.f32 %v747, %v656
  %v749 = vadd.f32 %v748, %v660
  %v750 = vadd.f32 %v749, %v664
  %v751 = vadd.f32 %v750, %v668
  %v752 = vadd.f32 %v751, %v672
  %v753 = vadd.f32 %v752, %v676
  %v754 = vadd.f32 %v753, %v680
  %v755 = vadd.f32 %v754, %v684
  %v756 = vadd.f32 %v755, %v688
  %v757 = vadd.f32 %v756, %v692
  %v758 = vadd.f32 %v757, %v696
  %v759 = vadd.f32 %v758, %v700
  %v760 = vadd.f32 %v759, %v704
  %v761 = vadd.f32 %v760, %v708
  %v762 = vadd.f32 %v761, %v712
  %v763 = vadd.f32 %v762, %v716
  %v764 = vadd.f32 %v763, %v720
  %v765 = vadd.f32 %v764, %v724
  %v766 = vadd.f32 %v765, %v728
  %v767 = vadd.f32 %v589, %v593
  %v768 = vadd.f32 %v767, %v597
  %v769 = vadd.f32 %v768, %v601
  %v770 = vadd.f32 %v769, %v605
  %v771 = vadd.f32 %v770, %v609
  %v772 = vadd.f32 %v771, %v613
  %v773 = vadd.f32 %v772, %v617
  %v774 = vadd.f32 %v773, %v621
  %v775 = vadd.f32 %v774, %v625
  %v776 = vadd.f32 %v775, %v629
  %v777 = vadd.f32 %v776, %v633
  %v778 = vadd.f32 %v777, %v637
  %v779 = vadd.f32 %v778, %v641
  %v780 = vadd.f32 %v779, %v645
  %v781 = vadd.f32 %v780, %v649
  %v782 = vadd.f32 %v781, %v653
  %v783 = vadd.f32 %v782, %v657
  %v784 = vadd.f32 %v783, %v661
  %v785 = vadd.f32 %v784, %v665
  %v786 = vadd.f32 %v785, %v669
  %v787 = vadd.f32 %v786, %v673
  %v788 = vadd.f32 %v787, %v677
  %v789 = vadd.f32 %v788, %v681
  %v790 = vadd.f32 %v789, %v685
  %v791 = vadd.f32 %v790, %v689
  %v792 = vadd.f32 %v791, %v693
  %v793 = vadd.f32 %v792, %v697
  %v794 = vadd.f32 %v793, %v701
  %v795 = vadd.f32 %v794, %v705
  %v796 = vadd.f32 %v795, %v709
  %v797 = vadd.f32 %v796, %v713
  %v798 = vadd.f32 %v797, %v717
  %v799 = vadd.f32 %v798, %v721
  %v800 = vadd.f32 %v799, %v725
  %v801 = vadd.f32 %v800, %v729
  %v802 = vadd.f32 %v590, %v594
  %v803 = vadd.f32 %v802, %v598
  %v804 = vadd.f32 %v803, %v602
  %v805 = vadd.f32 %v804, %v606
  %v806 = vadd.f32 %v805, %v610
  %v807 = vadd.f32 %v806, %v614
  %v808 = vadd.f32 %v807, %v618
  %v809 = vadd.f32 %v808, %v622
  %v810 = vadd.f32 %v809, %v626
  %v811 = vadd.f32 %v810, %v630
  %v812 = vadd.f32 %v811, %v634
  %v813 = vadd.f32 %v812, %v638
  %v814 = vadd.f32 %v813, %v642
  %v815 = vadd.f32 %v814, %v646
  %v816 = vadd.f32 %v815, %v650
  %v817 = vadd.f32 %v816, %v654
  %v818 = vadd.f32 %v817, %v658
  %v819 = vadd.f32 %v818, %v662
  %v820 = vadd.f32 %v819, %v666
  %v821 = vadd.f32 %v820, %v670
  %v822 = vadd.f32 %v821, %v674
  %v823 = vadd.f32 %v822, %v678
  %v824 = vadd.f32 %v823, %v682
  %v825 = vadd.f32 %v824, %v686
  %v826 = vadd.f32 %v825, %v690
  %v827 = vadd.f32 %v826, %v694
  %v828 = vadd.f32 %v827, %v698
  %v829 = vadd.f32 %v828, %v702
  %v830 = vadd.f32 %v829, %v706
  %v831 = vadd.f32 %v830, %v710
  %v832 = vadd.f32 %v831, %v714
  %v833 = vadd.f32 %v832, %v718
  %v834 = vadd.f32 %v833, %v722
  %v835 = vadd.f32 %v834, %v726
  %v836 = vadd.f32 %v835, %v730
  %v837 = vadd.f32 %v591, %v595
  %v838 = vadd.f32 %v837, %v599
  %v839 = vadd.f32 %v838, %v603
  %v840 = vadd.f32 %v839, %v607
  %v841 = vadd.f32 %v840, %v611
  %v842 = vadd.f32 %v841, %v615
  %v843 = vadd.f32 %v842, %v619
  %v844 = vadd.f32 %v843, %v623
  %v845 = vadd.f32 %v844, %v627
  %v846 = vadd.f32 %v845, %v631
  %v847 = vadd.f32 %v846, %v635
  %v848 = vadd.f32 %v847, %v639
  %v849 = vadd.f32 %v848, %v643
  %v850 = vadd.f32 %v849, %v647
  %v851 = vadd.f32 %v850, %v651
  %v852 = vadd.f32 %v851, %v655
  %v853 = vadd.f32 %v852, %v659
  %v854 = vadd.f32 %v853, %v663
  %v855 = vadd.f32 %v854, %v667
  %v856 = vadd.f32 %v855, %v671
  %v857 = vadd.f32 %v856, %v675
  %v858 = vadd.f32 %v857, %v679
  %v859 = vadd.f32 %v858, %v683
  %v860 = vadd.f32 %v859, %v687
  %v861 = vadd.f32 %v860, %v691
  %v862 = vadd.f32 %v861, %v695
  %v863 = vadd.f32 %v862, %v699
  %v864 = vadd.f32 %v863, %v703
  %v865 = vadd.f32 %v864, %v707
  %v866 = vadd.f32 %v865, %v711
  %v867 = vadd.f32 %v866, %v715
  %v868 = vadd.f32 %v867, %v719
  %v869 = vadd.f32 %v868, %v723
  %v870 = vadd.f32 %v869, %v727
  %v871 = vadd.f32 %v870, %v731
  %v872 = vrcp.pop 36.0
  %v873 = vmul.f32 %v766, %v872
  %v874 = vmul.f32 %v801, %v872
  %v875 = vmul.f32 %v836, %v872
  %v876 = vmul.f32 %v871, %v872
  %v877 = vmax.f32 %v588, %v592
  %v878 = vmax.f32 %v877, %v596
  %v879 = vmax.f32 %v878, %v600
  %v880 = vmax.f32 %v879, %v604
  %v881 = vmax.f32 %v880, %v608
  %v882 = vmax.f32 %v881, %v612
  %v883 = vmax.f32 %v882, %v616
  %v884 = vmax.f32 %v883, %v620
  %v885 = vmax.f32 %v884, %v624
  %v886 = vmax.f32 %v885, %v628
  %v887 = vmax.f32 %v886, %v632
  %v888 = vmax.f32 %v887, %v636
  %v889 = vmax.f32 %v888, %v640
  %v890 = vmax.f32 %v889, %v644
  %v891 = vmax.f32 %v890, %v648
  %v892 = vmax.f32 %v891, %v652
  %v893 = vmax.f32 %v892, %v656
  %v894 = vmax.f32 %v893, %v660
  %v895 = vmax.f32 %v894, %v664
  %v896 = vmax.f32 %v895, %v668
  %v897 = vmax.f32 %v896, %v672
  %v898 = vmax.f32 %v897, %v676
  %v899 = vmax.f32 %v898, %v680
  %v900 = vmax.f32 %v899, %v684
  %v901 = vmax.f32 %v900, %v688
  %v902 = vmax.f32 %v901, %v692
  %v903 = vmax.f32 %v902, %v696
  %v904 = vmax.f32 %v903, %v700
  %v905 = vmax.f32 %v904, %v704
  %v906 = vmax.f32 %v905, %v708
  %v907 = vmax.f32 %v906, %v712
  %v908 = vmax.f32 %v907, %v716
  %v909 = vmax.f32 %v908, %v720
  %v910 = vmax.f32 %v909, %v724
  %v911 = vmax.f32 %v910, %v728
  %v912 = vmax.f32 %v589, %v593
  %v913 = vmax.f32 %v912, %v597
  %v914 = vmax.f32 %v913, %v601
  %v915 = vmax.f32 %v914, %v605
  %v916 = vmax.f32 %v915, %v609
  %v917 = vmax.f32 %v916, %v613
  %v918 = vmax.f32 %v917, %v617
  %v919 = vmax.f32 %v918, %v621
  %v920 = vmax.f32 %v919, %v625
  %v921 = vmax.f32 %v920, %v629
  %v922 = vmax.f32 %v921, %v633
  %v923 = vmax.f32 %v922, %v637
  %v924 = vmax.f32 %v923, %v641
  %v925 = vmax.f32 %v924, %v645
  %v926 = vmax.f32 %v925, %v649
  %v927 = vmax.f32 %v926, %v653
  %v928 = vmax.f32 %v927, %v657
  %v929 = vmax.f32 %v928, %v661
  %v930 = vmax.f32 %v929, %v665
  %v931 = vmax.f32 %v930, %v669
  %v932 = vmax.f32 %v931, %v673
  %v933 = vmax.f32 %v932, %v677
  %v934 = vmax.f32 %v933, %v681
  %v935 = vmax.f32 %v934, %v685
  %v936 = vmax.f32 %v935, %v689
  %v937 = vmax.f32 %v936, %v693
  %v938 = vmax.f32 %v937, %v697
  %v939 = vmax.f32 %v938, %v701
  %v940 = vmax.f32 %v939, %v705
  %v941 = vmax.f32 %v940, %v709
  %v942 = vmax.f32 %v941, %v713
  %v943 = vmax.f32 %v942, %v717
  %v944 = vmax.f32 %v943, %v721
  %v945 = vmax.f32 %v944, %v725
  %v946 = vmax.f32 %v945, %v729
  %v947 = vmax.f32 %v590, %v594
  %v948 = vmax.f32 %v947, %v598
  %v949 = vmax.f32 %v948, %v602
  %v950 = vmax.f32 %v949, %v606
  %v951 = vmax.f32 %v950, %v610
  %v952 = vmax.f32 %v951, %v614
  %v953 = vmax.f32 %v952, %v618
  %v954 = vmax.f32 %v953, %v622
  %v955 = vmax.f32 %v954, %v626
  %v956 = vmax.f32 %v955, %v630
  %v957 = vmax.f32 %v956, %v634
  %v958 = vmax.f32 %v957, %v638
  %v959 = vmax.f32 %v958, %v642
  %v960 = vmax.f32 %v959, %v646
  %v961 = vmax.f32 %v960, %v650
  %v962 = vmax.f32 %v961, %v654
  %v963 = vmax.f32 %v962, %v658
  %v964 = vmax.f32 %v963, %v662
  %v965 = vmax.f32 %v964, %v666
  %v966 = vmax.f32 %v965, %v670
  %v967 = vmax.f32 %v966, %v674
  %v968 = vmax.f32 %v967, %v678
  %v969 = vmax.f32 %v968, %v682
  %v970 = vmax.f32 %v969, %v686
  %v971 = vmax.f32 %v970, %v690
  %v972 = vmax.f32 %v971, %v694
  %v973 = vmax.f32 %v972, %v698
  %v974 = vmax.f32 %v973, %v702
  %v975 = vmax.f32 %v974, %v706
  %v976 = vmax.f32 %v975, %v710
  %v977 = vmax.f32 %v976, %v714
  %v978 = vmax.f32 %v977, %v718
  %v979 = vmax.f32 %v978, %v722
  %v980 = vmax.f32 %v979, %v726
  %v981 = vmax.f32 %v980, %v730
  %v982 = vmax.f32 %v591, %v595
  %v983 = vmax.f32 %v982, %v599
  %v984 = vmax.f32 %v983, %v603
  %v985 = vmax.f32 %v984, %v607
  %v986 = vmax.f32 %v985, %v611
  %v987 = vmax.f32 %v986, %v615
  %v988 = vmax.f32 %v987, %v619
  %v989 = vmax.f32 %v988, %v623
  %v990 = vmax.f32 %v989, %v627
  %v991 = vmax.f32 %v990, %v631
  %v992 = vmax.f32 %v991, %v635
  %v993 = vmax.f32 %v992, %v639
  %v994 = vmax.f32 %v993, %v643
  %v995 = vmax.f32 %v994, %v647
  %v996 = vmax.f32 %v995, %v651
  %v997 = vmax.f32 %v996, %v655
  %v998 = vmax.f32 %v997, %v659
  %v999 = vmax.f32 %v998, %v663
  %v1000 = vmax.f32 %v999, %v667
  %v1001 = vmax.f32 %v1000, %v671
  %v1002 = vmax.f32 %v1001, %v675
  %v1003 = vmax.f32 %v1002, %v679
  %v1004 = vmax.f32 %v1003, %v683
  %v1005 = vmax.f32 %v1004, %v687
  %v1006 = vmax.f32 %v1005, %v691
  %v1007 = vmax.f32 %v1006, %v695
  %v1008 = vmax.f32 %v1007, %v699
  %v1009 = vmax.f32 %v1008, %v703
  %v1010 = vmax.f32 %v1009, %v707
  %v1011 = vmax.f32 %v1010, %v711
  %v1012 = vmax.f32 %v1011, %v715
  %v1013 = vmax.f32 %v1012, %v719
  %v1014 = vmax.f32 %v1013, %v723
  %v1015 = vmax.f32 %v1014, %v727
  %v1016 = vmax.f32 %v1015, %v731
  %v1017 = vld [vmem:[%s1] sm:$0xff]
  %v1018 = vld [vmem:[%s1 + $0x8] sm:$0xff]
  %v1019 = vld [vmem:[%s1 + $0x10] sm:$0xff]
  %v1020 = vld [vmem:[%s1 + $0x18] sm:$0xff]
  %v1021 = vld [vmem:[%s1 + $0x20] sm:$0xff]
  %v1022 = vld [vmem:[%s1 + $0x28] sm:$0xff]
  %v1023 = vld [vmem:[%s1 + $0x30] sm:$0xff]
  %v1024 = vld [vmem:[%s1 + $0x38] sm:$0xff]
  %v1025 = vld [vmem:[%s1 + $0x40] sm:$0xff]
  %v1026 = vld [vmem:[%s1 + $0x48] sm:$0xff]
  %v1027 = vld [vmem:[%s1 + $0x50] sm:$0xff]
  %v1028 = vld [vmem:[%s1 + $0x58] sm:$0xff]
  %v1029 = vld [vmem:[%s1 + $0x60] sm:$0xff]
  %v1030 = vld [vmem:[%s1 + $0x68] sm:$0xff]
  %v1031 = vld [vmem:[%s1 + $0x70] sm:$0xff]
  %v1032 = vld [vmem:[%s1 + $0x78] sm:$0xff]
  %v1033 = vld [vmem:[%s1 + $0x80] sm:$0xff]
  %v1034 = vld [vmem:[%s1 + $0x88] sm:$0xff]
  %v1035 = vld [vmem:[%s1 + $0x90] sm:$0xff]
  %v1036 = vld [vmem:[%s1 + $0x98] sm:$0xff]
  %v1037 = vld [vmem:[%s1 + $0xa0] sm:$0xff]
  %v1038 = vld [vmem:[%s1 + $0xa8] sm:$0xff]
  %v1039 = vld [vmem:[%s1 + $0xb0] sm:$0xff]
  %v1040 = vld [vmem:[%s1 + $0xb8] sm:$0xff]
  %v1041 = vld [vmem:[%s1 + $0xc0] sm:$0xff]
  %v1042 = vld [vmem:[%s1 + $0xc8] sm:$0xff]
  %v1043 = vld [vmem:[%s1 + $0xd0] sm:$0xff]
  %v1044 = vld [vmem:[%s1 + $0xd8] sm:$0xff]
  %v1045 = vld [vmem:[%s1 + $0xe0] sm:$0xff]
  %v1046 = vld [vmem:[%s1 + $0xe8] sm:$0xff]
  %v1047 = vld [vmem:[%s1 + $0xf0] sm:$0xff]
  %v1048 = vld [vmem:[%s1 + $0xf8] sm:$0xff]
  %v1049 = vld [vmem:[%s1 + $0x100] sm:$0xff]
  %v1050 = vld [vmem:[%s1 + $0x108] sm:$0xff]
  %v1051 = vld [vmem:[%s1 + $0x110] sm:$0xff]
  %v1052 = vld [vmem:[%s1 + $0x118] sm:$0xff]
  %v1053 = vld [vmem:[%s1 + $0x120] sm:$0xff]
  %v1054 = vld [vmem:[%s1 + $0x128] sm:$0xff]
  %v1055 = vld [vmem:[%s1 + $0x130] sm:$0xff]
  %v1056 = vld [vmem:[%s1 + $0x138] sm:$0xff]
  %v1057 = vld [vmem:[%s1 + $0x140] sm:$0xff]
  %v1058 = vld [vmem:[%s1 + $0x148] sm:$0xff]
  %v1059 = vld [vmem:[%s1 + $0x150] sm:$0xff]
  %v1060 = vld [vmem:[%s1 + $0x158] sm:$0xff]
  %v1061 = vld [vmem:[%s1 + $0x160] sm:$0xff]
  %v1062 = vld [vmem:[%s1 + $0x168] sm:$0xff]
  %v1063 = vld [vmem:[%s1 + $0x170] sm:$0xff]
  %v1064 = vld [vmem:[%s1 + $0x178] sm:$0xff]
  %v1065 = vld [vmem:[%s1 + $0x180] sm:$0xff]
  %v1066 = vld [vmem:[%s1 + $0x188] sm:$0xff]
  %v1067 = vld [vmem:[%s1 + $0x190] sm:$0xff]
  %v1068 = vld [vmem:[%s1 + $0x198] sm:$0xff]
  %v1069 = vld [vmem:[%s1 + $0x1a0] sm:$0xff]
  %v1070 = vld [vmem:[%s1 + $0x1a8] sm:$0xff]
  %v1071 = vld [vmem:[%s1 + $0x1b0] sm:$0xff]
  %v1072 = vld [vmem:[%s1 + $0x1b8] sm:$0xff]
  %v1073 = vld [vmem:[%s1 + $0x1c0] sm:$0xff]
  %v1074 = vld [vmem:[%s1 + $0x1c8] sm:$0xff]
  %v1075 = vld [vmem:[%s1 + $0x1d0] sm:$0xff]
  %v1076 = vld [vmem:[%s1 + $0x1d8] sm:$0xff]
  %v1077 = vld [vmem:[%s1 + $0x1e0] sm:$0xff]
  %v1078 = vld [vmem:[%s1 + $0x1e8] sm:$0xff]
  %v1079 = vld [vmem:[%s1 + $0x1f0] sm:$0xff]
  %v1080 = vld [vmem:[%s1 + $0x1f8] sm:$0xff]
  %1081 = vmatprep.subr.mxu0 0.0
  %1082 = vmatpush1.msra.mxu0 %v1017
  %1083 = vmatprep.subr.mxu0 0.0
  %1084 = vmatpush1.msra.mxu0 %v1018
  %1085 = vmatprep.subr.mxu0 0.0
  %1086 = vmatpush1.msra.mxu0 %v1019
  %1087 = vmatprep.subr.mxu0 0.0
  %1088 = vmatpush1.msra.mxu0 %v1020
  %1089 = vmatprep.subr.mxu0 0.0
  %1090 = vmatpush1.msra.mxu0 %v1021
  %1091 = vmatprep.subr.mxu0 0.0
  %1092 = vmatpush1.msra.mxu0 %v1022
  %1093 = vmatprep.subr.mxu0 0.0
  %1094 = vmatpush1.msra.mxu0 %v1023
  %1095 = vmatprep.subr.mxu0 0.0
  %1096 = vmatpush1.msra.mxu0 %v1024
  %1097 = vmatprep.subr.mxu0 0.0
  %1098 = vmatpush1.msra.mxu0 %v1025
  %1099 = vmatprep.subr.mxu0 0.0
  %1100 = vmatpush1.msra.mxu0 %v1026
  %1101 = vmatprep.subr.mxu0 0.0
  %1102 = vmatpush1.msra.mxu0 %v1027
  %1103 = vmatprep.subr.mxu0 0.0
  %1104 = vmatpush1.msra.mxu0 %v1028
  %1105 = vmatprep.subr.mxu0 0.0
  %1106 = vmatpush1.msra.mxu0 %v1029
  %1107 = vmatprep.subr.mxu0 0.0
  %1108 = vmatpush1.msra.mxu0 %v1030
  %1109 = vmatprep.subr.mxu0 0.0
  %1110 = vmatpush1.msra.mxu0 %v1031
  %1111 = vmatprep.subr.mxu0 0.0
  %1112 = vmatpush1.msra.mxu0 %v1032
  %1113 = vmatprep.subr.mxu0 0.0
  %1114 = vmatpush1.msra.mxu0 %v1033
  %1115 = vmatprep.subr.mxu0 0.0
  %1116 = vmatpush1.msra.mxu0 %v1034
  %1117 = vmatprep.subr.mxu0 0.0
  %1118 = vmatpush1.msra.mxu0 %v1035
  %1119 = vmatprep.subr.mxu0 0.0
  %1120 = vmatpush1.msra.mxu0 %v1036
  %1121 = vmatprep.subr.mxu0 0.0
  %1122 = vmatpush1.msra.mxu0 %v1037
  %1123 = vmatprep.subr.mxu0 0.0
  %1124 = vmatpush1.msra.mxu0 %v1038
  %1125 = vmatprep.subr.mxu0 0.0
  %1126 = vmatpush1.msra.mxu0 %v1039
  %1127 = vmatprep.subr.mxu0 0.0
  %1128 = vmatpush1.msra.mxu0 %v1040
  %1129 = vmatprep.subr.mxu0 0.0
  %1130 = vmatpush1.msra.mxu0 %v1041
  %1131 = vmatprep.subr.mxu0 0.0
  %1132 = vmatpush1.msra.mxu0 %v1042
  %1133 = vmatprep.subr.mxu0 0.0
  %1134 = vmatpush1.msra.mxu0 %v1043
  %1135 = vmatprep.subr.mxu0 0.0
  %1136 = vmatpush1.msra.mxu0 %v1044
  %1137 = vmatprep.subr.mxu0 0.0
  %1138 = vmatpush1.msra.mxu0 %v1045
  %1139 = vmatprep.subr.mxu0 0.0
  %1140 = vmatpush1.msra.mxu0 %v1046
  %1141 = vmatprep.subr.mxu0 0.0
  %1142 = vmatpush1.msra.mxu0 %v1047
  %1143 = vmatprep.subr.mxu0 0.0
  %1144 = vmatpush1.msra.mxu0 %v1048
  %1145 = vmatprep.mubr.f32.mxu0 %v874
  %1146 = vmatmul.mubr.f32.gmra.mrb[0].mxu0 %v873
  %v1147 = vpop.f32.mrb[0].mxu0
  %v1148 = vadd.f32 0.0, %v1147
  %v1149 = vpop.f32.mrb[0].mxu0
  %1150 = vmatprep.mubr.f32.mxu0 %v946
  %1151 = vmatmul.mubr.f32.gmra.mrb[0].mxu0 %v911
  %v1152 = vpop.f32.mrb[0].mxu0
  %v1153 = vadd.f32 0.0, %v1152
  %v1154 = vpop.f32.mrb[0].mxu0
  %1155 = vdwg.mxu0
  %1156 = vmatprep.subr.mxu0 0.0
  %1157 = vmatpush1.msra.mxu0 %v1049
  %1158 = vmatprep.subr.mxu0 0.0
  %1159 = vmatpush1.msra.mxu0 %v1050
  %1160 = vmatprep.subr.mxu0 0.0
  %1161 = vmatpush1.msra.mxu0 %v1051
  %1162 = vmatprep.subr.mxu0 0.0
  %1163 = vmatpush1.msra.mxu0 %v1052
  %1164 = vmatprep.subr.mxu0 0.0
  %1165 = vmatpush1.msra.mxu0 %v1053
  %1166 = vmatprep.subr.mxu0 0.0
  %1167 = vmatpush1.msra.mxu0 %v1054
  %1168 = vmatprep.subr.mxu0 0.0
  %1169 = vmatpush1.msra.mxu0 %v1055
  %1170 = vmatprep.subr.mxu0 0.0
  %1171 = vmatpush1.msra.mxu0 %v1056
  %1172 = vmatprep.subr.mxu0 0.0
  %1173 = vmatpush1.msra.mxu0 %v1057
  %1174 = vmatprep.subr.mxu0 0.0
  %1175 = vmatpush1.msra.mxu0 %v1058
  %1176 = vmatprep.subr.mxu0 0.0
  %1177 = vmatpush1.msra.mxu0 %v1059
  %1178 = vmatprep.subr.mxu0 0.0
  %1179 = vmatpush1.msra.mxu0 %v1060
  %1180 = vmatprep.subr.mxu0 0.0
  %1181 = vmatpush1.msra.mxu0 %v1061
  %1182 = vmatprep.subr.mxu0 0.0
  %1183 = vmatpush1.msra.mxu0 %v1062
  %1184 = vmatprep.subr.mxu0 0.0
  %1185 = vmatpush1.msra.mxu0 %v1063
  %1186 = vmatprep.subr.mxu0 0.0
  %1187 = vmatpush1.msra.mxu0 %v1064
  %1188 = vmatprep.subr.mxu0 0.0
  %1189 = vmatpush1.msra.mxu0 %v1065
  %1190 = vmatprep.subr.mxu0 0.0
  %1191 = vmatpush1.msra.mxu0 %v1066
  %1192 = vmatprep.subr.mxu0 0.0
  %1193 = vmatpush1.msra.mxu0 %v1067
  %1194 = vmatprep.subr.mxu0 0.0
  %1195 = vmatpush1.msra.mxu0 %v1068
  %1196 = vmatprep.subr.mxu0 0.0
  %1197 = vmatpush1.msra.mxu0 %v1069
  %1198 = vmatprep.subr.mxu0 0.0
  %1199 = vmatpush1.msra.mxu0 %v1070
  %1200 = vmatprep.subr.mxu0 0.0
  %1201 = vmatpush1.msra.mxu0 %v1071
  %1202 = vmatprep.subr.mxu0 0.0
  %1203 = vmatpush1.msra.mxu0 %v1072
  %1204 = vmatprep.subr.mxu0 0.0
  %1205 = vmatpush1.msra.mxu0 %v1073
  %1206 = vmatprep.subr.mxu0 0.0
  %1207 = vmatpush1.msra.mxu0 %v1074
  %1208 = vmatprep.subr.mxu0 0.0
  %1209 = vmatpush1.msra.mxu0 %v1075
  %1210 = vmatprep.subr.mxu0 0.0
  %1211 = vmatpush1.msra.mxu0 %v1076
  %1212 = vmatprep.subr.mxu0 0.0
  %1213 = vmatpush1.msra.mxu0 %v1077
  %1214 = vmatprep.subr.mxu0 0.0
  %1215 = vmatpush1.msra.mxu0 %v1078
  %1216 = vmatprep.subr.mxu0 0.0
  %1217 = vmatpush1.msra.mxu0 %v1079
  %1218 = vmatprep.subr.mxu0 0.0
  %1219 = vmatpush1.msra.mxu0 %v1080
  %1220 = vmatprep.mubr.f32.mxu0 %v876
  %1221 = vmatmul.mubr.f32.gmra.mrb[0].mxu0 %v875
  %v1222 = vpop.f32.mrb[0].mxu0
  %v1223 = vadd.f32 %v1148, %v1222
  %v1224 = vpop.f32.mrb[0].mxu0
  %1225 = vmatprep.mubr.f32.mxu0 %v1016
  %1226 = vmatmul.mubr.f32.gmra.mrb[0].mxu0 %v981
  %v1227 = vpop.f32.mrb[0].mxu0
  %v1228 = vadd.f32 %v1153, %v1227
  %v1229 = vpop.f32.mrb[0].mxu0
  %1230 = vdwg.mxu0
  %v1231 = vmax.f32 %v1223, 0.0
  %v1232 = vmax.f32 %v1228, 0.0
  %v1233 = vld [vmem:[%s2] sm:$0xff]
  %v1234 = vld [vmem:[%s2 + $0x8] sm:$0xff]
  %v1235 = vld [vmem:[%s2 + $0x10] sm:$0xff]
  %v1236 = vld [vmem:[%s2 + $0x18] sm:$0xff]
  %v1237 = vld [vmem:[%s2 + $0x20] sm:$0xff]
  %v1238 = vld [vmem:[%s2 + $0x28] sm:$0xff]
  %v1239 = vld [vmem:[%s2 + $0x30] sm:$0xff]
  %v1240 = vld [vmem:[%s2 + $0x38] sm:$0xff]
  %v1241 = vld [vmem:[%s2 + $0x40] sm:$0xff]
  %v1242 = vld [vmem:[%s2 + $0x48] sm:$0xff]
  %v1243 = vld [vmem:[%s2 + $0x50] sm:$0xff]
  %v1244 = vld [vmem:[%s2 + $0x58] sm:$0xff]
  %v1245 = vld [vmem:[%s2 + $0x60] sm:$0xff]
  %v1246 = vld [vmem:[%s2 + $0x68] sm:$0xff]
  %v1247 = vld [vmem:[%s2 + $0x70] sm:$0xff]
  %v1248 = vld [vmem:[%s2 + $0x78] sm:$0xff]
  %vm1249 = vcmask 261120
  %v1251 = vsel %vm1249, %v1231, 0
  %v1254 = vsel %vm1249, %v1232, 0
  %1256 = vmatprep.subr.mxu0 %v1234
  %1257 = vmatpush1.msra.mxu0 %v1233
  %1258 = vmatprep.subr.mxu0 %v1238
  %1259 = vmatpush1.msra.mxu0 %v1237
  %1260 = vmatprep.subr.mxu0 %v1242
  %1261 = vmatpush1.msra.mxu0 %v1241
  %1262 = vmatprep.subr.mxu0 %v1246
  %1263 = vmatpush1.msra.mxu0 %v1245
  %1264 = vmatprep.subr.mxu0 0.0
  %1265 = vmatpush1.msra.mxu0 0.0
  %1266 = vmatprep.subr.mxu0 0.0
  %1267 = vmatpush1.msra.mxu0 0.0
  %1268 = vmatprep.subr.mxu0 0.0
  %1269 = vmatpush1.msra.mxu0 0.0
  %1270 = vmatprep.subr.mxu0 0.0
  %1271 = vmatpush1.msra.mxu0 0.0
  %1272 = vmatprep.subr.mxu0 0.0
  %1273 = vmatpush1.msra.mxu0 0.0
  %1274 = vmatprep.subr.mxu0 0.0
  %1275 = vmatpush1.msra.mxu0 0.0
  %1276 = vmatprep.subr.mxu0 0.0
  %1277 = vmatpush1.msra.mxu0 0.0
  %1278 = vmatprep.subr.mxu0 0.0
  %1279 = vmatpush1.msra.mxu0 0.0
  %1280 = vmatprep.subr.mxu0 0.0
  %1281 = vmatpush1.msra.mxu0 0.0
  %1282 = vmatprep.subr.mxu0 0.0
  %1283 = vmatpush1.msra.mxu0 0.0
  %1284 = vmatprep.subr.mxu0 0.0
  %1285 = vmatpush1.msra.mxu0 0.0
  %1286 = vmatprep.subr.mxu0 0.0
  %1287 = vmatpush1.msra.mxu0 0.0
  %1288 = vmatprep.subr.mxu0 0.0
  %1289 = vmatpush1.msra.mxu0 0.0
  %1290 = vmatprep.subr.mxu0 0.0
  %1291 = vmatpush1.msra.mxu0 0.0
  %1292 = vmatprep.subr.mxu0 0.0
  %1293 = vmatpush1.msra.mxu0 0.0
  %1294 = vmatprep.subr.mxu0 0.0
  %1295 = vmatpush1.msra.mxu0 0.0
  %1296 = vmatprep.subr.mxu0 0.0
  %1297 = vmatpush1.msra.mxu0 0.0
  %1298 = vmatprep.subr.mxu0 0.0
  %1299 = vmatpush1.msra.mxu0 0.0
  %1300 = vmatprep.subr.mxu0 0.0
  %1301 = vmatpush1.msra.mxu0 0.0
  %1302 = vmatprep.subr.mxu0 0.0
  %1303 = vmatpush1.msra.mxu0 0.0
  %1304 = vmatprep.subr.mxu0 0.0
  %1305 = vmatpush1.msra.mxu0 0.0
  %1306 = vmatprep.subr.mxu0 0.0
  %1307 = vmatpush1.msra.mxu0 0.0
  %1308 = vmatprep.subr.mxu0 0.0
  %1309 = vmatpush1.msra.mxu0 0.0
  %1310 = vmatprep.subr.mxu0 0.0
  %1311 = vmatpush1.msra.mxu0 0.0
  %1312 = vmatprep.subr.mxu0 0.0
  %1313 = vmatpush1.msra.mxu0 0.0
  %1314 = vmatprep.subr.mxu0 0.0
  %1315 = vmatpush1.msra.mxu0 0.0
  %1316 = vmatprep.subr.mxu0 0.0
  %1317 = vmatpush1.msra.mxu0 0.0
  %1318 = vmatprep.subr.mxu0 0.0
  %1319 = vmatpush1.msra.mxu0 0.0
  %1320 = vmatprep.mubr.f32.mxu0 0.0
  %1321 = vmatmul.mubr.f32.gmra.mrb[0].mxu0 %v1251
  %v1322 = vpop.f32.mrb[0].mxu0
  %v1323 = vadd.f32 0.0, %v1322
  %v1324 = vpop.f32.mrb[0].mxu0
  %v1325 = vadd.f32 0.0, %v1324
  %1326 = vmatprep.mubr.f32.mxu0 0.0
  %1327 = vmatmul.mubr.f32.gmra.mrb[0].mxu0 %v1254
  %v1328 = vpop.f32.mrb[0].mxu0
  %v1329 = vadd.f32 0.0, %v1328
  %v1330 = vpop.f32.mrb[0].mxu0
  %v1331 = vadd.f32 0.0, %v1330
  %1332 = vdwg.mxu0
  %1333 = vmatprep.subr.mxu0 %v1236
  %1334 = vmatpush1.msra.mxu0 %v1235
  %1335 = vmatprep.subr.mxu0 %v1240
  %1336 = vmatpush1.msra.mxu0 %v1239
  %1337 = vmatprep.subr.mxu0 %v1244
  %1338 = vmatpush1.msra.mxu0 %v1243
  %1339 = vmatprep.subr.mxu0 %v1248
  %1340 = vmatpush1.msra.mxu0 %v1247
  %1341 = vmatprep.subr.mxu0 0.0
  %1342 = vmatpush1.msra.mxu0 0.0
  %1343 = vmatprep.subr.mxu0 0.0
  %1344 = vmatpush1.msra.mxu0 0.0
  %1345 = vmatprep.subr.mxu0 0.0
  %1346 = vmatpush1.msra.mxu0 0.0
  %1347 = vmatprep.subr.mxu0 0.0
  %1348 = vmatpush1.msra.mxu0 0.0
  %1349 = vmatprep.subr.mxu0 0.0
  %1350 = vmatpush1.msra.mxu0 0.0
  %1351 = vmatprep.subr.mxu0 0.0
  %1352 = vmatpush1.msra.mxu0 0.0
  %1353 = vmatprep.subr.mxu0 0.0
  %1354 = vmatpush1.msra.mxu0 0.0
  %1355 = vmatprep.subr.mxu0 0.0
  %1356 = vmatpush1.msra.mxu0 0.0
  %1357 = vmatprep.subr.mxu0 0.0
  %1358 = vmatpush1.msra.mxu0 0.0
  %1359 = vmatprep.subr.mxu0 0.0
  %1360 = vmatpush1.msra.mxu0 0.0
  %1361 = vmatprep.subr.mxu0 0.0
  %1362 = vmatpush1.msra.mxu0 0.0
  %1363 = vmatprep.subr.mxu0 0.0
  %1364 = vmatpush1.msra.mxu0 0.0
  %1365 = vmatprep.subr.mxu0 0.0
  %1366 = vmatpush1.msra.mxu0 0.0
  %1367 = vmatprep.subr.mxu0 0.0
  %1368 = vmatpush1.msra.mxu0 0.0
  %1369 = vmatprep.subr.mxu0 0.0
  %1370 = vmatpush1.msra.mxu0 0.0
  %1371 = vmatprep.subr.mxu0 0.0
  %1372 = vmatpush1.msra.mxu0 0.0
  %1373 = vmatprep.subr.mxu0 0.0
  %1374 = vmatpush1.msra.mxu0 0.0
  %1375 = vmatprep.subr.mxu0 0.0
  %1376 = vmatpush1.msra.mxu0 0.0
  %1377 = vmatprep.subr.mxu0 0.0
  %1378 = vmatpush1.msra.mxu0 0.0
  %1379 = vmatprep.subr.mxu0 0.0
  %1380 = vmatpush1.msra.mxu0 0.0
  %1381 = vmatprep.subr.mxu0 0.0
  %1382 = vmatpush1.msra.mxu0 0.0
  %1383 = vmatprep.subr.mxu0 0.0
  %1384 = vmatpush1.msra.mxu0 0.0
  %1385 = vmatprep.subr.mxu0 0.0
  %1386 = vmatpush1.msra.mxu0 0.0
  %1387 = vmatprep.subr.mxu0 0.0
  %1388 = vmatpush1.msra.mxu0 0.0
  %1389 = vmatprep.subr.mxu0 0.0
  %1390 = vmatpush1.msra.mxu0 0.0
  %1391 = vmatprep.subr.mxu0 0.0
  %1392 = vmatpush1.msra.mxu0 0.0
  %1393 = vmatprep.subr.mxu0 0.0
  %1394 = vmatpush1.msra.mxu0 0.0
  %1395 = vmatprep.subr.mxu0 0.0
  %1396 = vmatpush1.msra.mxu0 0.0
  %1397 = vmatprep.mubr.f32.mxu0 0.0
  %1398 = vmatmul.mubr.f32.gmra.mrb[0].mxu0 %v1251
  %v1399 = vpop.f32.mrb[0].mxu0
  %v1400 = vadd.f32 0.0, %v1399
  %v1401 = vpop.f32.mrb[0].mxu0
  %v1402 = vadd.f32 0.0, %v1401
  %1403 = vmatprep.mubr.f32.mxu0 0.0
  %1404 = vmatmul.mubr.f32.gmra.mrb[0].mxu0 %v1254
  %v1405 = vpop.f32.mrb[0].mxu0
  %v1406 = vadd.f32 0.0, %v1405
  %v1407 = vpop.f32.mrb[0].mxu0
  %v1408 = vadd.f32 0.0, %v1407
  %1409 = vdwg.mxu0
  %v1410 = vadd.f32 %v1323, %v1329
  %v1411 = vadd.f32 %v1325, %v1331
  %v1412 = vadd.f32 %v1400, %v1406
  %v1413 = vadd.f32 %v1402, %v1408
  %v1414 = vxor.u32 %v1410, 2147483648
  %v1415 = vxor.u32 %v1411, 2147483648
  %v1416 = vxor.u32 %v1412, 2147483648
  %v1417 = vxor.u32 %v1413, 2147483648
  %v1418 = vmul.f32 %v1414, 1.442695
  %v1419 = vpow.pop %v1418
  %v1420 = vmul.f32 %v1415, 1.442695
  %v1421 = vpow.pop %v1420
  %v1422 = vmul.f32 %v1416, 1.442695
  %v1423 = vpow.pop %v1422
  %v1424 = vmul.f32 %v1417, 1.442695
  %v1425 = vpow.pop %v1424
  %v1426 = vadd.f32 %v1419, 1.0
  %v1427 = vadd.f32 %v1421, 1.0
  %v1428 = vadd.f32 %v1423, 1.0
  %v1429 = vadd.f32 %v1425, 1.0
  %v1430 = vrcp.pop %v1426
  %v1431 = vmul.f32 1.0, %v1430
  %v1432 = vrcp.pop %v1427
  %v1433 = vmul.f32 1.0, %v1432
  %v1434 = vrcp.pop %v1428
  %v1435 = vmul.f32 1.0, %v1434
  %v1436 = vrcp.pop %v1429
  %v1437 = vmul.f32 1.0, %v1436
  %v1438 = vmul.f32 %v588, %v1431
  %v1439 = vmul.f32 %v589, %v1433
  %v1440 = vmul.f32 %v590, %v1435
  %v1441 = vmul.f32 %v591, %v1437
  %v1442 = vmul.f32 %v592, %v1431
  %v1443 = vmul.f32 %v593, %v1433
  %v1444 = vmul.f32 %v594, %v1435
  %v1445 = vmul.f32 %v595, %v1437
  %v1446 = vmul.f32 %v596, %v1431
  %v1447 = vmul.f32 %v597, %v1433
  %v1448 = vmul.f32 %v598, %v1435
  %v1449 = vmul.f32 %v599, %v1437
  %v1450 = vmul.f32 %v600, %v1431
  %v1451 = vmul.f32 %v601, %v1433
  %v1452 = vmul.f32 %v602, %v1435
  %v1453 = vmul.f32 %v603, %v1437
  %v1454 = vmul.f32 %v604, %v1431
  %v1455 = vmul.f32 %v605, %v1433
  %v1456 = vmul.f32 %v606, %v1435
  %v1457 = vmul.f32 %v607, %v1437
  %v1458 = vmul.f32 %v608, %v1431
  %v1459 = vmul.f32 %v609, %v1433
  %v1460 = vmul.f32 %v610, %v1435
  %v1461 = vmul.f32 %v611, %v1437
  %v1462 = vmul.f32 %v612, %v1431
  %v1463 = vmul.f32 %v613, %v1433
  %v1464 = vmul.f32 %v614, %v1435
  %v1465 = vmul.f32 %v615, %v1437
  %v1466 = vmul.f32 %v616, %v1431
  %v1467 = vmul.f32 %v617, %v1433
  %v1468 = vmul.f32 %v618, %v1435
  %v1469 = vmul.f32 %v619, %v1437
  %v1470 = vmul.f32 %v620, %v1431
  %v1471 = vmul.f32 %v621, %v1433
  %v1472 = vmul.f32 %v622, %v1435
  %v1473 = vmul.f32 %v623, %v1437
  %v1474 = vmul.f32 %v624, %v1431
  %v1475 = vmul.f32 %v625, %v1433
  %v1476 = vmul.f32 %v626, %v1435
  %v1477 = vmul.f32 %v627, %v1437
  %v1478 = vmul.f32 %v628, %v1431
  %v1479 = vmul.f32 %v629, %v1433
  %v1480 = vmul.f32 %v630, %v1435
  %v1481 = vmul.f32 %v631, %v1437
  %v1482 = vmul.f32 %v632, %v1431
  %v1483 = vmul.f32 %v633, %v1433
  %v1484 = vmul.f32 %v634, %v1435
  %v1485 = vmul.f32 %v635, %v1437
  %v1486 = vmul.f32 %v636, %v1431
  %v1487 = vmul.f32 %v637, %v1433
  %v1488 = vmul.f32 %v638, %v1435
  %v1489 = vmul.f32 %v639, %v1437
  %v1490 = vmul.f32 %v640, %v1431
  %v1491 = vmul.f32 %v641, %v1433
  %v1492 = vmul.f32 %v642, %v1435
  %v1493 = vmul.f32 %v643, %v1437
  %v1494 = vmul.f32 %v644, %v1431
  %v1495 = vmul.f32 %v645, %v1433
  %v1496 = vmul.f32 %v646, %v1435
  %v1497 = vmul.f32 %v647, %v1437
  %v1498 = vmul.f32 %v648, %v1431
  %v1499 = vmul.f32 %v649, %v1433
  %v1500 = vmul.f32 %v650, %v1435
  %v1501 = vmul.f32 %v651, %v1437
  %v1502 = vmul.f32 %v652, %v1431
  %v1503 = vmul.f32 %v653, %v1433
  %v1504 = vmul.f32 %v654, %v1435
  %v1505 = vmul.f32 %v655, %v1437
  %v1506 = vmul.f32 %v656, %v1431
  %v1507 = vmul.f32 %v657, %v1433
  %v1508 = vmul.f32 %v658, %v1435
  %v1509 = vmul.f32 %v659, %v1437
  %v1510 = vmul.f32 %v660, %v1431
  %v1511 = vmul.f32 %v661, %v1433
  %v1512 = vmul.f32 %v662, %v1435
  %v1513 = vmul.f32 %v663, %v1437
  %v1514 = vmul.f32 %v664, %v1431
  %v1515 = vmul.f32 %v665, %v1433
  %v1516 = vmul.f32 %v666, %v1435
  %v1517 = vmul.f32 %v667, %v1437
  %v1518 = vmul.f32 %v668, %v1431
  %v1519 = vmul.f32 %v669, %v1433
  %v1520 = vmul.f32 %v670, %v1435
  %v1521 = vmul.f32 %v671, %v1437
  %v1522 = vmul.f32 %v672, %v1431
  %v1523 = vmul.f32 %v673, %v1433
  %v1524 = vmul.f32 %v674, %v1435
  %v1525 = vmul.f32 %v675, %v1437
  %v1526 = vmul.f32 %v676, %v1431
  %v1527 = vmul.f32 %v677, %v1433
  %v1528 = vmul.f32 %v678, %v1435
  %v1529 = vmul.f32 %v679, %v1437
  %v1530 = vmul.f32 %v680, %v1431
  %v1531 = vmul.f32 %v681, %v1433
  %v1532 = vmul.f32 %v682, %v1435
  %v1533 = vmul.f32 %v683, %v1437
  %v1534 = vmul.f32 %v684, %v1431
  %v1535 = vmul.f32 %v685, %v1433
  %v1536 = vmul.f32 %v686, %v1435
  %v1537 = vmul.f32 %v687, %v1437
  %v1538 = vmul.f32 %v688, %v1431
  %v1539 = vmul.f32 %v689, %v1433
  %v1540 = vmul.f32 %v690, %v1435
  %v1541 = vmul.f32 %v691, %v1437
  %v1542 = vmul.f32 %v692, %v1431
  %v1543 = vmul.f32 %v693, %v1433
  %v1544 = vmul.f32 %v694, %v1435
  %v1545 = vmul.f32 %v695, %v1437
  %v1546 = vmul.f32 %v696, %v1431
  %v1547 = vmul.f32 %v697, %v1433
  %v1548 = vmul.f32 %v698, %v1435
  %v1549 = vmul.f32 %v699, %v1437
  %v1550 = vmul.f32 %v700, %v1431
  %v1551 = vmul.f32 %v701, %v1433
  %v1552 = vmul.f32 %v702, %v1435
  %v1553 = vmul.f32 %v703, %v1437
  %v1554 = vmul.f32 %v704, %v1431
  %v1555 = vmul.f32 %v705, %v1433
  %v1556 = vmul.f32 %v706, %v1435
  %v1557 = vmul.f32 %v707, %v1437
  %v1558 = vmul.f32 %v708, %v1431
  %v1559 = vmul.f32 %v709, %v1433
  %v1560 = vmul.f32 %v710, %v1435
  %v1561 = vmul.f32 %v711, %v1437
  %v1562 = vmul.f32 %v712, %v1431
  %v1563 = vmul.f32 %v713, %v1433
  %v1564 = vmul.f32 %v714, %v1435
  %v1565 = vmul.f32 %v715, %v1437
  %v1566 = vmul.f32 %v716, %v1431
  %v1567 = vmul.f32 %v717, %v1433
  %v1568 = vmul.f32 %v718, %v1435
  %v1569 = vmul.f32 %v719, %v1437
  %v1570 = vmul.f32 %v720, %v1431
  %v1571 = vmul.f32 %v721, %v1433
  %v1572 = vmul.f32 %v722, %v1435
  %v1573 = vmul.f32 %v723, %v1437
  %v1574 = vmul.f32 %v724, %v1431
  %v1575 = vmul.f32 %v725, %v1433
  %v1576 = vmul.f32 %v726, %v1435
  %v1577 = vmul.f32 %v727, %v1437
  %v1578 = vmul.f32 %v728, %v1431
  %v1579 = vmul.f32 %v729, %v1433
  %v1580 = vmul.f32 %v730, %v1435
  %v1581 = vmul.f32 %v731, %v1437
  %v1582 = vadd.f32 %v1438, %v1439
  %v1583 = vadd.f32 %v1582, %v1440
  %v1584 = vadd.f32 %v1583, %v1441
  %1585 = vadd.xlane.f32.xlu0 %v1584
  %v1586 = vpop.xlane.xlu0 %1585
  %v1587 = vadd.f32 %v1442, %v1443
  %v1588 = vadd.f32 %v1587, %v1444
  %v1589 = vadd.f32 %v1588, %v1445
  %1590 = vadd.xlane.f32.xlu0 %v1589
  %v1591 = vpop.xlane.xlu0 %1590
  %v1592 = vadd.f32 %v1446, %v1447
  %v1593 = vadd.f32 %v1592, %v1448
  %v1594 = vadd.f32 %v1593, %v1449
  %1595 = vadd.xlane.f32.xlu0 %v1594
  %v1596 = vpop.xlane.xlu0 %1595
  %v1597 = vadd.f32 %v1450, %v1451
  %v1598 = vadd.f32 %v1597, %v1452
  %v1599 = vadd.f32 %v1598, %v1453
  %1600 = vadd.xlane.f32.xlu0 %v1599
  %v1601 = vpop.xlane.xlu0 %1600
  %v1602 = vadd.f32 %v1454, %v1455
  %v1603 = vadd.f32 %v1602, %v1456
  %v1604 = vadd.f32 %v1603, %v1457
  %1605 = vadd.xlane.f32.xlu0 %v1604
  %v1606 = vpop.xlane.xlu0 %1605
  %v1607 = vadd.f32 %v1458, %v1459
  %v1608 = vadd.f32 %v1607, %v1460
  %v1609 = vadd.f32 %v1608, %v1461
  %1610 = vadd.xlane.f32.xlu0 %v1609
  %v1611 = vpop.xlane.xlu0 %1610
  %v1612 = vadd.f32 %v1462, %v1463
  %v1613 = vadd.f32 %v1612, %v1464
  %v1614 = vadd.f32 %v1613, %v1465
  %1615 = vadd.xlane.f32.xlu0 %v1614
  %v1616 = vpop.xlane.xlu0 %1615
  %v1617 = vadd.f32 %v1466, %v1467
  %v1618 = vadd.f32 %v1617, %v1468
  %v1619 = vadd.f32 %v1618, %v1469
  %1620 = vadd.xlane.f32.xlu0 %v1619
  %v1621 = vpop.xlane.xlu0 %1620
  %v1622 = vadd.f32 %v1470, %v1471
  %v1623 = vadd.f32 %v1622, %v1472
  %v1624 = vadd.f32 %v1623, %v1473
  %1625 = vadd.xlane.f32.xlu0 %v1624
  %v1626 = vpop.xlane.xlu0 %1625
  %v1627 = vadd.f32 %v1474, %v1475
  %v1628 = vadd.f32 %v1627, %v1476
  %v1629 = vadd.f32 %v1628, %v1477
  %1630 = vadd.xlane.f32.xlu0 %v1629
  %v1631 = vpop.xlane.xlu0 %1630
  %v1632 = vadd.f32 %v1478, %v1479
  %v1633 = vadd.f32 %v1632, %v1480
  %v1634 = vadd.f32 %v1633, %v1481
  %1635 = vadd.xlane.f32.xlu0 %v1634
  %v1636 = vpop.xlane.xlu0 %1635
  %v1637 = vadd.f32 %v1482, %v1483
  %v1638 = vadd.f32 %v1637, %v1484
  %v1639 = vadd.f32 %v1638, %v1485
  %1640 = vadd.xlane.f32.xlu0 %v1639
  %v1641 = vpop.xlane.xlu0 %1640
  %v1642 = vadd.f32 %v1486, %v1487
  %v1643 = vadd.f32 %v1642, %v1488
  %v1644 = vadd.f32 %v1643, %v1489
  %1645 = vadd.xlane.f32.xlu0 %v1644
  %v1646 = vpop.xlane.xlu0 %1645
  %v1647 = vadd.f32 %v1490, %v1491
  %v1648 = vadd.f32 %v1647, %v1492
  %v1649 = vadd.f32 %v1648, %v1493
  %1650 = vadd.xlane.f32.xlu0 %v1649
  %v1651 = vpop.xlane.xlu0 %1650
  %v1652 = vadd.f32 %v1494, %v1495
  %v1653 = vadd.f32 %v1652, %v1496
  %v1654 = vadd.f32 %v1653, %v1497
  %1655 = vadd.xlane.f32.xlu0 %v1654
  %v1656 = vpop.xlane.xlu0 %1655
  %v1657 = vadd.f32 %v1498, %v1499
  %v1658 = vadd.f32 %v1657, %v1500
  %v1659 = vadd.f32 %v1658, %v1501
  %1660 = vadd.xlane.f32.xlu0 %v1659
  %v1661 = vpop.xlane.xlu0 %1660
  %v1662 = vadd.f32 %v1502, %v1503
  %v1663 = vadd.f32 %v1662, %v1504
  %v1664 = vadd.f32 %v1663, %v1505
  %1665 = vadd.xlane.f32.xlu0 %v1664
  %v1666 = vpop.xlane.xlu0 %1665
  %v1667 = vadd.f32 %v1506, %v1507
  %v1668 = vadd.f32 %v1667, %v1508
  %v1669 = vadd.f32 %v1668, %v1509
  %1670 = vadd.xlane.f32.xlu0 %v1669
  %v1671 = vpop.xlane.xlu0 %1670
  %v1672 = vadd.f32 %v1510, %v1511
  %v1673 = vadd.f32 %v1672, %v1512
  %v1674 = vadd.f32 %v1673, %v1513
  %1675 = vadd.xlane.f32.xlu0 %v1674
  %v1676 = vpop.xlane.xlu0 %1675
  %v1677 = vadd.f32 %v1514, %v1515
  %v1678 = vadd.f32 %v1677, %v1516
  %v1679 = vadd.f32 %v1678, %v1517
  %1680 = vadd.xlane.f32.xlu0 %v1679
  %v1681 = vpop.xlane.xlu0 %1680
  %v1682 = vadd.f32 %v1518, %v1519
  %v1683 = vadd.f32 %v1682, %v1520
  %v1684 = vadd.f32 %v1683, %v1521
  %1685 = vadd.xlane.f32.xlu0 %v1684
  %v1686 = vpop.xlane.xlu0 %1685
  %v1687 = vadd.f32 %v1522, %v1523
  %v1688 = vadd.f32 %v1687, %v1524
  %v1689 = vadd.f32 %v1688, %v1525
  %1690 = vadd.xlane.f32.xlu0 %v1689
  %v1691 = vpop.xlane.xlu0 %1690
  %v1692 = vadd.f32 %v1526, %v1527
  %v1693 = vadd.f32 %v1692, %v1528
  %v1694 = vadd.f32 %v1693, %v1529
  %1695 = vadd.xlane.f32.xlu0 %v1694
  %v1696 = vpop.xlane.xlu0 %1695
  %v1697 = vadd.f32 %v1530, %v1531
  %v1698 = vadd.f32 %v1697, %v1532
  %v1699 = vadd.f32 %v1698, %v1533
  %1700 = vadd.xlane.f32.xlu0 %v1699
  %v1701 = vpop.xlane.xlu0 %1700
  %v1702 = vadd.f32 %v1534, %v1535
  %v1703 = vadd.f32 %v1702, %v1536
  %v1704 = vadd.f32 %v1703, %v1537
  %1705 = vadd.xlane.f32.xlu0 %v1704
  %v1706 = vpop.xlane.xlu0 %1705
  %v1707 = vadd.f32 %v1538, %v1539
  %v1708 = vadd.f32 %v1707, %v1540
  %v1709 = vadd.f32 %v1708, %v1541
  %1710 = vadd.xlane.f32.xlu0 %v1709
  %v1711 = vpop.xlane.xlu0 %1710
  %v1712 = vadd.f32 %v1542, %v1543
  %v1713 = vadd.f32 %v1712, %v1544
  %v1714 = vadd.f32 %v1713, %v1545
  %1715 = vadd.xlane.f32.xlu0 %v1714
  %v1716 = vpop.xlane.xlu0 %1715
  %v1717 = vadd.f32 %v1546, %v1547
  %v1718 = vadd.f32 %v1717, %v1548
  %v1719 = vadd.f32 %v1718, %v1549
  %1720 = vadd.xlane.f32.xlu0 %v1719
  %v1721 = vpop.xlane.xlu0 %1720
  %v1722 = vadd.f32 %v1550, %v1551
  %v1723 = vadd.f32 %v1722, %v1552
  %v1724 = vadd.f32 %v1723, %v1553
  %1725 = vadd.xlane.f32.xlu0 %v1724
  %v1726 = vpop.xlane.xlu0 %1725
  %v1727 = vadd.f32 %v1554, %v1555
  %v1728 = vadd.f32 %v1727, %v1556
  %v1729 = vadd.f32 %v1728, %v1557
  %1730 = vadd.xlane.f32.xlu0 %v1729
  %v1731 = vpop.xlane.xlu0 %1730
  %v1732 = vadd.f32 %v1558, %v1559
  %v1733 = vadd.f32 %v1732, %v1560
  %v1734 = vadd.f32 %v1733, %v1561
  %1735 = vadd.xlane.f32.xlu0 %v1734
  %v1736 = vpop.xlane.xlu0 %1735
  %v1737 = vadd.f32 %v1562, %v1563
  %v1738 = vadd.f32 %v1737, %v1564
  %v1739 = vadd.f32 %v1738, %v1565
  %1740 = vadd.xlane.f32.xlu0 %v1739
  %v1741 = vpop.xlane.xlu0 %1740
  %v1742 = vadd.f32 %v1566, %v1567
  %v1743 = vadd.f32 %v1742, %v1568
  %v1744 = vadd.f32 %v1743, %v1569
  %1745 = vadd.xlane.f32.xlu0 %v1744
  %v1746 = vpop.xlane.xlu0 %1745
  %v1747 = vadd.f32 %v1570, %v1571
  %v1748 = vadd.f32 %v1747, %v1572
  %v1749 = vadd.f32 %v1748, %v1573
  %1750 = vadd.xlane.f32.xlu0 %v1749
  %v1751 = vpop.xlane.xlu0 %1750
  %v1752 = vadd.f32 %v1574, %v1575
  %v1753 = vadd.f32 %v1752, %v1576
  %v1754 = vadd.f32 %v1753, %v1577
  %1755 = vadd.xlane.f32.xlu0 %v1754
  %v1756 = vpop.xlane.xlu0 %1755
  %v1757 = vadd.f32 %v1578, %v1579
  %v1758 = vadd.f32 %v1757, %v1580
  %v1759 = vadd.f32 %v1758, %v1581
  %1760 = vadd.xlane.f32.xlu0 %v1759
  %v1761 = vpop.xlane.xlu0 %1760
  %v1762 = vrcp.pop 512.0
  %v1763 = vmul.f32 %v1586, %v1762
  %v1764 = vmul.f32 %v1591, %v1762
  %v1765 = vmul.f32 %v1596, %v1762
  %v1766 = vmul.f32 %v1601, %v1762
  %v1767 = vmul.f32 %v1606, %v1762
  %v1768 = vmul.f32 %v1611, %v1762
  %v1769 = vmul.f32 %v1616, %v1762
  %v1770 = vmul.f32 %v1621, %v1762
  %v1771 = vmul.f32 %v1626, %v1762
  %v1772 = vmul.f32 %v1631, %v1762
  %v1773 = vmul.f32 %v1636, %v1762
  %v1774 = vmul.f32 %v1641, %v1762
  %v1775 = vmul.f32 %v1646, %v1762
  %v1776 = vmul.f32 %v1651, %v1762
  %v1777 = vmul.f32 %v1656, %v1762
  %v1778 = vmul.f32 %v1661, %v1762
  %v1779 = vmul.f32 %v1666, %v1762
  %v1780 = vmul.f32 %v1671, %v1762
  %v1781 = vmul.f32 %v1676, %v1762
  %v1782 = vmul.f32 %v1681, %v1762
  %v1783 = vmul.f32 %v1686, %v1762
  %v1784 = vmul.f32 %v1691, %v1762
  %v1785 = vmul.f32 %v1696, %v1762
  %v1786 = vmul.f32 %v1701, %v1762
  %v1787 = vmul.f32 %v1706, %v1762
  %v1788 = vmul.f32 %v1711, %v1762
  %v1789 = vmul.f32 %v1716, %v1762
  %v1790 = vmul.f32 %v1721, %v1762
  %v1791 = vmul.f32 %v1726, %v1762
  %v1792 = vmul.f32 %v1731, %v1762
  %v1793 = vmul.f32 %v1736, %v1762
  %v1794 = vmul.f32 %v1741, %v1762
  %v1795 = vmul.f32 %v1746, %v1762
  %v1796 = vmul.f32 %v1751, %v1762
  %v1797 = vmul.f32 %v1756, %v1762
  %v1798 = vmul.f32 %v1761, %v1762
  %v1799 = vmax.f32 %v1438, %v1439
  %v1800 = vmax.f32 %v1799, %v1440
  %v1801 = vmax.f32 %v1800, %v1441
  %1802 = vmax.xlane.f32.xlu0 %v1801
  %v1803 = vpop.xlane.xlu0 %1802
  %v1804 = vmax.f32 %v1442, %v1443
  %v1805 = vmax.f32 %v1804, %v1444
  %v1806 = vmax.f32 %v1805, %v1445
  %1807 = vmax.xlane.f32.xlu0 %v1806
  %v1808 = vpop.xlane.xlu0 %1807
  %v1809 = vmax.f32 %v1446, %v1447
  %v1810 = vmax.f32 %v1809, %v1448
  %v1811 = vmax.f32 %v1810, %v1449
  %1812 = vmax.xlane.f32.xlu0 %v1811
  %v1813 = vpop.xlane.xlu0 %1812
  %v1814 = vmax.f32 %v1450, %v1451
  %v1815 = vmax.f32 %v1814, %v1452
  %v1816 = vmax.f32 %v1815, %v1453
  %1817 = vmax.xlane.f32.xlu0 %v1816
  %v1818 = vpop.xlane.xlu0 %1817
  %v1819 = vmax.f32 %v1454, %v1455
  %v1820 = vmax.f32 %v1819, %v1456
  %v1821 = vmax.f32 %v1820, %v1457
  %1822 = vmax.xlane.f32.xlu0 %v1821
  %v1823 = vpop.xlane.xlu0 %1822
  %v1824 = vmax.f32 %v1458, %v1459
  %v1825 = vmax.f32 %v1824, %v1460
  %v1826 = vmax.f32 %v1825, %v1461
  %1827 = vmax.xlane.f32.xlu0 %v1826
  %v1828 = vpop.xlane.xlu0 %1827
  %v1829 = vmax.f32 %v1462, %v1463
  %v1830 = vmax.f32 %v1829, %v1464
  %v1831 = vmax.f32 %v1830, %v1465
  %1832 = vmax.xlane.f32.xlu0 %v1831
  %v1833 = vpop.xlane.xlu0 %1832
  %v1834 = vmax.f32 %v1466, %v1467
  %v1835 = vmax.f32 %v1834, %v1468
  %v1836 = vmax.f32 %v1835, %v1469
  %1837 = vmax.xlane.f32.xlu0 %v1836
  %v1838 = vpop.xlane.xlu0 %1837
  %v1839 = vmax.f32 %v1470, %v1471
  %v1840 = vmax.f32 %v1839, %v1472
  %v1841 = vmax.f32 %v1840, %v1473
  %1842 = vmax.xlane.f32.xlu0 %v1841
  %v1843 = vpop.xlane.xlu0 %1842
  %v1844 = vmax.f32 %v1474, %v1475
  %v1845 = vmax.f32 %v1844, %v1476
  %v1846 = vmax.f32 %v1845, %v1477
  %1847 = vmax.xlane.f32.xlu0 %v1846
  %v1848 = vpop.xlane.xlu0 %1847
  %v1849 = vmax.f32 %v1478, %v1479
  %v1850 = vmax.f32 %v1849, %v1480
  %v1851 = vmax.f32 %v1850, %v1481
  %1852 = vmax.xlane.f32.xlu0 %v1851
  %v1853 = vpop.xlane.xlu0 %1852
  %v1854 = vmax.f32 %v1482, %v1483
  %v1855 = vmax.f32 %v1854, %v1484
  %v1856 = vmax.f32 %v1855, %v1485
  %1857 = vmax.xlane.f32.xlu0 %v1856
  %v1858 = vpop.xlane.xlu0 %1857
  %v1859 = vmax.f32 %v1486, %v1487
  %v1860 = vmax.f32 %v1859, %v1488
  %v1861 = vmax.f32 %v1860, %v1489
  %1862 = vmax.xlane.f32.xlu0 %v1861
  %v1863 = vpop.xlane.xlu0 %1862
  %v1864 = vmax.f32 %v1490, %v1491
  %v1865 = vmax.f32 %v1864, %v1492
  %v1866 = vmax.f32 %v1865, %v1493
  %1867 = vmax.xlane.f32.xlu0 %v1866
  %v1868 = vpop.xlane.xlu0 %1867
  %v1869 = vmax.f32 %v1494, %v1495
  %v1870 = vmax.f32 %v1869, %v1496
  %v1871 = vmax.f32 %v1870, %v1497
  %1872 = vmax.xlane.f32.xlu0 %v1871
  %v1873 = vpop.xlane.xlu0 %1872
  %v1874 = vmax.f32 %v1498, %v1499
  %v1875 = vmax.f32 %v1874, %v1500
  %v1876 = vmax.f32 %v1875, %v1501
  %1877 = vmax.xlane.f32.xlu0 %v1876
  %v1878 = vpop.xlane.xlu0 %1877
  %v1879 = vmax.f32 %v1502, %v1503
  %v1880 = vmax.f32 %v1879, %v1504
  %v1881 = vmax.f32 %v1880, %v1505
  %1882 = vmax.xlane.f32.xlu0 %v1881
  %v1883 = vpop.xlane.xlu0 %1882
  %v1884 = vmax.f32 %v1506, %v1507
  %v1885 = vmax.f32 %v1884, %v1508
  %v1886 = vmax.f32 %v1885, %v1509
  %1887 = vmax.xlane.f32.xlu0 %v1886
  %v1888 = vpop.xlane.xlu0 %1887
  %v1889 = vmax.f32 %v1510, %v1511
  %v1890 = vmax.f32 %v1889, %v1512
  %v1891 = vmax.f32 %v1890, %v1513
  %1892 = vmax.xlane.f32.xlu0 %v1891
  %v1893 = vpop.xlane.xlu0 %1892
  %v1894 = vmax.f32 %v1514, %v1515
  %v1895 = vmax.f32 %v1894, %v1516
  %v1896 = vmax.f32 %v1895, %v1517
  %1897 = vmax.xlane.f32.xlu0 %v1896
  %v1898 = vpop.xlane.xlu0 %1897
  %v1899 = vmax.f32 %v1518, %v1519
  %v1900 = vmax.f32 %v1899, %v1520
  %v1901 = vmax.f32 %v1900, %v1521
  %1902 = vmax.xlane.f32.xlu0 %v1901
  %v1903 = vpop.xlane.xlu0 %1902
  %v1904 = vmax.f32 %v1522, %v1523
  %v1905 = vmax.f32 %v1904, %v1524
  %v1906 = vmax.f32 %v1905, %v1525
  %1907 = vmax.xlane.f32.xlu0 %v1906
  %v1908 = vpop.xlane.xlu0 %1907
  %v1909 = vmax.f32 %v1526, %v1527
  %v1910 = vmax.f32 %v1909, %v1528
  %v1911 = vmax.f32 %v1910, %v1529
  %1912 = vmax.xlane.f32.xlu0 %v1911
  %v1913 = vpop.xlane.xlu0 %1912
  %v1914 = vmax.f32 %v1530, %v1531
  %v1915 = vmax.f32 %v1914, %v1532
  %v1916 = vmax.f32 %v1915, %v1533
  %1917 = vmax.xlane.f32.xlu0 %v1916
  %v1918 = vpop.xlane.xlu0 %1917
  %v1919 = vmax.f32 %v1534, %v1535
  %v1920 = vmax.f32 %v1919, %v1536
  %v1921 = vmax.f32 %v1920, %v1537
  %1922 = vmax.xlane.f32.xlu0 %v1921
  %v1923 = vpop.xlane.xlu0 %1922
  %v1924 = vmax.f32 %v1538, %v1539
  %v1925 = vmax.f32 %v1924, %v1540
  %v1926 = vmax.f32 %v1925, %v1541
  %1927 = vmax.xlane.f32.xlu0 %v1926
  %v1928 = vpop.xlane.xlu0 %1927
  %v1929 = vmax.f32 %v1542, %v1543
  %v1930 = vmax.f32 %v1929, %v1544
  %v1931 = vmax.f32 %v1930, %v1545
  %1932 = vmax.xlane.f32.xlu0 %v1931
  %v1933 = vpop.xlane.xlu0 %1932
  %v1934 = vmax.f32 %v1546, %v1547
  %v1935 = vmax.f32 %v1934, %v1548
  %v1936 = vmax.f32 %v1935, %v1549
  %1937 = vmax.xlane.f32.xlu0 %v1936
  %v1938 = vpop.xlane.xlu0 %1937
  %v1939 = vmax.f32 %v1550, %v1551
  %v1940 = vmax.f32 %v1939, %v1552
  %v1941 = vmax.f32 %v1940, %v1553
  %1942 = vmax.xlane.f32.xlu0 %v1941
  %v1943 = vpop.xlane.xlu0 %1942
  %v1944 = vmax.f32 %v1554, %v1555
  %v1945 = vmax.f32 %v1944, %v1556
  %v1946 = vmax.f32 %v1945, %v1557
  %1947 = vmax.xlane.f32.xlu0 %v1946
  %v1948 = vpop.xlane.xlu0 %1947
  %v1949 = vmax.f32 %v1558, %v1559
  %v1950 = vmax.f32 %v1949, %v1560
  %v1951 = vmax.f32 %v1950, %v1561
  %1952 = vmax.xlane.f32.xlu0 %v1951
  %v1953 = vpop.xlane.xlu0 %1952
  %v1954 = vmax.f32 %v1562, %v1563
  %v1955 = vmax.f32 %v1954, %v1564
  %v1956 = vmax.f32 %v1955, %v1565
  %1957 = vmax.xlane.f32.xlu0 %v1956
  %v1958 = vpop.xlane.xlu0 %1957
  %v1959 = vmax.f32 %v1566, %v1567
  %v1960 = vmax.f32 %v1959, %v1568
  %v1961 = vmax.f32 %v1960, %v1569
  %1962 = vmax.xlane.f32.xlu0 %v1961
  %v1963 = vpop.xlane.xlu0 %1962
  %v1964 = vmax.f32 %v1570, %v1571
  %v1965 = vmax.f32 %v1964, %v1572
  %v1966 = vmax.f32 %v1965, %v1573
  %1967 = vmax.xlane.f32.xlu0 %v1966
  %v1968 = vpop.xlane.xlu0 %1967
  %v1969 = vmax.f32 %v1574, %v1575
  %v1970 = vmax.f32 %v1969, %v1576
  %v1971 = vmax.f32 %v1970, %v1577
  %1972 = vmax.xlane.f32.xlu0 %v1971
  %v1973 = vpop.xlane.xlu0 %1972
  %v1974 = vmax.f32 %v1578, %v1579
  %v1975 = vmax.f32 %v1974, %v1580
  %v1976 = vmax.f32 %v1975, %v1581
  %1977 = vmax.xlane.f32.xlu0 %v1976
  %v1978 = vpop.xlane.xlu0 %1977
  %v1979 = vld [vmem:[%s3] sm:$0xff]
  %v1980 = vld [vmem:[%s3 + $0x8] sm:$0xff]
  %v1981 = vld [vmem:[%s3 + $0x10] sm:$0xff]
  %v1982 = vld [vmem:[%s3 + $0x18] sm:$0xff]
  %v1983 = vld [vmem:[%s3 + $0x20] sm:$0xf]
  %v1984 = vld [vmem:[%s4] sm:$0xff]
  %v1985 = vld [vmem:[%s4 + $0x8] sm:$0xff]
  %v1986 = vld [vmem:[%s4 + $0x10] sm:$0xff]
  %v1987 = vld [vmem:[%s4 + $0x18] sm:$0xff]
  %v1988 = vld [vmem:[%s4 + $0x20] sm:$0xf]
  %v2025 = vlaneseq
  %v2026 = vand.u32 %v2025, 127
  %v2027 = vlaneseq
  %v2028 = vshrl.u32 %v2027, 7
  %v2029 = vsub.s32 %v2026, %v2028
  %v2030 = vrot.slane %v1803, %v2029
  %v2031 = vlaneseq
  %v2032 = vshrl.u32 %v2031, 7
  %v2033 = vsub.s32 %v2026, %v2032
  %v2034 = vrot.slane %v1808, %v2033
  %v2035 = vlaneseq
  %v2036 = vshrl.u32 %v2035, 7
  %v2037 = vsub.s32 %v2026, %v2036
  %v2038 = vrot.slane %v1813, %v2037
  %v2039 = vlaneseq
  %v2040 = vshrl.u32 %v2039, 7
  %v2041 = vsub.s32 %v2026, %v2040
  %v2042 = vrot.slane %v1818, %v2041
  %v2043 = vlaneseq
  %v2044 = vshrl.u32 %v2043, 7
  %v2045 = vsub.s32 %v2026, %v2044
  %v2046 = vrot.slane %v1823, %v2045
  %v2047 = vlaneseq
  %v2048 = vshrl.u32 %v2047, 7
  %v2049 = vsub.s32 %v2026, %v2048
  %v2050 = vrot.slane %v1828, %v2049
  %v2051 = vlaneseq
  %v2052 = vshrl.u32 %v2051, 7
  %v2053 = vsub.s32 %v2026, %v2052
  %v2054 = vrot.slane %v1833, %v2053
  %v2055 = vlaneseq
  %v2056 = vshrl.u32 %v2055, 7
  %v2057 = vsub.s32 %v2026, %v2056
  %v2058 = vrot.slane %v1838, %v2057
  %v2059 = vlaneseq
  %v2060 = vshrl.u32 %v2059, 7
  %v2061 = vsub.s32 %v2026, %v2060
  %v2062 = vrot.slane %v1843, %v2061
  %v2063 = vlaneseq
  %v2064 = vshrl.u32 %v2063, 7
  %v2065 = vsub.s32 %v2026, %v2064
  %v2066 = vrot.slane %v1848, %v2065
  %v2067 = vlaneseq
  %v2068 = vshrl.u32 %v2067, 7
  %v2069 = vsub.s32 %v2026, %v2068
  %v2070 = vrot.slane %v1853, %v2069
  %v2071 = vlaneseq
  %v2072 = vshrl.u32 %v2071, 7
  %v2073 = vsub.s32 %v2026, %v2072
  %v2074 = vrot.slane %v1858, %v2073
  %v2075 = vlaneseq
  %v2076 = vshrl.u32 %v2075, 7
  %v2077 = vsub.s32 %v2026, %v2076
  %v2078 = vrot.slane %v1863, %v2077
  %v2079 = vlaneseq
  %v2080 = vshrl.u32 %v2079, 7
  %v2081 = vsub.s32 %v2026, %v2080
  %v2082 = vrot.slane %v1868, %v2081
  %v2083 = vlaneseq
  %v2084 = vshrl.u32 %v2083, 7
  %v2085 = vsub.s32 %v2026, %v2084
  %v2086 = vrot.slane %v1873, %v2085
  %v2087 = vlaneseq
  %v2088 = vshrl.u32 %v2087, 7
  %v2089 = vsub.s32 %v2026, %v2088
  %v2090 = vrot.slane %v1878, %v2089
  %v2091 = vlaneseq
  %v2092 = vshrl.u32 %v2091, 7
  %v2093 = vsub.s32 %v2026, %v2092
  %v2094 = vrot.slane %v1883, %v2093
  %v2095 = vlaneseq
  %v2096 = vshrl.u32 %v2095, 7
  %v2097 = vsub.s32 %v2026, %v2096
  %v2098 = vrot.slane %v1888, %v2097
  %v2099 = vlaneseq
  %v2100 = vshrl.u32 %v2099, 7
  %v2101 = vsub.s32 %v2026, %v2100
  %v2102 = vrot.slane %v1893, %v2101
  %v2103 = vlaneseq
  %v2104 = vshrl.u32 %v2103, 7
  %v2105 = vsub.s32 %v2026, %v2104
  %v2106 = vrot.slane %v1898, %v2105
  %v2107 = vlaneseq
  %v2108 = vshrl.u32 %v2107, 7
  %v2109 = vsub.s32 %v2026, %v2108
  %v2110 = vrot.slane %v1903, %v2109
  %v2111 = vlaneseq
  %v2112 = vshrl.u32 %v2111, 7
  %v2113 = vsub.s32 %v2026, %v2112
  %v2114 = vrot.slane %v1908, %v2113
  %v2115 = vlaneseq
  %v2116 = vshrl.u32 %v2115, 7
  %v2117 = vsub.s32 %v2026, %v2116
  %v2118 = vrot.slane %v1913, %v2117
  %v2119 = vlaneseq
  %v2120 = vshrl.u32 %v2119, 7
  %v2121 = vsub.s32 %v2026, %v2120
  %v2122 = vrot.slane %v1918, %v2121
  %v2123 = vlaneseq
  %v2124 = vshrl.u32 %v2123, 7
  %v2125 = vsub.s32 %v2026, %v2124
  %v2126 = vrot.slane %v1923, %v2125
  %v2127 = vlaneseq
  %v2128 = vshrl.u32 %v2127, 7
  %v2129 = vsub.s32 %v2026, %v2128
  %v2130 = vrot.slane %v1928, %v2129
  %v2131 = vlaneseq
  %v2132 = vshrl.u32 %v2131, 7
  %v2133 = vsub.s32 %v2026, %v2132
  %v2134 = vrot.slane %v1933, %v2133
  %v2135 = vlaneseq
  %v2136 = vshrl.u32 %v2135, 7
  %v2137 = vsub.s32 %v2026, %v2136
  %v2138 = vrot.slane %v1938, %v2137
  %v2139 = vlaneseq
  %v2140 = vshrl.u32 %v2139, 7
  %v2141 = vsub.s32 %v2026, %v2140
  %v2142 = vrot.slane %v1943, %v2141
  %v2143 = vlaneseq
  %v2144 = vshrl.u32 %v2143, 7
  %v2145 = vsub.s32 %v2026, %v2144
  %v2146 = vrot.slane %v1948, %v2145
  %v2147 = vlaneseq
  %v2148 = vshrl.u32 %v2147, 7
  %v2149 = vsub.s32 %v2026, %v2148
  %v2150 = vrot.slane %v1953, %v2149
  %v2151 = vlaneseq
  %v2152 = vshrl.u32 %v2151, 7
  %v2153 = vsub.s32 %v2026, %v2152
  %v2154 = vrot.slane %v1958, %v2153
  %v2155 = vlaneseq
  %v2156 = vshrl.u32 %v2155, 7
  %v2157 = vsub.s32 %v2026, %v2156
  %v2158 = vrot.slane %v1963, %v2157
  %v2159 = vlaneseq
  %v2160 = vshrl.u32 %v2159, 7
  %v2161 = vsub.s32 %v2026, %v2160
  %v2162 = vrot.slane %v1968, %v2161
  %v2163 = vlaneseq
  %v2164 = vshrl.u32 %v2163, 7
  %v2165 = vsub.s32 %v2026, %v2164
  %v2166 = vrot.slane %v1973, %v2165
  %v2167 = vlaneseq
  %v2168 = vshrl.u32 %v2167, 7
  %v2169 = vsub.s32 %v2026, %v2168
  %v2170 = vrot.slane %v1978, %v2169
  %vm2171 = vcmask 1041409
  %v2172 = vsel %vm2171, %v2034, %v2030
  %vm2173 = vcmask 1042434
  %v2174 = vsel %vm2173, %v2038, %v2172
  %vm2175 = vcmask 1043459
  %v2176 = vsel %vm2175, %v2042, %v2174
  %vm2177 = vcmask 1044484
  %v2178 = vsel %vm2177, %v2046, %v2176
  %vm2179 = vcmask 1045509
  %v2180 = vsel %vm2179, %v2050, %v2178
  %vm2181 = vcmask 1046534
  %v2182 = vsel %vm2181, %v2054, %v2180
  %vm2183 = vcmask 1047559
  %v2184 = vsel %vm2183, %v2058, %v2182
  %v2185 = vsel %vm2171, %v2066, %v2062
  %v2186 = vsel %vm2173, %v2070, %v2185
  %v2187 = vsel %vm2175, %v2074, %v2186
  %v2188 = vsel %vm2177, %v2078, %v2187
  %v2189 = vsel %vm2179, %v2082, %v2188
  %v2190 = vsel %vm2181, %v2086, %v2189
  %v2191 = vsel %vm2183, %v2090, %v2190
  %v2192 = vsel %vm2171, %v2098, %v2094
  %v2193 = vsel %vm2173, %v2102, %v2192
  %v2194 = vsel %vm2175, %v2106, %v2193
  %v2195 = vsel %vm2177, %v2110, %v2194
  %v2196 = vsel %vm2179, %v2114, %v2195
  %v2197 = vsel %vm2181, %v2118, %v2196
  %v2198 = vsel %vm2183, %v2122, %v2197
  %v2199 = vsel %vm2171, %v2130, %v2126
  %v2200 = vsel %vm2173, %v2134, %v2199
  %v2201 = vsel %vm2175, %v2138, %v2200
  %v2202 = vsel %vm2177, %v2142, %v2201
  %v2203 = vsel %vm2179, %v2146, %v2202
  %v2204 = vsel %vm2181, %v2150, %v2203
  %v2205 = vsel %vm2183, %v2154, %v2204
  %v2206 = vsel %vm2171, %v2162, %v2158
  %v2207 = vsel %vm2173, %v2166, %v2206
  %v2208 = vsel %vm2175, %v2170, %v2207
  %vm2213 = vcmask 293888
  %v2215 = vsel %vm2213, %v1984, 0
  %v2218 = vsel %vm2213, %v1985, 0
  %v2221 = vsel %vm2213, %v1986, 0
  %v2224 = vsel %vm2213, %v1987, 0
  %v2227 = vsel %vm2213, %v1988, 0
  %vm2229 = vcmask 1043456
  %v2230 = vsel %vm2229, %v2208, 0
  %2232 = vmatprep.subr.mxu0 0.0
  %2233 = vmatpush1.msra.mxu0 %v2184
  %2234 = vmatprep.subr.mxu0 0.0
  %2235 = vmatpush1.msra.mxu0 %v2191
  %2236 = vmatprep.subr.mxu0 0.0
  %2237 = vmatpush1.msra.mxu0 %v2198
  %2238 = vmatprep.subr.mxu0 0.0
  %2239 = vmatpush1.msra.mxu0 %v2205
  %2240 = vmatprep.subr.mxu0 0.0
  %2241 = vmatpush1.msra.mxu0 %v2230
  %2242 = vmatprep.subr.mxu0 0.0
  %2243 = vmatpush1.msra.mxu0 0.0
  %2244 = vmatprep.subr.mxu0 0.0
  %2245 = vmatpush1.msra.mxu0 0.0
  %2246 = vmatprep.subr.mxu0 0.0
  %2247 = vmatpush1.msra.mxu0 0.0
  %2248 = vmatprep.subr.mxu0 0.0
  %2249 = vmatpush1.msra.mxu0 0.0
  %2250 = vmatprep.subr.mxu0 0.0
  %2251 = vmatpush1.msra.mxu0 0.0
  %2252 = vmatprep.subr.mxu0 0.0
  %2253 = vmatpush1.msra.mxu0 0.0
  %2254 = vmatprep.subr.mxu0 0.0
  %2255 = vmatpush1.msra.mxu0 0.0
  %2256 = vmatprep.subr.mxu0 0.0
  %2257 = vmatpush1.msra.mxu0 0.0
  %2258 = vmatprep.subr.mxu0 0.0
  %2259 = vmatpush1.msra.mxu0 0.0
  %2260 = vmatprep.subr.mxu0 0.0
  %2261 = vmatpush1.msra.mxu0 0.0
  %2262 = vmatprep.subr.mxu0 0.0
  %2263 = vmatpush1.msra.mxu0 0.0
  %2264 = vmatprep.subr.mxu0 0.0
  %2265 = vmatpush1.msra.mxu0 0.0
  %2266 = vmatprep.subr.mxu0 0.0
  %2267 = vmatpush1.msra.mxu0 0.0
  %2268 = vmatprep.subr.mxu0 0.0
  %2269 = vmatpush1.msra.mxu0 0.0
  %2270 = vmatprep.subr.mxu0 0.0
  %2271 = vmatpush1.msra.mxu0 0.0
  %2272 = vmatprep.subr.mxu0 0.0
  %2273 = vmatpush1.msra.mxu0 0.0
  %2274 = vmatprep.subr.mxu0 0.0
  %2275 = vmatpush1.msra.mxu0 0.0
  %2276 = vmatprep.subr.mxu0 0.0
  %2277 = vmatpush1.msra.mxu0 0.0
  %2278 = vmatprep.subr.mxu0 0.0
  %2279 = vmatpush1.msra.mxu0 0.0
  %2280 = vmatprep.subr.mxu0 0.0
  %2281 = vmatpush1.msra.mxu0 0.0
  %2282 = vmatprep.subr.mxu0 0.0
  %2283 = vmatpush1.msra.mxu0 0.0
  %2284 = vmatprep.subr.mxu0 0.0
  %2285 = vmatpush1.msra.mxu0 0.0
  %2286 = vmatprep.subr.mxu0 0.0
  %2287 = vmatpush1.msra.mxu0 0.0
  %2288 = vmatprep.subr.mxu0 0.0
  %2289 = vmatpush1.msra.mxu0 0.0
  %2290 = vmatprep.subr.mxu0 0.0
  %2291 = vmatpush1.msra.mxu0 0.0
  %2292 = vmatprep.subr.mxu0 0.0
  %2293 = vmatpush1.msra.mxu0 0.0
  %2294 = vmatprep.subr.mxu0 0.0
  %2295 = vmatpush1.msra.mxu0 0.0
  %2296 = vmatprep.mubr.f32.mxu0 0.0
  %2297 = vmatmul.mubr.f32.gmra.mrb[0].mxu0 %v2215
  %v2298 = vpop.f32.mrb[0].mxu0
  %v2299 = vadd.f32 0.0, %v2298
  %v2300 = vpop.f32.mrb[0].mxu0
  %2301 = vmatprep.mubr.f32.mxu0 0.0
  %2302 = vmatmul.mubr.f32.gmra.mrb[0].mxu0 %v2218
  %v2303 = vpop.f32.mrb[0].mxu0
  %v2304 = vadd.f32 0.0, %v2303
  %v2305 = vpop.f32.mrb[0].mxu0
  %2306 = vmatprep.mubr.f32.mxu0 0.0
  %2307 = vmatmul.mubr.f32.gmra.mrb[0].mxu0 %v2221
  %v2308 = vpop.f32.mrb[0].mxu0
  %v2309 = vadd.f32 0.0, %v2308
  %v2310 = vpop.f32.mrb[0].mxu0
  %2311 = vmatprep.mubr.f32.mxu0 0.0
  %2312 = vmatmul.mubr.f32.gmra.mrb[0].mxu0 %v2224
  %v2313 = vpop.f32.mrb[0].mxu0
  %v2314 = vadd.f32 0.0, %v2313
  %v2315 = vpop.f32.mrb[0].mxu0
  %2316 = vmatprep.mubr.f32.mxu0 0.0
  %2317 = vmatmul.mubr.f32.gmra.mrb[0].mxu0 %v2227
  %v2318 = vpop.f32.mrb[0].mxu0
  %v2319 = vadd.f32 0.0, %v2318
  %v2320 = vpop.f32.mrb[0].mxu0
  %2321 = vdwg.mxu0
  %v2358 = vlaneseq
  %v2359 = vshrl.u32 %v2358, 7
  %v2360 = vsub.s32 %v2026, %v2359
  %v2361 = vrot.slane %v1763, %v2360
  %v2362 = vlaneseq
  %v2363 = vshrl.u32 %v2362, 7
  %v2364 = vsub.s32 %v2026, %v2363
  %v2365 = vrot.slane %v1764, %v2364
  %v2366 = vlaneseq
  %v2367 = vshrl.u32 %v2366, 7
  %v2368 = vsub.s32 %v2026, %v2367
  %v2369 = vrot.slane %v1765, %v2368
  %v2370 = vlaneseq
  %v2371 = vshrl.u32 %v2370, 7
  %v2372 = vsub.s32 %v2026, %v2371
  %v2373 = vrot.slane %v1766, %v2372
  %v2374 = vlaneseq
  %v2375 = vshrl.u32 %v2374, 7
  %v2376 = vsub.s32 %v2026, %v2375
  %v2377 = vrot.slane %v1767, %v2376
  %v2378 = vlaneseq
  %v2379 = vshrl.u32 %v2378, 7
  %v2380 = vsub.s32 %v2026, %v2379
  %v2381 = vrot.slane %v1768, %v2380
  %v2382 = vlaneseq
  %v2383 = vshrl.u32 %v2382, 7
  %v2384 = vsub.s32 %v2026, %v2383
  %v2385 = vrot.slane %v1769, %v2384
  %v2386 = vlaneseq
  %v2387 = vshrl.u32 %v2386, 7
  %v2388 = vsub.s32 %v2026, %v2387
  %v2389 = vrot.slane %v1770, %v2388
  %v2390 = vlaneseq
  %v2391 = vshrl.u32 %v2390, 7
  %v2392 = vsub.s32 %v2026, %v2391
  %v2393 = vrot.slane %v1771, %v2392
  %v2394 = vlaneseq
  %v2395 = vshrl.u32 %v2394, 7
  %v2396 = vsub.s32 %v2026, %v2395
  %v2397 = vrot.slane %v1772, %v2396
  %v2398 = vlaneseq
  %v2399 = vshrl.u32 %v2398, 7
  %v2400 = vsub.s32 %v2026, %v2399
  %v2401 = vrot.slane %v1773, %v2400
  %v2402 = vlaneseq
  %v2403 = vshrl.u32 %v2402, 7
  %v2404 = vsub.s32 %v2026, %v2403
  %v2405 = vrot.slane %v1774, %v2404
  %v2406 = vlaneseq
  %v2407 = vshrl.u32 %v2406, 7
  %v2408 = vsub.s32 %v2026, %v2407
  %v2409 = vrot.slane %v1775, %v2408
  %v2410 = vlaneseq
  %v2411 = vshrl.u32 %v2410, 7
  %v2412 = vsub.s32 %v2026, %v2411
  %v2413 = vrot.slane %v1776, %v2412
  %v2414 = vlaneseq
  %v2415 = vshrl.u32 %v2414, 7
  %v2416 = vsub.s32 %v2026, %v2415
  %v2417 = vrot.slane %v1777, %v2416
  %v2418 = vlaneseq
  %v2419 = vshrl.u32 %v2418, 7
  %v2420 = vsub.s32 %v2026, %v2419
  %v2421 = vrot.slane %v1778, %v2420
  %v2422 = vlaneseq
  %v2423 = vshrl.u32 %v2422, 7
  %v2424 = vsub.s32 %v2026, %v2423
  %v2425 = vrot.slane %v1779, %v2424
  %v2426 = vlaneseq
  %v2427 = vshrl.u32 %v2426, 7
  %v2428 = vsub.s32 %v2026, %v2427
  %v2429 = vrot.slane %v1780, %v2428
  %v2430 = vlaneseq
  %v2431 = vshrl.u32 %v2430, 7
  %v2432 = vsub.s32 %v2026, %v2431
  %v2433 = vrot.slane %v1781, %v2432
  %v2434 = vlaneseq
  %v2435 = vshrl.u32 %v2434, 7
  %v2436 = vsub.s32 %v2026, %v2435
  %v2437 = vrot.slane %v1782, %v2436
  %v2438 = vlaneseq
  %v2439 = vshrl.u32 %v2438, 7
  %v2440 = vsub.s32 %v2026, %v2439
  %v2441 = vrot.slane %v1783, %v2440
  %v2442 = vlaneseq
  %v2443 = vshrl.u32 %v2442, 7
  %v2444 = vsub.s32 %v2026, %v2443
  %v2445 = vrot.slane %v1784, %v2444
  %v2446 = vlaneseq
  %v2447 = vshrl.u32 %v2446, 7
  %v2448 = vsub.s32 %v2026, %v2447
  %v2449 = vrot.slane %v1785, %v2448
  %v2450 = vlaneseq
  %v2451 = vshrl.u32 %v2450, 7
  %v2452 = vsub.s32 %v2026, %v2451
  %v2453 = vrot.slane %v1786, %v2452
  %v2454 = vlaneseq
  %v2455 = vshrl.u32 %v2454, 7
  %v2456 = vsub.s32 %v2026, %v2455
  %v2457 = vrot.slane %v1787, %v2456
  %v2458 = vlaneseq
  %v2459 = vshrl.u32 %v2458, 7
  %v2460 = vsub.s32 %v2026, %v2459
  %v2461 = vrot.slane %v1788, %v2460
  %v2462 = vlaneseq
  %v2463 = vshrl.u32 %v2462, 7
  %v2464 = vsub.s32 %v2026, %v2463
  %v2465 = vrot.slane %v1789, %v2464
  %v2466 = vlaneseq
  %v2467 = vshrl.u32 %v2466, 7
  %v2468 = vsub.s32 %v2026, %v2467
  %v2469 = vrot.slane %v1790, %v2468
  %v2470 = vlaneseq
  %v2471 = vshrl.u32 %v2470, 7
  %v2472 = vsub.s32 %v2026, %v2471
  %v2473 = vrot.slane %v1791, %v2472
  %v2474 = vlaneseq
  %v2475 = vshrl.u32 %v2474, 7
  %v2476 = vsub.s32 %v2026, %v2475
  %v2477 = vrot.slane %v1792, %v2476
  %v2478 = vlaneseq
  %v2479 = vshrl.u32 %v2478, 7
  %v2480 = vsub.s32 %v2026, %v2479
  %v2481 = vrot.slane %v1793, %v2480
  %v2482 = vlaneseq
  %v2483 = vshrl.u32 %v2482, 7
  %v2484 = vsub.s32 %v2026, %v2483
  %v2485 = vrot.slane %v1794, %v2484
  %v2486 = vlaneseq
  %v2487 = vshrl.u32 %v2486, 7
  %v2488 = vsub.s32 %v2026, %v2487
  %v2489 = vrot.slane %v1795, %v2488
  %v2490 = vlaneseq
  %v2491 = vshrl.u32 %v2490, 7
  %v2492 = vsub.s32 %v2026, %v2491
  %v2493 = vrot.slane %v1796, %v2492
  %v2494 = vlaneseq
  %v2495 = vshrl.u32 %v2494, 7
  %v2496 = vsub.s32 %v2026, %v2495
  %v2497 = vrot.slane %v1797, %v2496
  %v2498 = vlaneseq
  %v2499 = vshrl.u32 %v2498, 7
  %v2500 = vsub.s32 %v2026, %v2499
  %v2501 = vrot.slane %v1798, %v2500
  %v2502 = vsel %vm2171, %v2365, %v2361
  %v2503 = vsel %vm2173, %v2369, %v2502
  %v2504 = vsel %vm2175, %v2373, %v2503
  %v2505 = vsel %vm2177, %v2377, %v2504
  %v2506 = vsel %vm2179, %v2381, %v2505
  %v2507 = vsel %vm2181, %v2385, %v2506
  %v2508 = vsel %vm2183, %v2389, %v2507
  %v2509 = vsel %vm2171, %v2397, %v2393
  %v2510 = vsel %vm2173, %v2401, %v2509
  %v2511 = vsel %vm2175, %v2405, %v2510
  %v2512 = vsel %vm2177, %v2409, %v2511
  %v2513 = vsel %vm2179, %v2413, %v2512
  %v2514 = vsel %vm2181, %v2417, %v2513
  %v2515 = vsel %vm2183, %v2421, %v2514
  %v2516 = vsel %vm2171, %v2429, %v2425
  %v2517 = vsel %vm2173, %v2433, %v2516
  %v2518 = vsel %vm2175, %v2437, %v2517
  %v2519 = vsel %vm2177, %v2441, %v2518
  %v2520 = vsel %vm2179, %v2445, %v2519
  %v2521 = vsel %vm2181, %v2449, %v2520
  %v2522 = vsel %vm2183, %v2453, %v2521
  %v2523 = vsel %vm2171, %v2461, %v2457
  %v2524 = vsel %vm2173, %v2465, %v2523
  %v2525 = vsel %vm2175, %v2469, %v2524
  %v2526 = vsel %vm2177, %v2473, %v2525
  %v2527 = vsel %vm2179, %v2477, %v2526
  %v2528 = vsel %vm2181, %v2481, %v2527
  %v2529 = vsel %vm2183, %v2485, %v2528
  %v2530 = vsel %vm2171, %v2493, %v2489
  %v2531 = vsel %vm2173, %v2497, %v2530
  %v2532 = vsel %vm2175, %v2501, %v2531
  %v2538 = vsel %vm2213, %v1979, 0
  %v2541 = vsel %vm2213, %v1980, 0
  %v2544 = vsel %vm2213, %v1981, 0
  %v2547 = vsel %vm2213, %v1982, 0
  %v2550 = vsel %vm2213, %v1983, 0
  %v2552 = vsel %vm2229, %v2532, 0
  %2554 = vmatprep.subr.mxu0 0.0
  %2555 = vmatpush1.msra.mxu0 %v2508
  %2556 = vmatprep.subr.mxu0 0.0
  %2557 = vmatpush1.msra.mxu0 %v2515
  %2558 = vmatprep.subr.mxu0 0.0
  %2559 = vmatpush1.msra.mxu0 %v2522
  %2560 = vmatprep.subr.mxu0 0.0
  %2561 = vmatpush1.msra.mxu0 %v2529
  %2562 = vmatprep.subr.mxu0 0.0
  %2563 = vmatpush1.msra.mxu0 %v2552
  %2564 = vmatprep.subr.mxu0 0.0
  %2565 = vmatpush1.msra.mxu0 0.0
  %2566 = vmatprep.subr.mxu0 0.0
  %2567 = vmatpush1.msra.mxu0 0.0
  %2568 = vmatprep.subr.mxu0 0.0
  %2569 = vmatpush1.msra.mxu0 0.0
  %2570 = vmatprep.subr.mxu0 0.0
  %2571 = vmatpush1.msra.mxu0 0.0
  %2572 = vmatprep.subr.mxu0 0.0
  %2573 = vmatpush1.msra.mxu0 0.0
  %2574 = vmatprep.subr.mxu0 0.0
  %2575 = vmatpush1.msra.mxu0 0.0
  %2576 = vmatprep.subr.mxu0 0.0
  %2577 = vmatpush1.msra.mxu0 0.0
  %2578 = vmatprep.subr.mxu0 0.0
  %2579 = vmatpush1.msra.mxu0 0.0
  %2580 = vmatprep.subr.mxu0 0.0
  %2581 = vmatpush1.msra.mxu0 0.0
  %2582 = vmatprep.subr.mxu0 0.0
  %2583 = vmatpush1.msra.mxu0 0.0
  %2584 = vmatprep.subr.mxu0 0.0
  %2585 = vmatpush1.msra.mxu0 0.0
  %2586 = vmatprep.subr.mxu0 0.0
  %2587 = vmatpush1.msra.mxu0 0.0
  %2588 = vmatprep.subr.mxu0 0.0
  %2589 = vmatpush1.msra.mxu0 0.0
  %2590 = vmatprep.subr.mxu0 0.0
  %2591 = vmatpush1.msra.mxu0 0.0
  %2592 = vmatprep.subr.mxu0 0.0
  %2593 = vmatpush1.msra.mxu0 0.0
  %2594 = vmatprep.subr.mxu0 0.0
  %2595 = vmatpush1.msra.mxu0 0.0
  %2596 = vmatprep.subr.mxu0 0.0
  %2597 = vmatpush1.msra.mxu0 0.0
  %2598 = vmatprep.subr.mxu0 0.0
  %2599 = vmatpush1.msra.mxu0 0.0
  %2600 = vmatprep.subr.mxu0 0.0
  %2601 = vmatpush1.msra.mxu0 0.0
  %2602 = vmatprep.subr.mxu0 0.0
  %2603 = vmatpush1.msra.mxu0 0.0
  %2604 = vmatprep.subr.mxu0 0.0
  %2605 = vmatpush1.msra.mxu0 0.0
  %2606 = vmatprep.subr.mxu0 0.0
  %2607 = vmatpush1.msra.mxu0 0.0
  %2608 = vmatprep.subr.mxu0 0.0
  %2609 = vmatpush1.msra.mxu0 0.0
  %2610 = vmatprep.subr.mxu0 0.0
  %2611 = vmatpush1.msra.mxu0 0.0
  %2612 = vmatprep.subr.mxu0 0.0
  %2613 = vmatpush1.msra.mxu0 0.0
  %2614 = vmatprep.subr.mxu0 0.0
  %2615 = vmatpush1.msra.mxu0 0.0
  %2616 = vmatprep.subr.mxu0 0.0
  %2617 = vmatpush1.msra.mxu0 0.0
  %2618 = vmatprep.mubr.f32.mxu0 0.0
  %2619 = vmatmul.mubr.f32.gmra.mrb[0].mxu0 %v2538
  %v2620 = vpop.f32.mrb[0].mxu0
  %v2621 = vadd.f32 %v2299, %v2620
  %v2622 = vpop.f32.mrb[0].mxu0
  %2623 = vmatprep.mubr.f32.mxu0 0.0
  %2624 = vmatmul.mubr.f32.gmra.mrb[0].mxu0 %v2541
  %v2625 = vpop.f32.mrb[0].mxu0
  %v2626 = vadd.f32 %v2304, %v2625
  %v2627 = vpop.f32.mrb[0].mxu0
  %2628 = vmatprep.mubr.f32.mxu0 0.0
  %2629 = vmatmul.mubr.f32.gmra.mrb[0].mxu0 %v2544
  %v2630 = vpop.f32.mrb[0].mxu0
  %v2631 = vadd.f32 %v2309, %v2630
  %v2632 = vpop.f32.mrb[0].mxu0
  %2633 = vmatprep.mubr.f32.mxu0 0.0
  %2634 = vmatmul.mubr.f32.gmra.mrb[0].mxu0 %v2547
  %v2635 = vpop.f32.mrb[0].mxu0
  %v2636 = vadd.f32 %v2314, %v2635
  %v2637 = vpop.f32.mrb[0].mxu0
  %2638 = vmatprep.mubr.f32.mxu0 0.0
  %2639 = vmatmul.mubr.f32.gmra.mrb[0].mxu0 %v2550
  %v2640 = vpop.f32.mrb[0].mxu0
  %v2641 = vadd.f32 %v2319, %v2640
  %v2642 = vpop.f32.mrb[0].mxu0
  %2643 = vdwg.mxu0
  %v2644 = vxor.u32 %v2621, 2147483648
  %v2645 = vxor.u32 %v2626, 2147483648
  %v2646 = vxor.u32 %v2631, 2147483648
  %v2647 = vxor.u32 %v2636, 2147483648
  %v2648 = vxor.u32 %v2641, 2147483648
  %v2649 = vmul.f32 %v2644, 1.442695
  %v2650 = vpow.pop %v2649
  %v2651 = vmul.f32 %v2645, 1.442695
  %v2652 = vpow.pop %v2651
  %v2653 = vmul.f32 %v2646, 1.442695
  %v2654 = vpow.pop %v2653
  %v2655 = vmul.f32 %v2647, 1.442695
  %v2656 = vpow.pop %v2655
  %v2657 = vmul.f32 %v2648, 1.442695
  %v2658 = vpow.pop %v2657
  %v2659 = vadd.f32 %v2650, 1.0
  %v2660 = vadd.f32 %v2652, 1.0
  %v2661 = vadd.f32 %v2654, 1.0
  %v2662 = vadd.f32 %v2656, 1.0
  %v2663 = vadd.f32 %v2658, 1.0
  %v2664 = vrcp.pop %v2659
  %v2665 = vmul.f32 1.0, %v2664
  %v2666 = vrcp.pop %v2660
  %v2667 = vmul.f32 1.0, %v2666
  %v2668 = vrcp.pop %v2661
  %v2669 = vmul.f32 1.0, %v2668
  %v2670 = vrcp.pop %v2662
  %v2671 = vmul.f32 1.0, %v2670
  %v2672 = vrcp.pop %v2663
  %v2673 = vmul.f32 1.0, %v2672
  %v2674 = vlaneseq
  %v2675 = vshrl.u32 %v2674, 7
  %v2676 = vsub.s32 0, %v2675
  %v2677 = vrot.slane %v2665, %v2676
  %2679 = vbcast.lane.b32.xlu0 %v2677, 256
  %v2680 = vpop.permute.xlu0 %2679
  %v2681 = vlaneseq
  %v2682 = vshrl.u32 %v2681, 7
  %v2683 = vsub.s32 1, %v2682
  %v2684 = vrot.slane %v2665, %v2683
  %2686 = vbcast.lane.b32.xlu0 %v2684, 256
  %v2687 = vpop.permute.xlu0 %2686
  %v2688 = vlaneseq
  %v2689 = vshrl.u32 %v2688, 7
  %v2690 = vsub.s32 2, %v2689
  %v2691 = vrot.slane %v2665, %v2690
  %2693 = vbcast.lane.b32.xlu0 %v2691, 256
  %v2694 = vpop.permute.xlu0 %2693
  %v2695 = vlaneseq
  %v2696 = vshrl.u32 %v2695, 7
  %v2697 = vsub.s32 3, %v2696
  %v2698 = vrot.slane %v2665, %v2697
  %2700 = vbcast.lane.b32.xlu0 %v2698, 256
  %v2701 = vpop.permute.xlu0 %2700
  %v2702 = vlaneseq
  %v2703 = vshrl.u32 %v2702, 7
  %v2704 = vsub.s32 4, %v2703
  %v2705 = vrot.slane %v2665, %v2704
  %2707 = vbcast.lane.b32.xlu0 %v2705, 256
  %v2708 = vpop.permute.xlu0 %2707
  %v2709 = vlaneseq
  %v2710 = vshrl.u32 %v2709, 7
  %v2711 = vsub.s32 5, %v2710
  %v2712 = vrot.slane %v2665, %v2711
  %2714 = vbcast.lane.b32.xlu0 %v2712, 256
  %v2715 = vpop.permute.xlu0 %2714
  %v2716 = vlaneseq
  %v2717 = vshrl.u32 %v2716, 7
  %v2718 = vsub.s32 6, %v2717
  %v2719 = vrot.slane %v2665, %v2718
  %2721 = vbcast.lane.b32.xlu0 %v2719, 256
  %v2722 = vpop.permute.xlu0 %2721
  %v2723 = vlaneseq
  %v2724 = vshrl.u32 %v2723, 7
  %v2725 = vsub.s32 7, %v2724
  %v2726 = vrot.slane %v2665, %v2725
  %2728 = vbcast.lane.b32.xlu0 %v2726, 256
  %v2729 = vpop.permute.xlu0 %2728
  %v2730 = vlaneseq
  %v2731 = vshrl.u32 %v2730, 7
  %v2732 = vsub.s32 0, %v2731
  %v2733 = vrot.slane %v2667, %v2732
  %2735 = vbcast.lane.b32.xlu0 %v2733, 256
  %v2736 = vpop.permute.xlu0 %2735
  %v2737 = vlaneseq
  %v2738 = vshrl.u32 %v2737, 7
  %v2739 = vsub.s32 1, %v2738
  %v2740 = vrot.slane %v2667, %v2739
  %2742 = vbcast.lane.b32.xlu0 %v2740, 256
  %v2743 = vpop.permute.xlu0 %2742
  %v2744 = vlaneseq
  %v2745 = vshrl.u32 %v2744, 7
  %v2746 = vsub.s32 2, %v2745
  %v2747 = vrot.slane %v2667, %v2746
  %2749 = vbcast.lane.b32.xlu0 %v2747, 256
  %v2750 = vpop.permute.xlu0 %2749
  %v2751 = vlaneseq
  %v2752 = vshrl.u32 %v2751, 7
  %v2753 = vsub.s32 3, %v2752
  %v2754 = vrot.slane %v2667, %v2753
  %2756 = vbcast.lane.b32.xlu0 %v2754, 256
  %v2757 = vpop.permute.xlu0 %2756
  %v2758 = vlaneseq
  %v2759 = vshrl.u32 %v2758, 7
  %v2760 = vsub.s32 4, %v2759
  %v2761 = vrot.slane %v2667, %v2760
  %2763 = vbcast.lane.b32.xlu0 %v2761, 256
  %v2764 = vpop.permute.xlu0 %2763
  %v2765 = vlaneseq
  %v2766 = vshrl.u32 %v2765, 7
  %v2767 = vsub.s32 5, %v2766
  %v2768 = vrot.slane %v2667, %v2767
  %2770 = vbcast.lane.b32.xlu0 %v2768, 256
  %v2771 = vpop.permute.xlu0 %2770
  %v2772 = vlaneseq
  %v2773 = vshrl.u32 %v2772, 7
  %v2774 = vsub.s32 6, %v2773
  %v2775 = vrot.slane %v2667, %v2774
  %2777 = vbcast.lane.b32.xlu0 %v2775, 256
  %v2778 = vpop.permute.xlu0 %2777
  %v2779 = vlaneseq
  %v2780 = vshrl.u32 %v2779, 7
  %v2781 = vsub.s32 7, %v2780
  %v2782 = vrot.slane %v2667, %v2781
  %2784 = vbcast.lane.b32.xlu0 %v2782, 256
  %v2785 = vpop.permute.xlu0 %2784
  %v2786 = vlaneseq
  %v2787 = vshrl.u32 %v2786, 7
  %v2788 = vsub.s32 0, %v2787
  %v2789 = vrot.slane %v2669, %v2788
  %2791 = vbcast.lane.b32.xlu0 %v2789, 256
  %v2792 = vpop.permute.xlu0 %2791
  %v2793 = vlaneseq
  %v2794 = vshrl.u32 %v2793, 7
  %v2795 = vsub.s32 1, %v2794
  %v2796 = vrot.slane %v2669, %v2795
  %2798 = vbcast.lane.b32.xlu0 %v2796, 256
  %v2799 = vpop.permute.xlu0 %2798
  %v2800 = vlaneseq
  %v2801 = vshrl.u32 %v2800, 7
  %v2802 = vsub.s32 2, %v2801
  %v2803 = vrot.slane %v2669, %v2802
  %2805 = vbcast.lane.b32.xlu0 %v2803, 256
  %v2806 = vpop.permute.xlu0 %2805
  %v2807 = vlaneseq
  %v2808 = vshrl.u32 %v2807, 7
  %v2809 = vsub.s32 3, %v2808
  %v2810 = vrot.slane %v2669, %v2809
  %2812 = vbcast.lane.b32.xlu0 %v2810, 256
  %v2813 = vpop.permute.xlu0 %2812
  %v2814 = vlaneseq
  %v2815 = vshrl.u32 %v2814, 7
  %v2816 = vsub.s32 4, %v2815
  %v2817 = vrot.slane %v2669, %v2816
  %2819 = vbcast.lane.b32.xlu0 %v2817, 256
  %v2820 = vpop.permute.xlu0 %2819
  %v2821 = vlaneseq
  %v2822 = vshrl.u32 %v2821, 7
  %v2823 = vsub.s32 5, %v2822
  %v2824 = vrot.slane %v2669, %v2823
  %2826 = vbcast.lane.b32.xlu0 %v2824, 256
  %v2827 = vpop.permute.xlu0 %2826
  %v2828 = vlaneseq
  %v2829 = vshrl.u32 %v2828, 7
  %v2830 = vsub.s32 6, %v2829
  %v2831 = vrot.slane %v2669, %v2830
  %2833 = vbcast.lane.b32.xlu0 %v2831, 256
  %v2834 = vpop.permute.xlu0 %2833
  %v2835 = vlaneseq
  %v2836 = vshrl.u32 %v2835, 7
  %v2837 = vsub.s32 7, %v2836
  %v2838 = vrot.slane %v2669, %v2837
  %2840 = vbcast.lane.b32.xlu0 %v2838, 256
  %v2841 = vpop.permute.xlu0 %2840
  %v2842 = vlaneseq
  %v2843 = vshrl.u32 %v2842, 7
  %v2844 = vsub.s32 0, %v2843
  %v2845 = vrot.slane %v2671, %v2844
  %2847 = vbcast.lane.b32.xlu0 %v2845, 256
  %v2848 = vpop.permute.xlu0 %2847
  %v2849 = vlaneseq
  %v2850 = vshrl.u32 %v2849, 7
  %v2851 = vsub.s32 1, %v2850
  %v2852 = vrot.slane %v2671, %v2851
  %2854 = vbcast.lane.b32.xlu0 %v2852, 256
  %v2855 = vpop.permute.xlu0 %2854
  %v2856 = vlaneseq
  %v2857 = vshrl.u32 %v2856, 7
  %v2858 = vsub.s32 2, %v2857
  %v2859 = vrot.slane %v2671, %v2858
  %2861 = vbcast.lane.b32.xlu0 %v2859, 256
  %v2862 = vpop.permute.xlu0 %2861
  %v2863 = vlaneseq
  %v2864 = vshrl.u32 %v2863, 7
  %v2865 = vsub.s32 3, %v2864
  %v2866 = vrot.slane %v2671, %v2865
  %2868 = vbcast.lane.b32.xlu0 %v2866, 256
  %v2869 = vpop.permute.xlu0 %2868
  %v2870 = vlaneseq
  %v2871 = vshrl.u32 %v2870, 7
  %v2872 = vsub.s32 4, %v2871
  %v2873 = vrot.slane %v2671, %v2872
  %2875 = vbcast.lane.b32.xlu0 %v2873, 256
  %v2876 = vpop.permute.xlu0 %2875
  %v2877 = vlaneseq
  %v2878 = vshrl.u32 %v2877, 7
  %v2879 = vsub.s32 5, %v2878
  %v2880 = vrot.slane %v2671, %v2879
  %2882 = vbcast.lane.b32.xlu0 %v2880, 256
  %v2883 = vpop.permute.xlu0 %2882
  %v2884 = vlaneseq
  %v2885 = vshrl.u32 %v2884, 7
  %v2886 = vsub.s32 6, %v2885
  %v2887 = vrot.slane %v2671, %v2886
  %2889 = vbcast.lane.b32.xlu0 %v2887, 256
  %v2890 = vpop.permute.xlu0 %2889
  %v2891 = vlaneseq
  %v2892 = vshrl.u32 %v2891, 7
  %v2893 = vsub.s32 7, %v2892
  %v2894 = vrot.slane %v2671, %v2893
  %2896 = vbcast.lane.b32.xlu0 %v2894, 256
  %v2897 = vpop.permute.xlu0 %2896
  %v2898 = vlaneseq
  %v2899 = vshrl.u32 %v2898, 7
  %v2900 = vsub.s32 0, %v2899
  %v2901 = vrot.slane %v2673, %v2900
  %2903 = vbcast.lane.b32.xlu0 %v2901, 256
  %v2904 = vpop.permute.xlu0 %2903
  %v2905 = vlaneseq
  %v2906 = vshrl.u32 %v2905, 7
  %v2907 = vsub.s32 1, %v2906
  %v2908 = vrot.slane %v2673, %v2907
  %2910 = vbcast.lane.b32.xlu0 %v2908, 256
  %v2911 = vpop.permute.xlu0 %2910
  %v2912 = vlaneseq
  %v2913 = vshrl.u32 %v2912, 7
  %v2914 = vsub.s32 2, %v2913
  %v2915 = vrot.slane %v2673, %v2914
  %2917 = vbcast.lane.b32.xlu0 %v2915, 256
  %v2918 = vpop.permute.xlu0 %2917
  %v2919 = vlaneseq
  %v2920 = vshrl.u32 %v2919, 7
  %v2921 = vsub.s32 3, %v2920
  %v2922 = vrot.slane %v2673, %v2921
  %2924 = vbcast.lane.b32.xlu0 %v2922, 256
  %v2925 = vpop.permute.xlu0 %2924
  %v2926 = vmul.f32 %v1438, %v2680
  %v2927 = vmul.f32 %v1439, %v2680
  %v2928 = vmul.f32 %v1440, %v2680
  %v2929 = vmul.f32 %v1441, %v2680
  %v2930 = vmul.f32 %v1442, %v2687
  %v2931 = vmul.f32 %v1443, %v2687
  %v2932 = vmul.f32 %v1444, %v2687
  %v2933 = vmul.f32 %v1445, %v2687
  %v2934 = vmul.f32 %v1446, %v2694
  %v2935 = vmul.f32 %v1447, %v2694
  %v2936 = vmul.f32 %v1448, %v2694
  %v2937 = vmul.f32 %v1449, %v2694
  %v2938 = vmul.f32 %v1450, %v2701
  %v2939 = vmul.f32 %v1451, %v2701
  %v2940 = vmul.f32 %v1452, %v2701
  %v2941 = vmul.f32 %v1453, %v2701
  %v2942 = vmul.f32 %v1454, %v2708
  %v2943 = vmul.f32 %v1455, %v2708
  %v2944 = vmul.f32 %v1456, %v2708
  %v2945 = vmul.f32 %v1457, %v2708
  %v2946 = vmul.f32 %v1458, %v2715
  %v2947 = vmul.f32 %v1459, %v2715
  %v2948 = vmul.f32 %v1460, %v2715
  %v2949 = vmul.f32 %v1461, %v2715
  %v2950 = vmul.f32 %v1462, %v2722
  %v2951 = vmul.f32 %v1463, %v2722
  %v2952 = vmul.f32 %v1464, %v2722
  %v2953 = vmul.f32 %v1465, %v2722
  %v2954 = vmul.f32 %v1466, %v2729
  %v2955 = vmul.f32 %v1467, %v2729
  %v2956 = vmul.f32 %v1468, %v2729
  %v2957 = vmul.f32 %v1469, %v2729
  %v2958 = vmul.f32 %v1470, %v2736
  %v2959 = vmul.f32 %v1471, %v2736
  %v2960 = vmul.f32 %v1472, %v2736
  %v2961 = vmul.f32 %v1473, %v2736
  %v2962 = vmul.f32 %v1474, %v2743
  %v2963 = vmul.f32 %v1475, %v2743
  %v2964 = vmul.f32 %v1476, %v2743
  %v2965 = vmul.f32 %v1477, %v2743
  %v2966 = vmul.f32 %v1478, %v2750
  %v2967 = vmul.f32 %v1479, %v2750
  %v2968 = vmul.f32 %v1480, %v2750
  %v2969 = vmul.f32 %v1481, %v2750
  %v2970 = vmul.f32 %v1482, %v2757
  %v2971 = vmul.f32 %v1483, %v2757
  %v2972 = vmul.f32 %v1484, %v2757
  %v2973 = vmul.f32 %v1485, %v2757
  %v2974 = vmul.f32 %v1486, %v2764
  %v2975 = vmul.f32 %v1487, %v2764
  %v2976 = vmul.f32 %v1488, %v2764
  %v2977 = vmul.f32 %v1489, %v2764
  %v2978 = vmul.f32 %v1490, %v2771
  %v2979 = vmul.f32 %v1491, %v2771
  %v2980 = vmul.f32 %v1492, %v2771
  %v2981 = vmul.f32 %v1493, %v2771
  %v2982 = vmul.f32 %v1494, %v2778
  %v2983 = vmul.f32 %v1495, %v2778
  %v2984 = vmul.f32 %v1496, %v2778
  %v2985 = vmul.f32 %v1497, %v2778
  %v2986 = vmul.f32 %v1498, %v2785
  %v2987 = vmul.f32 %v1499, %v2785
  %v2988 = vmul.f32 %v1500, %v2785
  %v2989 = vmul.f32 %v1501, %v2785
  %v2990 = vmul.f32 %v1502, %v2792
  %v2991 = vmul.f32 %v1503, %v2792
  %v2992 = vmul.f32 %v1504, %v2792
  %v2993 = vmul.f32 %v1505, %v2792
  %v2994 = vmul.f32 %v1506, %v2799
  %v2995 = vmul.f32 %v1507, %v2799
  %v2996 = vmul.f32 %v1508, %v2799
  %v2997 = vmul.f32 %v1509, %v2799
  %v2998 = vmul.f32 %v1510, %v2806
  %v2999 = vmul.f32 %v1511, %v2806
  %v3000 = vmul.f32 %v1512, %v2806
  %v3001 = vmul.f32 %v1513, %v2806
  %v3002 = vmul.f32 %v1514, %v2813
  %v3003 = vmul.f32 %v1515, %v2813
  %v3004 = vmul.f32 %v1516, %v2813
  %v3005 = vmul.f32 %v1517, %v2813
  %v3006 = vmul.f32 %v1518, %v2820
  %v3007 = vmul.f32 %v1519, %v2820
  %v3008 = vmul.f32 %v1520, %v2820
  %v3009 = vmul.f32 %v1521, %v2820
  %v3010 = vmul.f32 %v1522, %v2827
  %v3011 = vmul.f32 %v1523, %v2827
  %v3012 = vmul.f32 %v1524, %v2827
  %v3013 = vmul.f32 %v1525, %v2827
  %v3014 = vmul.f32 %v1526, %v2834
  %v3015 = vmul.f32 %v1527, %v2834
  %v3016 = vmul.f32 %v1528, %v2834
  %v3017 = vmul.f32 %v1529, %v2834
  %v3018 = vmul.f32 %v1530, %v2841
  %v3019 = vmul.f32 %v1531, %v2841
  %v3020 = vmul.f32 %v1532, %v2841
  %v3021 = vmul.f32 %v1533, %v2841
  %v3022 = vmul.f32 %v1534, %v2848
  %v3023 = vmul.f32 %v1535, %v2848
  %v3024 = vmul.f32 %v1536, %v2848
  %v3025 = vmul.f32 %v1537, %v2848
  %v3026 = vmul.f32 %v1538, %v2855
  %v3027 = vmul.f32 %v1539, %v2855
  %v3028 = vmul.f32 %v1540, %v2855
  %v3029 = vmul.f32 %v1541, %v2855
  %v3030 = vmul.f32 %v1542, %v2862
  %v3031 = vmul.f32 %v1543, %v2862
  %v3032 = vmul.f32 %v1544, %v2862
  %v3033 = vmul.f32 %v1545, %v2862
  %v3034 = vmul.f32 %v1546, %v2869
  %v3035 = vmul.f32 %v1547, %v2869
  %v3036 = vmul.f32 %v1548, %v2869
  %v3037 = vmul.f32 %v1549, %v2869
  %v3038 = vmul.f32 %v1550, %v2876
  %v3039 = vmul.f32 %v1551, %v2876
  %v3040 = vmul.f32 %v1552, %v2876
  %v3041 = vmul.f32 %v1553, %v2876
  %v3042 = vmul.f32 %v1554, %v2883
  %v3043 = vmul.f32 %v1555, %v2883
  %v3044 = vmul.f32 %v1556, %v2883
  %v3045 = vmul.f32 %v1557, %v2883
  %v3046 = vmul.f32 %v1558, %v2890
  %v3047 = vmul.f32 %v1559, %v2890
  %v3048 = vmul.f32 %v1560, %v2890
  %v3049 = vmul.f32 %v1561, %v2890
  %v3050 = vmul.f32 %v1562, %v2897
  %v3051 = vmul.f32 %v1563, %v2897
  %v3052 = vmul.f32 %v1564, %v2897
  %v3053 = vmul.f32 %v1565, %v2897
  %v3054 = vmul.f32 %v1566, %v2904
  %v3055 = vmul.f32 %v1567, %v2904
  %v3056 = vmul.f32 %v1568, %v2904
  %v3057 = vmul.f32 %v1569, %v2904
  %v3058 = vmul.f32 %v1570, %v2911
  %v3059 = vmul.f32 %v1571, %v2911
  %v3060 = vmul.f32 %v1572, %v2911
  %v3061 = vmul.f32 %v1573, %v2911
  %v3062 = vmul.f32 %v1574, %v2918
  %v3063 = vmul.f32 %v1575, %v2918
  %v3064 = vmul.f32 %v1576, %v2918
  %v3065 = vmul.f32 %v1577, %v2918
  %v3066 = vmul.f32 %v1578, %v2925
  %v3067 = vmul.f32 %v1579, %v2925
  %v3068 = vmul.f32 %v1580, %v2925
  %v3069 = vmul.f32 %v1581, %v2925
  %v3070 = vadd.f32 %v2926, %v2930
  %v3071 = vadd.f32 %v2927, %v2931
  %v3072 = vadd.f32 %v2928, %v2932
  %v3073 = vadd.f32 %v2929, %v2933
  %v3074 = vadd.f32 %v3070, %v2934
  %v3075 = vadd.f32 %v3071, %v2935
  %v3076 = vadd.f32 %v3072, %v2936
  %v3077 = vadd.f32 %v3073, %v2937
  %v3078 = vadd.f32 %v3074, %v2950
  %v3079 = vadd.f32 %v3075, %v2951
  %v3080 = vadd.f32 %v3076, %v2952
  %v3081 = vadd.f32 %v3077, %v2953
  %v3082 = vadd.f32 %v3078, %v2954
  %v3083 = vadd.f32 %v3079, %v2955
  %v3084 = vadd.f32 %v3080, %v2956
  %v3085 = vadd.f32 %v3081, %v2957
  %v3086 = vadd.f32 %v3082, %v2958
  %v3087 = vadd.f32 %v3083, %v2959
  %v3088 = vadd.f32 %v3084, %v2960
  %v3089 = vadd.f32 %v3085, %v2961
  %v3090 = vadd.f32 %v3086, %v2974
  %v3091 = vadd.f32 %v3087, %v2975
  %v3092 = vadd.f32 %v3088, %v2976
  %v3093 = vadd.f32 %v3089, %v2977
  %v3094 = vadd.f32 %v3090, %v2978
  %v3095 = vadd.f32 %v3091, %v2979
  %v3096 = vadd.f32 %v3092, %v2980
  %v3097 = vadd.f32 %v3093, %v2981
  %v3098 = vadd.f32 %v3094, %v2982
  %v3099 = vadd.f32 %v3095, %v2983
  %v3100 = vadd.f32 %v3096, %v2984
  %v3101 = vadd.f32 %v3097, %v2985
  %v3102 = vadd.f32 %v2938, %v2942
  %v3103 = vadd.f32 %v2939, %v2943
  %v3104 = vadd.f32 %v2940, %v2944
  %v3105 = vadd.f32 %v2941, %v2945
  %v3106 = vadd.f32 %v3102, %v2946
  %v3107 = vadd.f32 %v3103, %v2947
  %v3108 = vadd.f32 %v3104, %v2948
  %v3109 = vadd.f32 %v3105, %v2949
  %v3110 = vadd.f32 %v3106, %v2962
  %v3111 = vadd.f32 %v3107, %v2963
  %v3112 = vadd.f32 %v3108, %v2964
  %v3113 = vadd.f32 %v3109, %v2965
  %v3114 = vadd.f32 %v3110, %v2966
  %v3115 = vadd.f32 %v3111, %v2967
  %v3116 = vadd.f32 %v3112, %v2968
  %v3117 = vadd.f32 %v3113, %v2969
  %v3118 = vadd.f32 %v3114, %v2970
  %v3119 = vadd.f32 %v3115, %v2971
  %v3120 = vadd.f32 %v3116, %v2972
  %v3121 = vadd.f32 %v3117, %v2973
  %v3122 = vadd.f32 %v3118, %v2986
  %v3123 = vadd.f32 %v3119, %v2987
  %v3124 = vadd.f32 %v3120, %v2988
  %v3125 = vadd.f32 %v3121, %v2989
  %v3126 = vadd.f32 %v3122, %v2990
  %v3127 = vadd.f32 %v3123, %v2991
  %v3128 = vadd.f32 %v3124, %v2992
  %v3129 = vadd.f32 %v3125, %v2993
  %v3130 = vadd.f32 %v3126, %v2994
  %v3131 = vadd.f32 %v3127, %v2995
  %v3132 = vadd.f32 %v3128, %v2996
  %v3133 = vadd.f32 %v3129, %v2997
  %v3134 = vadd.f32 %v2998, %v3002
  %v3135 = vadd.f32 %v2999, %v3003
  %v3136 = vadd.f32 %v3000, %v3004
  %v3137 = vadd.f32 %v3001, %v3005
  %v3138 = vadd.f32 %v3134, %v3006
  %v3139 = vadd.f32 %v3135, %v3007
  %v3140 = vadd.f32 %v3136, %v3008
  %v3141 = vadd.f32 %v3137, %v3009
  %v3142 = vadd.f32 %v3138, %v3022
  %v3143 = vadd.f32 %v3139, %v3023
  %v3144 = vadd.f32 %v3140, %v3024
  %v3145 = vadd.f32 %v3141, %v3025
  %v3146 = vadd.f32 %v3142, %v3026
  %v3147 = vadd.f32 %v3143, %v3027
  %v3148 = vadd.f32 %v3144, %v3028
  %v3149 = vadd.f32 %v3145, %v3029
  %v3150 = vadd.f32 %v3146, %v3030
  %v3151 = vadd.f32 %v3147, %v3031
  %v3152 = vadd.f32 %v3148, %v3032
  %v3153 = vadd.f32 %v3149, %v3033
  %v3154 = vadd.f32 %v3150, %v3046
  %v3155 = vadd.f32 %v3151, %v3047
  %v3156 = vadd.f32 %v3152, %v3048
  %v3157 = vadd.f32 %v3153, %v3049
  %v3158 = vadd.f32 %v3154, %v3050
  %v3159 = vadd.f32 %v3155, %v3051
  %v3160 = vadd.f32 %v3156, %v3052
  %v3161 = vadd.f32 %v3157, %v3053
  %v3162 = vadd.f32 %v3158, %v3054
  %v3163 = vadd.f32 %v3159, %v3055
  %v3164 = vadd.f32 %v3160, %v3056
  %v3165 = vadd.f32 %v3161, %v3057
  %v3166 = vadd.f32 %v3010, %v3014
  %v3167 = vadd.f32 %v3011, %v3015
  %v3168 = vadd.f32 %v3012, %v3016
  %v3169 = vadd.f32 %v3013, %v3017
  %v3170 = vadd.f32 %v3166, %v3018
  %v3171 = vadd.f32 %v3167, %v3019
  %v3172 = vadd.f32 %v3168, %v3020
  %v3173 = vadd.f32 %v3169, %v3021
  %v3174 = vadd.f32 %v3170, %v3034
  %v3175 = vadd.f32 %v3171, %v3035
  %v3176 = vadd.f32 %v3172, %v3036
  %v3177 = vadd.f32 %v3173, %v3037
  %v3178 = vadd.f32 %v3174, %v3038
  %v3179 = vadd.f32 %v3175, %v3039
  %v3180 = vadd.f32 %v3176, %v3040
  %v3181 = vadd.f32 %v3177, %v3041
  %v3182 = vadd.f32 %v3178, %v3042
  %v3183 = vadd.f32 %v3179, %v3043
  %v3184 = vadd.f32 %v3180, %v3044
  %v3185 = vadd.f32 %v3181, %v3045
  %v3186 = vadd.f32 %v3182, %v3058
  %v3187 = vadd.f32 %v3183, %v3059
  %v3188 = vadd.f32 %v3184, %v3060
  %v3189 = vadd.f32 %v3185, %v3061
  %v3190 = vadd.f32 %v3186, %v3062
  %v3191 = vadd.f32 %v3187, %v3063
  %v3192 = vadd.f32 %v3188, %v3064
  %v3193 = vadd.f32 %v3189, %v3065
  %v3194 = vadd.f32 %v3190, %v3066
  %v3195 = vadd.f32 %v3191, %v3067
  %v3196 = vadd.f32 %v3192, %v3068
  %v3197 = vadd.f32 %v3193, %v3069
  %s3198 = smul.u32 2048, 1
  %s3199 = sshll.u32 %s3198, 4
  %3200 = dma.done [#allocation3], %s3199
  %v3201 = vld [vmem:[#allocation2] sm:$0xff]
  %v3202 = vld [vmem:[#allocation2 + $0x8] sm:$0xff]
  %v3203 = vld [vmem:[#allocation2 + $0x10] sm:$0xff]
  %v3204 = vld [vmem:[#allocation2 + $0x18] sm:$0xff]
  %v3205 = vld [vmem:[#allocation2 + $0x20] sm:$0xff]
  %v3206 = vld [vmem:[#allocation2 + $0x28] sm:$0xff]
  %v3207 = vld [vmem:[#allocation2 + $0x30] sm:$0xff]
  %v3208 = vld [vmem:[#allocation2 + $0x38] sm:$0xff]
  %v3209 = vld [vmem:[#allocation2 + $0x40] sm:$0xff]
  %v3210 = vld [vmem:[#allocation2 + $0x48] sm:$0xff]
  %v3211 = vld [vmem:[#allocation2 + $0x50] sm:$0xff]
  %v3212 = vld [vmem:[#allocation2 + $0x58] sm:$0xff]
  %v3213 = vld [vmem:[#allocation2 + $0x60] sm:$0xff]
  %v3214 = vld [vmem:[#allocation2 + $0x68] sm:$0xff]
  %v3215 = vld [vmem:[#allocation2 + $0x70] sm:$0xff]
  %v3216 = vld [vmem:[#allocation2 + $0x78] sm:$0xff]
  %v3217 = vld [vmem:[#allocation2 + $0x80] sm:$0xff]
  %v3218 = vld [vmem:[#allocation2 + $0x88] sm:$0xff]
  %v3219 = vld [vmem:[#allocation2 + $0x90] sm:$0xff]
  %v3220 = vld [vmem:[#allocation2 + $0x98] sm:$0xff]
  %v3221 = vld [vmem:[#allocation2 + $0xa0] sm:$0xff]
  %v3222 = vld [vmem:[#allocation2 + $0xa8] sm:$0xff]
  %v3223 = vld [vmem:[#allocation2 + $0xb0] sm:$0xff]
  %v3224 = vld [vmem:[#allocation2 + $0xb8] sm:$0xff]
  %v3225 = vld [vmem:[#allocation2 + $0xc0] sm:$0xff]
  %v3226 = vld [vmem:[#allocation2 + $0xc8] sm:$0xff]
  %v3227 = vld [vmem:[#allocation2 + $0xd0] sm:$0xff]
  %v3228 = vld [vmem:[#allocation2 + $0xd8] sm:$0xff]
  %v3229 = vld [vmem:[#allocation2 + $0xe0] sm:$0xff]
  %v3230 = vld [vmem:[#allocation2 + $0xe8] sm:$0xff]
  %v3231 = vld [vmem:[#allocation2 + $0xf0] sm:$0xff]
  %v3232 = vld [vmem:[#allocation2 + $0xf8] sm:$0xff]
  %v3233 = vld [vmem:[#allocation2 + $0x100] sm:$0xff]
  %v3234 = vld [vmem:[#allocation2 + $0x108] sm:$0xff]
  %v3235 = vld [vmem:[#allocation2 + $0x110] sm:$0xff]
  %v3236 = vld [vmem:[#allocation2 + $0x118] sm:$0xff]
  %v3237 = vld [vmem:[#allocation2 + $0x120] sm:$0xff]
  %v3238 = vld [vmem:[#allocation2 + $0x128] sm:$0xff]
  %v3239 = vld [vmem:[#allocation2 + $0x130] sm:$0xff]
  %v3240 = vld [vmem:[#allocation2 + $0x138] sm:$0xff]
  %v3241 = vld [vmem:[#allocation2 + $0x140] sm:$0xff]
  %v3242 = vld [vmem:[#allocation2 + $0x148] sm:$0xff]
  %v3243 = vld [vmem:[#allocation2 + $0x150] sm:$0xff]
  %v3244 = vld [vmem:[#allocation2 + $0x158] sm:$0xff]
  %v3245 = vld [vmem:[#allocation2 + $0x160] sm:$0xff]
  %v3246 = vld [vmem:[#allocation2 + $0x168] sm:$0xff]
  %v3247 = vld [vmem:[#allocation2 + $0x170] sm:$0xff]
  %v3248 = vld [vmem:[#allocation2 + $0x178] sm:$0xff]
  %v3249 = vld [vmem:[#allocation2 + $0x180] sm:$0xff]
  %v3250 = vld [vmem:[#allocation2 + $0x188] sm:$0xff]
  %v3251 = vld [vmem:[#allocation2 + $0x190] sm:$0xff]
  %v3252 = vld [vmem:[#allocation2 + $0x198] sm:$0xff]
  %v3253 = vld [vmem:[#allocation2 + $0x1a0] sm:$0xff]
  %v3254 = vld [vmem:[#allocation2 + $0x1a8] sm:$0xff]
  %v3255 = vld [vmem:[#allocation2 + $0x1b0] sm:$0xff]
  %v3256 = vld [vmem:[#allocation2 + $0x1b8] sm:$0xff]
  %v3257 = vld [vmem:[#allocation2 + $0x1c0] sm:$0xff]
  %v3258 = vld [vmem:[#allocation2 + $0x1c8] sm:$0xff]
  %v3259 = vld [vmem:[#allocation2 + $0x1d0] sm:$0xff]
  %v3260 = vld [vmem:[#allocation2 + $0x1d8] sm:$0xff]
  %v3261 = vld [vmem:[#allocation2 + $0x1e0] sm:$0xff]
  %v3262 = vld [vmem:[#allocation2 + $0x1e8] sm:$0xff]
  %v3263 = vld [vmem:[#allocation2 + $0x1f0] sm:$0xff]
  %v3264 = vld [vmem:[#allocation2 + $0x1f8] sm:$0xff]
  %v3265 = vld [vmem:[#allocation2 + $0x200] sm:$0xff]
  %v3266 = vld [vmem:[#allocation2 + $0x208] sm:$0xff]
  %v3267 = vld [vmem:[#allocation2 + $0x210] sm:$0xff]
  %v3268 = vld [vmem:[#allocation2 + $0x218] sm:$0xff]
  %v3269 = vld [vmem:[#allocation2 + $0x220] sm:$0xff]
  %v3270 = vld [vmem:[#allocation2 + $0x228] sm:$0xff]
  %v3271 = vld [vmem:[#allocation2 + $0x230] sm:$0xff]
  %v3272 = vld [vmem:[#allocation2 + $0x238] sm:$0xff]
  %v3273 = vld [vmem:[#allocation2 + $0x240] sm:$0xff]
  %v3274 = vld [vmem:[#allocation2 + $0x248] sm:$0xff]
  %v3275 = vld [vmem:[#allocation2 + $0x250] sm:$0xff]
  %v3276 = vld [vmem:[#allocation2 + $0x258] sm:$0xff]
  %v3277 = vld [vmem:[#allocation2 + $0x260] sm:$0xff]
  %v3278 = vld [vmem:[#allocation2 + $0x268] sm:$0xff]
  %v3279 = vld [vmem:[#allocation2 + $0x270] sm:$0xff]
  %v3280 = vld [vmem:[#allocation2 + $0x278] sm:$0xff]
  %v3281 = vld [vmem:[#allocation2 + $0x280] sm:$0xff]
  %v3282 = vld [vmem:[#allocation2 + $0x288] sm:$0xff]
  %v3283 = vld [vmem:[#allocation2 + $0x290] sm:$0xff]
  %v3284 = vld [vmem:[#allocation2 + $0x298] sm:$0xff]
  %v3285 = vld [vmem:[#allocation2 + $0x2a0] sm:$0xff]
  %v3286 = vld [vmem:[#allocation2 + $0x2a8] sm:$0xff]
  %v3287 = vld [vmem:[#allocation2 + $0x2b0] sm:$0xff]
  %v3288 = vld [vmem:[#allocation2 + $0x2b8] sm:$0xff]
  %v3289 = vld [vmem:[#allocation2 + $0x2c0] sm:$0xff]
  %v3290 = vld [vmem:[#allocation2 + $0x2c8] sm:$0xff]
  %v3291 = vld [vmem:[#allocation2 + $0x2d0] sm:$0xff]
  %v3292 = vld [vmem:[#allocation2 + $0x2d8] sm:$0xff]
  %v3293 = vld [vmem:[#allocation2 + $0x2e0] sm:$0xff]
  %v3294 = vld [vmem:[#allocation2 + $0x2e8] sm:$0xff]
  %v3295 = vld [vmem:[#allocation2 + $0x2f0] sm:$0xff]
  %v3296 = vld [vmem:[#allocation2 + $0x2f8] sm:$0xff]
  %v3297 = vld [vmem:[#allocation2 + $0x300] sm:$0xff]
  %v3298 = vld [vmem:[#allocation2 + $0x308] sm:$0xff]
  %v3299 = vld [vmem:[#allocation2 + $0x310] sm:$0xff]
  %v3300 = vld [vmem:[#allocation2 + $0x318] sm:$0xff]
  %v3301 = vld [vmem:[#allocation2 + $0x320] sm:$0xff]
  %v3302 = vld [vmem:[#allocation2 + $0x328] sm:$0xff]
  %v3303 = vld [vmem:[#allocation2 + $0x330] sm:$0xff]
  %v3304 = vld [vmem:[#allocation2 + $0x338] sm:$0xff]
  %v3305 = vld [vmem:[#allocation2 + $0x340] sm:$0xff]
  %v3306 = vld [vmem:[#allocation2 + $0x348] sm:$0xff]
  %v3307 = vld [vmem:[#allocation2 + $0x350] sm:$0xff]
  %v3308 = vld [vmem:[#allocation2 + $0x358] sm:$0xff]
  %v3309 = vld [vmem:[#allocation2 + $0x360] sm:$0xff]
  %v3310 = vld [vmem:[#allocation2 + $0x368] sm:$0xff]
  %v3311 = vld [vmem:[#allocation2 + $0x370] sm:$0xff]
  %v3312 = vld [vmem:[#allocation2 + $0x378] sm:$0xff]
  %v3313 = vld [vmem:[#allocation2 + $0x380] sm:$0xff]
  %v3314 = vld [vmem:[#allocation2 + $0x388] sm:$0xff]
  %v3315 = vld [vmem:[#allocation2 + $0x390] sm:$0xff]
  %v3316 = vld [vmem:[#allocation2 + $0x398] sm:$0xff]
  %v3317 = vld [vmem:[#allocation2 + $0x3a0] sm:$0xff]
  %v3318 = vld [vmem:[#allocation2 + $0x3a8] sm:$0xff]
  %v3319 = vld [vmem:[#allocation2 + $0x3b0] sm:$0xff]
  %v3320 = vld [vmem:[#allocation2 + $0x3b8] sm:$0xff]
  %v3321 = vld [vmem:[#allocation2 + $0x3c0] sm:$0xff]
  %v3322 = vld [vmem:[#allocation2 + $0x3c8] sm:$0xff]
  %v3323 = vld [vmem:[#allocation2 + $0x3d0] sm:$0xff]
  %v3324 = vld [vmem:[#allocation2 + $0x3d8] sm:$0xff]
  %v3325 = vld [vmem:[#allocation2 + $0x3e0] sm:$0xff]
  %v3326 = vld [vmem:[#allocation2 + $0x3e8] sm:$0xff]
  %v3327 = vld [vmem:[#allocation2 + $0x3f0] sm:$0xff]
  %v3328 = vld [vmem:[#allocation2 + $0x3f8] sm:$0xff]
  %v3329 = vld [vmem:[#allocation2 + $0x400] sm:$0xff]
  %v3330 = vld [vmem:[#allocation2 + $0x408] sm:$0xff]
  %v3331 = vld [vmem:[#allocation2 + $0x410] sm:$0xff]
  %v3332 = vld [vmem:[#allocation2 + $0x418] sm:$0xff]
  %v3333 = vld [vmem:[#allocation2 + $0x420] sm:$0xff]
  %v3334 = vld [vmem:[#allocation2 + $0x428] sm:$0xff]
  %v3335 = vld [vmem:[#allocation2 + $0x430] sm:$0xff]
  %v3336 = vld [vmem:[#allocation2 + $0x438] sm:$0xff]
  %v3337 = vld [vmem:[#allocation2 + $0x440] sm:$0xff]
  %v3338 = vld [vmem:[#allocation2 + $0x448] sm:$0xff]
  %v3339 = vld [vmem:[#allocation2 + $0x450] sm:$0xff]
  %v3340 = vld [vmem:[#allocation2 + $0x458] sm:$0xff]
  %v3341 = vld [vmem:[#allocation2 + $0x460] sm:$0xff]
  %v3342 = vld [vmem:[#allocation2 + $0x468] sm:$0xff]
  %v3343 = vld [vmem:[#allocation2 + $0x470] sm:$0xff]
  %v3344 = vld [vmem:[#allocation2 + $0x478] sm:$0xff]
  %v3345 = vld [vmem:[#allocation2 + $0x480] sm:$0xff]
  %v3346 = vld [vmem:[#allocation2 + $0x488] sm:$0xff]
  %v3347 = vld [vmem:[#allocation2 + $0x490] sm:$0xff]
  %v3348 = vld [vmem:[#allocation2 + $0x498] sm:$0xff]
  %v3349 = vld [vmem:[#allocation2 + $0x4a0] sm:$0xff]
  %v3350 = vld [vmem:[#allocation2 + $0x4a8] sm:$0xff]
  %v3351 = vld [vmem:[#allocation2 + $0x4b0] sm:$0xff]
  %v3352 = vld [vmem:[#allocation2 + $0x4b8] sm:$0xff]
  %v3353 = vld [vmem:[#allocation2 + $0x4c0] sm:$0xff]
  %v3354 = vld [vmem:[#allocation2 + $0x4c8] sm:$0xff]
  %v3355 = vld [vmem:[#allocation2 + $0x4d0] sm:$0xff]
  %v3356 = vld [vmem:[#allocation2 + $0x4d8] sm:$0xff]
  %v3357 = vld [vmem:[#allocation2 + $0x4e0] sm:$0xff]
  %v3358 = vld [vmem:[#allocation2 + $0x4e8] sm:$0xff]
  %v3359 = vld [vmem:[#allocation2 + $0x4f0] sm:$0xff]
  %v3360 = vld [vmem:[#allocation2 + $0x4f8] sm:$0xff]
  %v3361 = vld [vmem:[#allocation2 + $0x500] sm:$0xff]
  %v3362 = vld [vmem:[#allocation2 + $0x508] sm:$0xff]
  %v3363 = vld [vmem:[#allocation2 + $0x510] sm:$0xff]
  %v3364 = vld [vmem:[#allocation2 + $0x518] sm:$0xff]
  %v3365 = vld [vmem:[#allocation2 + $0x520] sm:$0xff]
  %v3366 = vld [vmem:[#allocation2 + $0x528] sm:$0xff]
  %v3367 = vld [vmem:[#allocation2 + $0x530] sm:$0xff]
  %v3368 = vld [vmem:[#allocation2 + $0x538] sm:$0xff]
  %v3369 = vld [vmem:[#allocation2 + $0x540] sm:$0xff]
  %v3370 = vld [vmem:[#allocation2 + $0x548] sm:$0xff]
  %v3371 = vld [vmem:[#allocation2 + $0x550] sm:$0xff]
  %v3372 = vld [vmem:[#allocation2 + $0x558] sm:$0xff]
  %v3373 = vld [vmem:[#allocation2 + $0x560] sm:$0xff]
  %v3374 = vld [vmem:[#allocation2 + $0x568] sm:$0xff]
  %v3375 = vld [vmem:[#allocation2 + $0x570] sm:$0xff]
  %v3376 = vld [vmem:[#allocation2 + $0x578] sm:$0xff]
  %v3377 = vld [vmem:[#allocation2 + $0x580] sm:$0xff]
  %v3378 = vld [vmem:[#allocation2 + $0x588] sm:$0xff]
  %v3379 = vld [vmem:[#allocation2 + $0x590] sm:$0xff]
  %v3380 = vld [vmem:[#allocation2 + $0x598] sm:$0xff]
  %v3381 = vld [vmem:[#allocation2 + $0x5a0] sm:$0xff]
  %v3382 = vld [vmem:[#allocation2 + $0x5a8] sm:$0xff]
  %v3383 = vld [vmem:[#allocation2 + $0x5b0] sm:$0xff]
  %v3384 = vld [vmem:[#allocation2 + $0x5b8] sm:$0xff]
  %v3385 = vld [vmem:[#allocation2 + $0x5c0] sm:$0xff]
  %v3386 = vld [vmem:[#allocation2 + $0x5c8] sm:$0xff]
  %v3387 = vld [vmem:[#allocation2 + $0x5d0] sm:$0xff]
  %v3388 = vld [vmem:[#allocation2 + $0x5d8] sm:$0xff]
  %v3389 = vld [vmem:[#allocation2 + $0x5e0] sm:$0xff]
  %v3390 = vld [vmem:[#allocation2 + $0x5e8] sm:$0xff]
  %v3391 = vld [vmem:[#allocation2 + $0x5f0] sm:$0xff]
  %v3392 = vld [vmem:[#allocation2 + $0x5f8] sm:$0xff]
  %v3393 = vld [vmem:[#allocation2 + $0x600] sm:$0xff]
  %v3394 = vld [vmem:[#allocation2 + $0x608] sm:$0xff]
  %v3395 = vld [vmem:[#allocation2 + $0x610] sm:$0xff]
  %v3396 = vld [vmem:[#allocation2 + $0x618] sm:$0xff]
  %v3397 = vld [vmem:[#allocation2 + $0x620] sm:$0xff]
  %v3398 = vld [vmem:[#allocation2 + $0x628] sm:$0xff]
  %v3399 = vld [vmem:[#allocation2 + $0x630] sm:$0xff]
  %v3400 = vld [vmem:[#allocation2 + $0x638] sm:$0xff]
  %v3401 = vld [vmem:[#allocation2 + $0x640] sm:$0xff]
  %v3402 = vld [vmem:[#allocation2 + $0x648] sm:$0xff]
  %v3403 = vld [vmem:[#allocation2 + $0x650] sm:$0xff]
  %v3404 = vld [vmem:[#allocation2 + $0x658] sm:$0xff]
  %v3405 = vld [vmem:[#allocation2 + $0x660] sm:$0xff]
  %v3406 = vld [vmem:[#allocation2 + $0x668] sm:$0xff]
  %v3407 = vld [vmem:[#allocation2 + $0x670] sm:$0xff]
  %v3408 = vld [vmem:[#allocation2 + $0x678] sm:$0xff]
  %v3409 = vld [vmem:[#allocation2 + $0x680] sm:$0xff]
  %v3410 = vld [vmem:[#allocation2 + $0x688] sm:$0xff]
  %v3411 = vld [vmem:[#allocation2 + $0x690] sm:$0xff]
  %v3412 = vld [vmem:[#allocation2 + $0x698] sm:$0xff]
  %v3413 = vld [vmem:[#allocation2 + $0x6a0] sm:$0xff]
  %v3414 = vld [vmem:[#allocation2 + $0x6a8] sm:$0xff]
  %v3415 = vld [vmem:[#allocation2 + $0x6b0] sm:$0xff]
  %v3416 = vld [vmem:[#allocation2 + $0x6b8] sm:$0xff]
  %v3417 = vld [vmem:[#allocation2 + $0x6c0] sm:$0xff]
  %v3418 = vld [vmem:[#allocation2 + $0x6c8] sm:$0xff]
  %v3419 = vld [vmem:[#allocation2 + $0x6d0] sm:$0xff]
  %v3420 = vld [vmem:[#allocation2 + $0x6d8] sm:$0xff]
  %v3421 = vld [vmem:[#allocation2 + $0x6e0] sm:$0xff]
  %v3422 = vld [vmem:[#allocation2 + $0x6e8] sm:$0xff]
  %v3423 = vld [vmem:[#allocation2 + $0x6f0] sm:$0xff]
  %v3424 = vld [vmem:[#allocation2 + $0x6f8] sm:$0xff]
  %v3425 = vld [vmem:[#allocation2 + $0x700] sm:$0xff]
  %v3426 = vld [vmem:[#allocation2 + $0x708] sm:$0xff]
  %v3427 = vld [vmem:[#allocation2 + $0x710] sm:$0xff]
  %v3428 = vld [vmem:[#allocation2 + $0x718] sm:$0xff]
  %v3429 = vld [vmem:[#allocation2 + $0x720] sm:$0xff]
  %v3430 = vld [vmem:[#allocation2 + $0x728] sm:$0xff]
  %v3431 = vld [vmem:[#allocation2 + $0x730] sm:$0xff]
  %v3432 = vld [vmem:[#allocation2 + $0x738] sm:$0xff]
  %v3433 = vld [vmem:[#allocation2 + $0x740] sm:$0xff]
  %v3434 = vld [vmem:[#allocation2 + $0x748] sm:$0xff]
  %v3435 = vld [vmem:[#allocation2 + $0x750] sm:$0xff]
  %v3436 = vld [vmem:[#allocation2 + $0x758] sm:$0xff]
  %v3437 = vld [vmem:[#allocation2 + $0x760] sm:$0xff]
  %v3438 = vld [vmem:[#allocation2 + $0x768] sm:$0xff]
  %v3439 = vld [vmem:[#allocation2 + $0x770] sm:$0xff]
  %v3440 = vld [vmem:[#allocation2 + $0x778] sm:$0xff]
  %v3441 = vld [vmem:[#allocation2 + $0x780] sm:$0xff]
  %v3442 = vld [vmem:[#allocation2 + $0x788] sm:$0xff]
  %v3443 = vld [vmem:[#allocation2 + $0x790] sm:$0xff]
  %v3444 = vld [vmem:[#allocation2 + $0x798] sm:$0xff]
  %v3445 = vld [vmem:[#allocation2 + $0x7a0] sm:$0xff]
  %v3446 = vld [vmem:[#allocation2 + $0x7a8] sm:$0xff]
  %v3447 = vld [vmem:[#allocation2 + $0x7b0] sm:$0xff]
  %v3448 = vld [vmem:[#allocation2 + $0x7b8] sm:$0xff]
  %v3449 = vld [vmem:[#allocation2 + $0x7c0] sm:$0xff]
  %v3450 = vld [vmem:[#allocation2 + $0x7c8] sm:$0xff]
  %v3451 = vld [vmem:[#allocation2 + $0x7d0] sm:$0xff]
  %v3452 = vld [vmem:[#allocation2 + $0x7d8] sm:$0xff]
  %v3453 = vld [vmem:[#allocation2 + $0x7e0] sm:$0xff]
  %v3454 = vld [vmem:[#allocation2 + $0x7e8] sm:$0xff]
  %v3455 = vld [vmem:[#allocation2 + $0x7f0] sm:$0xff]
  %v3456 = vld [vmem:[#allocation2 + $0x7f8] sm:$0xff]
  %v3457 = vld [vmem:[%s6] sm:$0x1]
  %v3459 = vlaneseq
  %v3460 = vshrl.u32 %v3459, 7
  %v3461 = vsub.s32 0, %v3460
  %v3462 = vrot.slane %v3457, %v3461
  %3464 = vmatprep.subr.mxu0 0.0
  %3465 = vmatpush1.msra.mxu0 %v3201
  %3466 = vmatprep.subr.mxu0 0.0
  %3467 = vmatpush1.msra.mxu0 %v3202
  %3468 = vmatprep.subr.mxu0 0.0
  %3469 = vmatpush1.msra.mxu0 %v3203
  %3470 = vmatprep.subr.mxu0 0.0
  %3471 = vmatpush1.msra.mxu0 %v3204
  %3472 = vmatprep.subr.mxu0 0.0
  %3473 = vmatpush1.msra.mxu0 %v3205
  %3474 = vmatprep.subr.mxu0 0.0
  %3475 = vmatpush1.msra.mxu0 %v3206
  %3476 = vmatprep.subr.mxu0 0.0
  %3477 = vmatpush1.msra.mxu0 %v3207
  %3478 = vmatprep.subr.mxu0 0.0
  %3479 = vmatpush1.msra.mxu0 %v3208
  %3480 = vmatprep.subr.mxu0 0.0
  %3481 = vmatpush1.msra.mxu0 %v3209
  %3482 = vmatprep.subr.mxu0 0.0
  %3483 = vmatpush1.msra.mxu0 %v3210
  %3484 = vmatprep.subr.mxu0 0.0
  %3485 = vmatpush1.msra.mxu0 %v3211
  %3486 = vmatprep.subr.mxu0 0.0
  %3487 = vmatpush1.msra.mxu0 %v3212
  %3488 = vmatprep.subr.mxu0 0.0
  %3489 = vmatpush1.msra.mxu0 %v3213
  %3490 = vmatprep.subr.mxu0 0.0
  %3491 = vmatpush1.msra.mxu0 %v3214
  %3492 = vmatprep.subr.mxu0 0.0
  %3493 = vmatpush1.msra.mxu0 %v3215
  %3494 = vmatprep.subr.mxu0 0.0
  %3495 = vmatpush1.msra.mxu0 %v3216
  %3496 = vmatprep.subr.mxu0 0.0
  %3497 = vmatpush1.msra.mxu0 %v3217
  %3498 = vmatprep.subr.mxu0 0.0
  %3499 = vmatpush1.msra.mxu0 %v3218
  %3500 = vmatprep.subr.mxu0 0.0
  %3501 = vmatpush1.msra.mxu0 %v3219
  %3502 = vmatprep.subr.mxu0 0.0
  %3503 = vmatpush1.msra.mxu0 %v3220
  %3504 = vmatprep.subr.mxu0 0.0
  %3505 = vmatpush1.msra.mxu0 %v3221
  %3506 = vmatprep.subr.mxu0 0.0
  %3507 = vmatpush1.msra.mxu0 %v3222
  %3508 = vmatprep.subr.mxu0 0.0
  %3509 = vmatpush1.msra.mxu0 %v3223
  %3510 = vmatprep.subr.mxu0 0.0
  %3511 = vmatpush1.msra.mxu0 %v3224
  %3512 = vmatprep.subr.mxu0 0.0
  %3513 = vmatpush1.msra.mxu0 %v3225
  %3514 = vmatprep.subr.mxu0 0.0
  %3515 = vmatpush1.msra.mxu0 %v3226
  %3516 = vmatprep.subr.mxu0 0.0
  %3517 = vmatpush1.msra.mxu0 %v3227
  %3518 = vmatprep.subr.mxu0 0.0
  %3519 = vmatpush1.msra.mxu0 %v3228
  %3520 = vmatprep.subr.mxu0 0.0
  %3521 = vmatpush1.msra.mxu0 %v3229
  %3522 = vmatprep.subr.mxu0 0.0
  %3523 = vmatpush1.msra.mxu0 %v3230
  %3524 = vmatprep.subr.mxu0 0.0
  %3525 = vmatpush1.msra.mxu0 %v3231
  %3526 = vmatprep.subr.mxu0 0.0
  %3527 = vmatpush1.msra.mxu0 %v3232
  %3528 = vmatprep.mubr.f32.mxu0 %v3099
  %3529 = vmatmul.mubr.f32.gmra.mrb[0].mxu0 %v3098
  %v3530 = vpop.f32.mrb[0].mxu0
  %v3531 = vadd.f32 %v3462, %v3530
  %v3532 = vpop.f32.mrb[0].mxu0
  %3533 = vdwg.mxu0
  %3534 = vmatprep.subr.mxu0 0.0
  %3535 = vmatpush1.msra.mxu0 %v3233
  %3536 = vmatprep.subr.mxu0 0.0
  %3537 = vmatpush1.msra.mxu0 %v3234
  %3538 = vmatprep.subr.mxu0 0.0
  %3539 = vmatpush1.msra.mxu0 %v3235
  %3540 = vmatprep.subr.mxu0 0.0
  %3541 = vmatpush1.msra.mxu0 %v3236
  %3542 = vmatprep.subr.mxu0 0.0
  %3543 = vmatpush1.msra.mxu0 %v3237
  %3544 = vmatprep.subr.mxu0 0.0
  %3545 = vmatpush1.msra.mxu0 %v3238
  %3546 = vmatprep.subr.mxu0 0.0
  %3547 = vmatpush1.msra.mxu0 %v3239
  %3548 = vmatprep.subr.mxu0 0.0
  %3549 = vmatpush1.msra.mxu0 %v3240
  %3550 = vmatprep.subr.mxu0 0.0
  %3551 = vmatpush1.msra.mxu0 %v3241
  %3552 = vmatprep.subr.mxu0 0.0
  %3553 = vmatpush1.msra.mxu0 %v3242
  %3554 = vmatprep.subr.mxu0 0.0
  %3555 = vmatpush1.msra.mxu0 %v3243
  %3556 = vmatprep.subr.mxu0 0.0
  %3557 = vmatpush1.msra.mxu0 %v3244
  %3558 = vmatprep.subr.mxu0 0.0
  %3559 = vmatpush1.msra.mxu0 %v3245
  %3560 = vmatprep.subr.mxu0 0.0
  %3561 = vmatpush1.msra.mxu0 %v3246
  %3562 = vmatprep.subr.mxu0 0.0
  %3563 = vmatpush1.msra.mxu0 %v3247
  %3564 = vmatprep.subr.mxu0 0.0
  %3565 = vmatpush1.msra.mxu0 %v3248
  %3566 = vmatprep.subr.mxu0 0.0
  %3567 = vmatpush1.msra.mxu0 %v3249
  %3568 = vmatprep.subr.mxu0 0.0
  %3569 = vmatpush1.msra.mxu0 %v3250
  %3570 = vmatprep.subr.mxu0 0.0
  %3571 = vmatpush1.msra.mxu0 %v3251
  %3572 = vmatprep.subr.mxu0 0.0
  %3573 = vmatpush1.msra.mxu0 %v3252
  %3574 = vmatprep.subr.mxu0 0.0
  %3575 = vmatpush1.msra.mxu0 %v3253
  %3576 = vmatprep.subr.mxu0 0.0
  %3577 = vmatpush1.msra.mxu0 %v3254
  %3578 = vmatprep.subr.mxu0 0.0
  %3579 = vmatpush1.msra.mxu0 %v3255
  %3580 = vmatprep.subr.mxu0 0.0
  %3581 = vmatpush1.msra.mxu0 %v3256
  %3582 = vmatprep.subr.mxu0 0.0
  %3583 = vmatpush1.msra.mxu0 %v3257
  %3584 = vmatprep.subr.mxu0 0.0
  %3585 = vmatpush1.msra.mxu0 %v3258
  %3586 = vmatprep.subr.mxu0 0.0
  %3587 = vmatpush1.msra.mxu0 %v3259
  %3588 = vmatprep.subr.mxu0 0.0
  %3589 = vmatpush1.msra.mxu0 %v3260
  %3590 = vmatprep.subr.mxu0 0.0
  %3591 = vmatpush1.msra.mxu0 %v3261
  %3592 = vmatprep.subr.mxu0 0.0
  %3593 = vmatpush1.msra.mxu0 %v3262
  %3594 = vmatprep.subr.mxu0 0.0
  %3595 = vmatpush1.msra.mxu0 %v3263
  %3596 = vmatprep.subr.mxu0 0.0
  %3597 = vmatpush1.msra.mxu0 %v3264
  %3598 = vmatprep.mubr.f32.mxu0 %v3101
  %3599 = vmatmul.mubr.f32.gmra.mrb[0].mxu0 %v3100
  %v3600 = vpop.f32.mrb[0].mxu0
  %v3601 = vadd.f32 %v3531, %v3600
  %v3602 = vpop.f32.mrb[0].mxu0
  %3603 = vdwg.mxu0
  %3604 = vmatprep.subr.mxu0 0.0
  %3605 = vmatpush1.msra.mxu0 %v3265
  %3606 = vmatprep.subr.mxu0 0.0
  %3607 = vmatpush1.msra.mxu0 %v3266
  %3608 = vmatprep.subr.mxu0 0.0
  %3609 = vmatpush1.msra.mxu0 %v3267
  %3610 = vmatprep.subr.mxu0 0.0
  %3611 = vmatpush1.msra.mxu0 %v3268
  %3612 = vmatprep.subr.mxu0 0.0
  %3613 = vmatpush1.msra.mxu0 %v3269
  %3614 = vmatprep.subr.mxu0 0.0
  %3615 = vmatpush1.msra.mxu0 %v3270
  %3616 = vmatprep.subr.mxu0 0.0
  %3617 = vmatpush1.msra.mxu0 %v3271
  %3618 = vmatprep.subr.mxu0 0.0
  %3619 = vmatpush1.msra.mxu0 %v3272
  %3620 = vmatprep.subr.mxu0 0.0
  %3621 = vmatpush1.msra.mxu0 %v3273
  %3622 = vmatprep.subr.mxu0 0.0
  %3623 = vmatpush1.msra.mxu0 %v3274
  %3624 = vmatprep.subr.mxu0 0.0
  %3625 = vmatpush1.msra.mxu0 %v3275
  %3626 = vmatprep.subr.mxu0 0.0
  %3627 = vmatpush1.msra.mxu0 %v3276
  %3628 = vmatprep.subr.mxu0 0.0
  %3629 = vmatpush1.msra.mxu0 %v3277
  %3630 = vmatprep.subr.mxu0 0.0
  %3631 = vmatpush1.msra.mxu0 %v3278
  %3632 = vmatprep.subr.mxu0 0.0
  %3633 = vmatpush1.msra.mxu0 %v3279
  %3634 = vmatprep.subr.mxu0 0.0
  %3635 = vmatpush1.msra.mxu0 %v3280
  %3636 = vmatprep.subr.mxu0 0.0
  %3637 = vmatpush1.msra.mxu0 %v3281
  %3638 = vmatprep.subr.mxu0 0.0
  %3639 = vmatpush1.msra.mxu0 %v3282
  %3640 = vmatprep.subr.mxu0 0.0
  %3641 = vmatpush1.msra.mxu0 %v3283
  %3642 = vmatprep.subr.mxu0 0.0
  %3643 = vmatpush1.msra.mxu0 %v3284
  %3644 = vmatprep.subr.mxu0 0.0
  %3645 = vmatpush1.msra.mxu0 %v3285
  %3646 = vmatprep.subr.mxu0 0.0
  %3647 = vmatpush1.msra.mxu0 %v3286
  %3648 = vmatprep.subr.mxu0 0.0
  %3649 = vmatpush1.msra.mxu0 %v3287
  %3650 = vmatprep.subr.mxu0 0.0
  %3651 = vmatpush1.msra.mxu0 %v3288
  %3652 = vmatprep.subr.mxu0 0.0
  %3653 = vmatpush1.msra.mxu0 %v3289
  %3654 = vmatprep.subr.mxu0 0.0
  %3655 = vmatpush1.msra.mxu0 %v3290
  %3656 = vmatprep.subr.mxu0 0.0
  %3657 = vmatpush1.msra.mxu0 %v3291
  %3658 = vmatprep.subr.mxu0 0.0
  %3659 = vmatpush1.msra.mxu0 %v3292
  %3660 = vmatprep.subr.mxu0 0.0
  %3661 = vmatpush1.msra.mxu0 %v3293
  %3662 = vmatprep.subr.mxu0 0.0
  %3663 = vmatpush1.msra.mxu0 %v3294
  %3664 = vmatprep.subr.mxu0 0.0
  %3665 = vmatpush1.msra.mxu0 %v3295
  %3666 = vmatprep.subr.mxu0 0.0
  %3667 = vmatpush1.msra.mxu0 %v3296
  %3668 = vmatprep.mubr.f32.mxu0 %v3131
  %3669 = vmatmul.mubr.f32.gmra.mrb[0].mxu0 %v3130
  %v3670 = vpop.f32.mrb[0].mxu0
  %v3671 = vadd.f32 %v3601, %v3670
  %v3672 = vpop.f32.mrb[0].mxu0
  %3673 = vdwg.mxu0
  %3674 = vmatprep.subr.mxu0 0.0
  %3675 = vmatpush1.msra.mxu0 %v3297
  %3676 = vmatprep.subr.mxu0 0.0
  %3677 = vmatpush1.msra.mxu0 %v3298
  %3678 = vmatprep.subr.mxu0 0.0
  %3679 = vmatpush1.msra.mxu0 %v3299
  %3680 = vmatprep.subr.mxu0 0.0
  %3681 = vmatpush1.msra.mxu0 %v3300
  %3682 = vmatprep.subr.mxu0 0.0
  %3683 = vmatpush1.msra.mxu0 %v3301
  %3684 = vmatprep.subr.mxu0 0.0
  %3685 = vmatpush1.msra.mxu0 %v3302
  %3686 = vmatprep.subr.mxu0 0.0
  %3687 = vmatpush1.msra.mxu0 %v3303
  %3688 = vmatprep.subr.mxu0 0.0
  %3689 = vmatpush1.msra.mxu0 %v3304
  %3690 = vmatprep.subr.mxu0 0.0
  %3691 = vmatpush1.msra.mxu0 %v3305
  %3692 = vmatprep.subr.mxu0 0.0
  %3693 = vmatpush1.msra.mxu0 %v3306
  %3694 = vmatprep.subr.mxu0 0.0
  %3695 = vmatpush1.msra.mxu0 %v3307
  %3696 = vmatprep.subr.mxu0 0.0
  %3697 = vmatpush1.msra.mxu0 %v3308
  %3698 = vmatprep.subr.mxu0 0.0
  %3699 = vmatpush1.msra.mxu0 %v3309
  %3700 = vmatprep.subr.mxu0 0.0
  %3701 = vmatpush1.msra.mxu0 %v3310
  %3702 = vmatprep.subr.mxu0 0.0
  %3703 = vmatpush1.msra.mxu0 %v3311
  %3704 = vmatprep.subr.mxu0 0.0
  %3705 = vmatpush1.msra.mxu0 %v3312
  %3706 = vmatprep.subr.mxu0 0.0
  %3707 = vmatpush1.msra.mxu0 %v3313
  %3708 = vmatprep.subr.mxu0 0.0
  %3709 = vmatpush1.msra.mxu0 %v3314
  %3710 = vmatprep.subr.mxu0 0.0
  %3711 = vmatpush1.msra.mxu0 %v3315
  %3712 = vmatprep.subr.mxu0 0.0
  %3713 = vmatpush1.msra.mxu0 %v3316
  %3714 = vmatprep.subr.mxu0 0.0
  %3715 = vmatpush1.msra.mxu0 %v3317
  %3716 = vmatprep.subr.mxu0 0.0
  %3717 = vmatpush1.msra.mxu0 %v3318
  %3718 = vmatprep.subr.mxu0 0.0
  %3719 = vmatpush1.msra.mxu0 %v3319
  %3720 = vmatprep.subr.mxu0 0.0
  %3721 = vmatpush1.msra.mxu0 %v3320
  %3722 = vmatprep.subr.mxu0 0.0
  %3723 = vmatpush1.msra.mxu0 %v3321
  %3724 = vmatprep.subr.mxu0 0.0
  %3725 = vmatpush1.msra.mxu0 %v3322
  %3726 = vmatprep.subr.mxu0 0.0
  %3727 = vmatpush1.msra.mxu0 %v3323
  %3728 = vmatprep.subr.mxu0 0.0
  %3729 = vmatpush1.msra.mxu0 %v3324
  %3730 = vmatprep.subr.mxu0 0.0
  %3731 = vmatpush1.msra.mxu0 %v3325
  %3732 = vmatprep.subr.mxu0 0.0
  %3733 = vmatpush1.msra.mxu0 %v3326
  %3734 = vmatprep.subr.mxu0 0.0
  %3735 = vmatpush1.msra.mxu0 %v3327
  %3736 = vmatprep.subr.mxu0 0.0
  %3737 = vmatpush1.msra.mxu0 %v3328
  %3738 = vmatprep.mubr.f32.mxu0 %v3133
  %3739 = vmatmul.mubr.f32.gmra.mrb[0].mxu0 %v3132
  %v3740 = vpop.f32.mrb[0].mxu0
  %v3741 = vadd.f32 %v3671, %v3740
  %v3742 = vpop.f32.mrb[0].mxu0
  %3743 = vdwg.mxu0
  %3744 = vmatprep.subr.mxu0 0.0
  %3745 = vmatpush1.msra.mxu0 %v3329
  %3746 = vmatprep.subr.mxu0 0.0
  %3747 = vmatpush1.msra.mxu0 %v3330
  %3748 = vmatprep.subr.mxu0 0.0
  %3749 = vmatpush1.msra.mxu0 %v3331
  %3750 = vmatprep.subr.mxu0 0.0
  %3751 = vmatpush1.msra.mxu0 %v3332
  %3752 = vmatprep.subr.mxu0 0.0
  %3753 = vmatpush1.msra.mxu0 %v3333
  %3754 = vmatprep.subr.mxu0 0.0
  %3755 = vmatpush1.msra.mxu0 %v3334
  %3756 = vmatprep.subr.mxu0 0.0
  %3757 = vmatpush1.msra.mxu0 %v3335
  %3758 = vmatprep.subr.mxu0 0.0
  %3759 = vmatpush1.msra.mxu0 %v3336
  %3760 = vmatprep.subr.mxu0 0.0
  %3761 = vmatpush1.msra.mxu0 %v3337
  %3762 = vmatprep.subr.mxu0 0.0
  %3763 = vmatpush1.msra.mxu0 %v3338
  %3764 = vmatprep.subr.mxu0 0.0
  %3765 = vmatpush1.msra.mxu0 %v3339
  %3766 = vmatprep.subr.mxu0 0.0
  %3767 = vmatpush1.msra.mxu0 %v3340
  %3768 = vmatprep.subr.mxu0 0.0
  %3769 = vmatpush1.msra.mxu0 %v3341
  %3770 = vmatprep.subr.mxu0 0.0
  %3771 = vmatpush1.msra.mxu0 %v3342
  %3772 = vmatprep.subr.mxu0 0.0
  %3773 = vmatpush1.msra.mxu0 %v3343
  %3774 = vmatprep.subr.mxu0 0.0
  %3775 = vmatpush1.msra.mxu0 %v3344
  %3776 = vmatprep.subr.mxu0 0.0
  %3777 = vmatpush1.msra.mxu0 %v3345
  %3778 = vmatprep.subr.mxu0 0.0
  %3779 = vmatpush1.msra.mxu0 %v3346
  %3780 = vmatprep.subr.mxu0 0.0
  %3781 = vmatpush1.msra.mxu0 %v3347
  %3782 = vmatprep.subr.mxu0 0.0
  %3783 = vmatpush1.msra.mxu0 %v3348
  %3784 = vmatprep.subr.mxu0 0.0
  %3785 = vmatpush1.msra.mxu0 %v3349
  %3786 = vmatprep.subr.mxu0 0.0
  %3787 = vmatpush1.msra.mxu0 %v3350
  %3788 = vmatprep.subr.mxu0 0.0
  %3789 = vmatpush1.msra.mxu0 %v3351
  %3790 = vmatprep.subr.mxu0 0.0
  %3791 = vmatpush1.msra.mxu0 %v3352
  %3792 = vmatprep.subr.mxu0 0.0
  %3793 = vmatpush1.msra.mxu0 %v3353
  %3794 = vmatprep.subr.mxu0 0.0
  %3795 = vmatpush1.msra.mxu0 %v3354
  %3796 = vmatprep.subr.mxu0 0.0
  %3797 = vmatpush1.msra.mxu0 %v3355
  %3798 = vmatprep.subr.mxu0 0.0
  %3799 = vmatpush1.msra.mxu0 %v3356
  %3800 = vmatprep.subr.mxu0 0.0
  %3801 = vmatpush1.msra.mxu0 %v3357
  %3802 = vmatprep.subr.mxu0 0.0
  %3803 = vmatpush1.msra.mxu0 %v3358
  %3804 = vmatprep.subr.mxu0 0.0
  %3805 = vmatpush1.msra.mxu0 %v3359
  %3806 = vmatprep.subr.mxu0 0.0
  %3807 = vmatpush1.msra.mxu0 %v3360
  %3808 = vmatprep.mubr.f32.mxu0 %v3163
  %3809 = vmatmul.mubr.f32.gmra.mrb[0].mxu0 %v3162
  %v3810 = vpop.f32.mrb[0].mxu0
  %v3811 = vadd.f32 %v3741, %v3810
  %v3812 = vpop.f32.mrb[0].mxu0
  %3813 = vdwg.mxu0
  %3814 = vmatprep.subr.mxu0 0.0
  %3815 = vmatpush1.msra.mxu0 %v3361
  %3816 = vmatprep.subr.mxu0 0.0
  %3817 = vmatpush1.msra.mxu0 %v3362
  %3818 = vmatprep.subr.mxu0 0.0
  %3819 = vmatpush1.msra.mxu0 %v3363
  %3820 = vmatprep.subr.mxu0 0.0
  %3821 = vmatpush1.msra.mxu0 %v3364
  %3822 = vmatprep.subr.mxu0 0.0
  %3823 = vmatpush1.msra.mxu0 %v3365
  %3824 = vmatprep.subr.mxu0 0.0
  %3825 = vmatpush1.msra.mxu0 %v3366
  %3826 = vmatprep.subr.mxu0 0.0
  %3827 = vmatpush1.msra.mxu0 %v3367
  %3828 = vmatprep.subr.mxu0 0.0
  %3829 = vmatpush1.msra.mxu0 %v3368
  %3830 = vmatprep.subr.mxu0 0.0
  %3831 = vmatpush1.msra.mxu0 %v3369
  %3832 = vmatprep.subr.mxu0 0.0
  %3833 = vmatpush1.msra.mxu0 %v3370
  %3834 = vmatprep.subr.mxu0 0.0
  %3835 = vmatpush1.msra.mxu0 %v3371
  %3836 = vmatprep.subr.mxu0 0.0
  %3837 = vmatpush1.msra.mxu0 %v3372
  %3838 = vmatprep.subr.mxu0 0.0
  %3839 = vmatpush1.msra.mxu0 %v3373
  %3840 = vmatprep.subr.mxu0 0.0
  %3841 = vmatpush1.msra.mxu0 %v3374
  %3842 = vmatprep.subr.mxu0 0.0
  %3843 = vmatpush1.msra.mxu0 %v3375
  %3844 = vmatprep.subr.mxu0 0.0
  %3845 = vmatpush1.msra.mxu0 %v3376
  %3846 = vmatprep.subr.mxu0 0.0
  %3847 = vmatpush1.msra.mxu0 %v3377
  %3848 = vmatprep.subr.mxu0 0.0
  %3849 = vmatpush1.msra.mxu0 %v3378
  %3850 = vmatprep.subr.mxu0 0.0
  %3851 = vmatpush1.msra.mxu0 %v3379
  %3852 = vmatprep.subr.mxu0 0.0
  %3853 = vmatpush1.msra.mxu0 %v3380
  %3854 = vmatprep.subr.mxu0 0.0
  %3855 = vmatpush1.msra.mxu0 %v3381
  %3856 = vmatprep.subr.mxu0 0.0
  %3857 = vmatpush1.msra.mxu0 %v3382
  %3858 = vmatprep.subr.mxu0 0.0
  %3859 = vmatpush1.msra.mxu0 %v3383
  %3860 = vmatprep.subr.mxu0 0.0
  %3861 = vmatpush1.msra.mxu0 %v3384
  %3862 = vmatprep.subr.mxu0 0.0
  %3863 = vmatpush1.msra.mxu0 %v3385
  %3864 = vmatprep.subr.mxu0 0.0
  %3865 = vmatpush1.msra.mxu0 %v3386
  %3866 = vmatprep.subr.mxu0 0.0
  %3867 = vmatpush1.msra.mxu0 %v3387
  %3868 = vmatprep.subr.mxu0 0.0
  %3869 = vmatpush1.msra.mxu0 %v3388
  %3870 = vmatprep.subr.mxu0 0.0
  %3871 = vmatpush1.msra.mxu0 %v3389
  %3872 = vmatprep.subr.mxu0 0.0
  %3873 = vmatpush1.msra.mxu0 %v3390
  %3874 = vmatprep.subr.mxu0 0.0
  %3875 = vmatpush1.msra.mxu0 %v3391
  %3876 = vmatprep.subr.mxu0 0.0
  %3877 = vmatpush1.msra.mxu0 %v3392
  %3878 = vmatprep.mubr.f32.mxu0 %v3165
  %3879 = vmatmul.mubr.f32.gmra.mrb[0].mxu0 %v3164
  %v3880 = vpop.f32.mrb[0].mxu0
  %v3881 = vadd.f32 %v3811, %v3880
  %v3882 = vpop.f32.mrb[0].mxu0
  %3883 = vdwg.mxu0
  %3884 = vmatprep.subr.mxu0 0.0
  %3885 = vmatpush1.msra.mxu0 %v3393
  %3886 = vmatprep.subr.mxu0 0.0
  %3887 = vmatpush1.msra.mxu0 %v3394
  %3888 = vmatprep.subr.mxu0 0.0
  %3889 = vmatpush1.msra.mxu0 %v3395
  %3890 = vmatprep.subr.mxu0 0.0
  %3891 = vmatpush1.msra.mxu0 %v3396
  %3892 = vmatprep.subr.mxu0 0.0
  %3893 = vmatpush1.msra.mxu0 %v3397
  %3894 = vmatprep.subr.mxu0 0.0
  %3895 = vmatpush1.msra.mxu0 %v3398
  %3896 = vmatprep.subr.mxu0 0.0
  %3897 = vmatpush1.msra.mxu0 %v3399
  %3898 = vmatprep.subr.mxu0 0.0
  %3899 = vmatpush1.msra.mxu0 %v3400
  %3900 = vmatprep.subr.mxu0 0.0
  %3901 = vmatpush1.msra.mxu0 %v3401
  %3902 = vmatprep.subr.mxu0 0.0
  %3903 = vmatpush1.msra.mxu0 %v3402
  %3904 = vmatprep.subr.mxu0 0.0
  %3905 = vmatpush1.msra.mxu0 %v3403
  %3906 = vmatprep.subr.mxu0 0.0
  %3907 = vmatpush1.msra.mxu0 %v3404
  %3908 = vmatprep.subr.mxu0 0.0
  %3909 = vmatpush1.msra.mxu0 %v3405
  %3910 = vmatprep.subr.mxu0 0.0
  %3911 = vmatpush1.msra.mxu0 %v3406
  %3912 = vmatprep.subr.mxu0 0.0
  %3913 = vmatpush1.msra.mxu0 %v3407
  %3914 = vmatprep.subr.mxu0 0.0
  %3915 = vmatpush1.msra.mxu0 %v3408
  %3916 = vmatprep.subr.mxu0 0.0
  %3917 = vmatpush1.msra.mxu0 %v3409
  %3918 = vmatprep.subr.mxu0 0.0
  %3919 = vmatpush1.msra.mxu0 %v3410
  %3920 = vmatprep.subr.mxu0 0.0
  %3921 = vmatpush1.msra.mxu0 %v3411
  %3922 = vmatprep.subr.mxu0 0.0
  %3923 = vmatpush1.msra.mxu0 %v3412
  %3924 = vmatprep.subr.mxu0 0.0
  %3925 = vmatpush1.msra.mxu0 %v3413
  %3926 = vmatprep.subr.mxu0 0.0
  %3927 = vmatpush1.msra.mxu0 %v3414
  %3928 = vmatprep.subr.mxu0 0.0
  %3929 = vmatpush1.msra.mxu0 %v3415
  %3930 = vmatprep.subr.mxu0 0.0
  %3931 = vmatpush1.msra.mxu0 %v3416
  %3932 = vmatprep.subr.mxu0 0.0
  %3933 = vmatpush1.msra.mxu0 %v3417
  %3934 = vmatprep.subr.mxu0 0.0
  %3935 = vmatpush1.msra.mxu0 %v3418
  %3936 = vmatprep.subr.mxu0 0.0
  %3937 = vmatpush1.msra.mxu0 %v3419
  %3938 = vmatprep.subr.mxu0 0.0
  %3939 = vmatpush1.msra.mxu0 %v3420
  %3940 = vmatprep.subr.mxu0 0.0
  %3941 = vmatpush1.msra.mxu0 %v3421
  %3942 = vmatprep.subr.mxu0 0.0
  %3943 = vmatpush1.msra.mxu0 %v3422
  %3944 = vmatprep.subr.mxu0 0.0
  %3945 = vmatpush1.msra.mxu0 %v3423
  %3946 = vmatprep.subr.mxu0 0.0
  %3947 = vmatpush1.msra.mxu0 %v3424
  %3948 = vmatprep.mubr.f32.mxu0 %v3195
  %3949 = vmatmul.mubr.f32.gmra.mrb[0].mxu0 %v3194
  %v3950 = vpop.f32.mrb[0].mxu0
  %v3951 = vadd.f32 %v3881, %v3950
  %v3952 = vpop.f32.mrb[0].mxu0
  %3953 = vdwg.mxu0
  %3954 = vmatprep.subr.mxu0 0.0
  %3955 = vmatpush1.msra.mxu0 %v3425
  %3956 = vmatprep.subr.mxu0 0.0
  %3957 = vmatpush1.msra.mxu0 %v3426
  %3958 = vmatprep.subr.mxu0 0.0
  %3959 = vmatpush1.msra.mxu0 %v3427
  %3960 = vmatprep.subr.mxu0 0.0
  %3961 = vmatpush1.msra.mxu0 %v3428
  %3962 = vmatprep.subr.mxu0 0.0
  %3963 = vmatpush1.msra.mxu0 %v3429
  %3964 = vmatprep.subr.mxu0 0.0
  %3965 = vmatpush1.msra.mxu0 %v3430
  %3966 = vmatprep.subr.mxu0 0.0
  %3967 = vmatpush1.msra.mxu0 %v3431
  %3968 = vmatprep.subr.mxu0 0.0
  %3969 = vmatpush1.msra.mxu0 %v3432
  %3970 = vmatprep.subr.mxu0 0.0
  %3971 = vmatpush1.msra.mxu0 %v3433
  %3972 = vmatprep.subr.mxu0 0.0
  %3973 = vmatpush1.msra.mxu0 %v3434
  %3974 = vmatprep.subr.mxu0 0.0
  %3975 = vmatpush1.msra.mxu0 %v3435
  %3976 = vmatprep.subr.mxu0 0.0
  %3977 = vmatpush1.msra.mxu0 %v3436
  %3978 = vmatprep.subr.mxu0 0.0
  %3979 = vmatpush1.msra.mxu0 %v3437
  %3980 = vmatprep.subr.mxu0 0.0
  %3981 = vmatpush1.msra.mxu0 %v3438
  %3982 = vmatprep.subr.mxu0 0.0
  %3983 = vmatpush1.msra.mxu0 %v3439
  %3984 = vmatprep.subr.mxu0 0.0
  %3985 = vmatpush1.msra.mxu0 %v3440
  %3986 = vmatprep.subr.mxu0 0.0
  %3987 = vmatpush1.msra.mxu0 %v3441
  %3988 = vmatprep.subr.mxu0 0.0
  %3989 = vmatpush1.msra.mxu0 %v3442
  %3990 = vmatprep.subr.mxu0 0.0
  %3991 = vmatpush1.msra.mxu0 %v3443
  %3992 = vmatprep.subr.mxu0 0.0
  %3993 = vmatpush1.msra.mxu0 %v3444
  %3994 = vmatprep.subr.mxu0 0.0
  %3995 = vmatpush1.msra.mxu0 %v3445
  %3996 = vmatprep.subr.mxu0 0.0
  %3997 = vmatpush1.msra.mxu0 %v3446
  %3998 = vmatprep.subr.mxu0 0.0
  %3999 = vmatpush1.msra.mxu0 %v3447
  %4000 = vmatprep.subr.mxu0 0.0
  %4001 = vmatpush1.msra.mxu0 %v3448
  %4002 = vmatprep.subr.mxu0 0.0
  %4003 = vmatpush1.msra.mxu0 %v3449
  %4004 = vmatprep.subr.mxu0 0.0
  %4005 = vmatpush1.msra.mxu0 %v3450
  %4006 = vmatprep.subr.mxu0 0.0
  %4007 = vmatpush1.msra.mxu0 %v3451
  %4008 = vmatprep.subr.mxu0 0.0
  %4009 = vmatpush1.msra.mxu0 %v3452
  %4010 = vmatprep.subr.mxu0 0.0
  %4011 = vmatpush1.msra.mxu0 %v3453
  %4012 = vmatprep.subr.mxu0 0.0
  %4013 = vmatpush1.msra.mxu0 %v3454
  %4014 = vmatprep.subr.mxu0 0.0
  %4015 = vmatpush1.msra.mxu0 %v3455
  %4016 = vmatprep.subr.mxu0 0.0
  %4017 = vmatpush1.msra.mxu0 %v3456
  %4018 = vmatprep.mubr.f32.mxu0 %v3197
  %4019 = vmatmul.mubr.f32.gmra.mrb[0].mxu0 %v3196
  %v4020 = vpop.f32.mrb[0].mxu0
  %v4021 = vadd.f32 %v3951, %v4020
  %v4022 = vpop.f32.mrb[0].mxu0
  %4023 = vdwg.mxu0
  %v4024 = vsel %vm2229, %v4021, 0.0
  %v4025 = vrot.slane %v4024, 4
  %v4026 = vadd.f32 %v4024, %v4025
  %v4027 = vrot.slane %v4026, 2
  %v4028 = vadd.f32 %v4026, %v4027
  %v4029 = vrot.slane %v4028, 1
  %v4030 = vadd.f32 %v4028, %v4029
  %v4031 = vrcp.pop 4.0
  %v4032 = vmul.f32 %v4030, %v4031
  %v4033 = vsub.f32 %v4021, %v4032
  %v4034 = vmul.f32 %v4033, %v4033
  %v4035 = vsel %vm2229, %v4034, 0.0
  %v4036 = vrot.slane %v4035, 4
  %v4037 = vadd.f32 %v4035, %v4036
  %v4038 = vrot.slane %v4037, 2
  %v4039 = vadd.f32 %v4037, %v4038
  %v4040 = vrot.slane %v4039, 1
  %v4041 = vadd.f32 %v4039, %v4040
  %v4042 = vmul.f32 %v4041, %v4031
  %v4043 = vadd.f32 %v4042, 1e-05
  %v4044 = vrsqrt.pop %v4043
  %v4045 = vmul.f32 %v4033, %v4044
  %v4046 = vld [vmem:[%s7] sm:$0x1]
  %v4048 = vlaneseq
  %v4049 = vshrl.u32 %v4048, 7
  %v4050 = vsub.s32 0, %v4049
  %v4051 = vrot.slane %v4046, %v4050
  %v4053 = vmul.f32 %v4045, %v4051
  %v4054 = vld [vmem:[%s8] sm:$0x1]
  %v4056 = vlaneseq
  %v4057 = vshrl.u32 %v4056, 7
  %v4058 = vsub.s32 0, %v4057
  %v4059 = vrot.slane %v4054, %v4058
  %v4061 = vadd.f32 %v4053, %v4059
  %v4062 = vld [vmem:[%s9] sm:$0xff]
  %v4063 = vld [vmem:[%s9 + $0x8] sm:$0xff]
  %v4064 = vld [vmem:[%s9 + $0x10] sm:$0xff]
  %v4065 = vld [vmem:[%s9 + $0x18] sm:$0xff]
  %v4066 = vld [vmem:[%s9 + $0x20] sm:$0xff]
  %v4067 = vld [vmem:[%s9 + $0x28] sm:$0xff]
  %v4068 = vld [vmem:[%s9 + $0x30] sm:$0xff]
  %v4069 = vld [vmem:[%s9 + $0x38] sm:$0xff]
  %v4070 = vld [vmem:[%s9 + $0x40] sm:$0xff]
  %v4071 = vld [vmem:[%s9 + $0x48] sm:$0xff]
  %v4072 = vld [vmem:[%s9 + $0x50] sm:$0xff]
  %v4073 = vld [vmem:[%s9 + $0x58] sm:$0xff]
  %v4074 = vld [vmem:[%s9 + $0x60] sm:$0xff]
  %v4075 = vld [vmem:[%s9 + $0x68] sm:$0xff]
  %v4076 = vld [vmem:[%s9 + $0x70] sm:$0xff]
  %v4077 = vld [vmem:[%s9 + $0x78] sm:$0xff]
  %v4078 = vld [vmem:[%s10] sm:$0x1]
  %v4080 = vlaneseq
  %v4081 = vshrl.u32 %v4080, 7
  %v4082 = vsub.s32 0, %v4081
  %v4083 = vrot.slane %v4078, %v4082
  %4085 = vmatprep.subr.mxu0 0.0
  %4086 = vmatpush1.msra.mxu0 %v4062
  %4087 = vmatprep.subr.mxu0 0.0
  %4088 = vmatpush1.msra.mxu0 %v4063
  %4089 = vmatprep.subr.mxu0 0.0
  %4090 = vmatpush1.msra.mxu0 %v4064
  %4091 = vmatprep.subr.mxu0 0.0
  %4092 = vmatpush1.msra.mxu0 %v4065
  %4093 = vmatprep.subr.mxu0 0.0
  %4094 = vmatpush1.msra.mxu0 %v4066
  %4095 = vmatprep.subr.mxu0 0.0
  %4096 = vmatpush1.msra.mxu0 %v4067
  %4097 = vmatprep.subr.mxu0 0.0
  %4098 = vmatpush1.msra.mxu0 %v4068
  %4099 = vmatprep.subr.mxu0 0.0
  %4100 = vmatpush1.msra.mxu0 %v4069
  %4101 = vmatprep.subr.mxu0 0.0
  %4102 = vmatpush1.msra.mxu0 %v4070
  %4103 = vmatprep.subr.mxu0 0.0
  %4104 = vmatpush1.msra.mxu0 %v4071
  %4105 = vmatprep.subr.mxu0 0.0
  %4106 = vmatpush1.msra.mxu0 %v4072
  %4107 = vmatprep.subr.mxu0 0.0
  %4108 = vmatpush1.msra.mxu0 %v4073
  %4109 = vmatprep.subr.mxu0 0.0
  %4110 = vmatpush1.msra.mxu0 %v4074
  %4111 = vmatprep.subr.mxu0 0.0
  %4112 = vmatpush1.msra.mxu0 %v4075
  %4113 = vmatprep.subr.mxu0 0.0
  %4114 = vmatpush1.msra.mxu0 %v4076
  %4115 = vmatprep.subr.mxu0 0.0
  %4116 = vmatpush1.msra.mxu0 %v4077
  %4117 = vmatprep.subr.mxu0 0.0
  %4118 = vmatpush1.msra.mxu0 0.0
  %4119 = vmatprep.subr.mxu0 0.0
  %4120 = vmatpush1.msra.mxu0 0.0
  %4121 = vmatprep.subr.mxu0 0.0
  %4122 = vmatpush1.msra.mxu0 0.0
  %4123 = vmatprep.subr.mxu0 0.0
  %4124 = vmatpush1.msra.mxu0 0.0
  %4125 = vmatprep.subr.mxu0 0.0
  %4126 = vmatpush1.msra.mxu0 0.0
  %4127 = vmatprep.subr.mxu0 0.0
  %4128 = vmatpush1.msra.mxu0 0.0
  %4129 = vmatprep.subr.mxu0 0.0
  %4130 = vmatpush1.msra.mxu0 0.0
  %4131 = vmatprep.subr.mxu0 0.0
  %4132 = vmatpush1.msra.mxu0 0.0
  %4133 = vmatprep.subr.mxu0 0.0
  %4134 = vmatpush1.msra.mxu0 0.0
  %4135 = vmatprep.subr.mxu0 0.0
  %4136 = vmatpush1.msra.mxu0 0.0
  %4137 = vmatprep.subr.mxu0 0.0
  %4138 = vmatpush1.msra.mxu0 0.0
  %4139 = vmatprep.subr.mxu0 0.0
  %4140 = vmatpush1.msra.mxu0 0.0
  %4141 = vmatprep.subr.mxu0 0.0
  %4142 = vmatpush1.msra.mxu0 0.0
  %4143 = vmatprep.subr.mxu0 0.0
  %4144 = vmatpush1.msra.mxu0 0.0
  %4145 = vmatprep.subr.mxu0 0.0
  %4146 = vmatpush1.msra.mxu0 0.0
  %4147 = vmatprep.subr.mxu0 0.0
  %4148 = vmatpush1.msra.mxu0 0.0
  %4149 = vmatprep.mubr.f32.mxu0 0.0
  %4150 = vmatmul.mubr.f32.gmra.mrb[0].mxu0 %v4061
  %v4151 = vpop.f32.mrb[0].mxu0
  %v4152 = vadd.f32 %v4083, %v4151
  %v4153 = vpop.f32.mrb[0].mxu0
  %4154 = vdwg.mxu0
  %4155 = vst [vmem:[%s11] sm:$0xff] %v4152
  // Predicated region
  $region76: #{classifier_forward.1} parent=0 // pred_check
    _
  $region77: #{classifier_forward.1} parent=0 // pred_check_branch
    %4157 = sbr.rel (0) target = $region79
  $region78: #{classifier_forward.1} parent=0 // pred_region
    _
  $region79: #{classifier_forward.1} parent=0 // pred_fallthru
    _
  // Predicated region
  $region80: #{classifier_forward.1} parent=0 // pred_check
    _
  $region81: #{classifier_forward.1} parent=0 // pred_check_branch
    %4159 = sbr.rel (0) target = $region83
  $region82: #{classifier_forward.1} parent=0 // pred_region
    _
  $region83: #{classifier_forward.1} parent=0 // pred_fallthru
    _
  %4160 = vsyncmov [#allocation3]
  %s4161 = vpop.sfrf %4160
  %p4162 = scmp.eq.s32.totalorder %s4161, 0
  %p4163 = pneg %p4162
  %4165 = shalt.err (%p4163)

</llo_original>
